<compile_context>
chip_gen: v6e
topology: v6e:2x2x1
jax: 0.10.0
libtpu: 0.0.40
codegen_flags: <defaults>
</compile_context>

<pallas_src>
import jax
import jax.numpy as jnp
from jax.experimental import pallas as pl
from jax.experimental.pallas import tpu as pltpu

EPS = 1e-5


def bn_add_relu_kernel(x_ref, skip_ref, param_ref, o_ref):
    # x_ref / skip_ref / o_ref: (block_c, M)   param_ref: (block_c, 2) = [gamma | beta]
    x = x_ref[...].astype(jnp.float32)
    m = x.shape[1]
    inv_m = 1.0 / m
    # Training-mode BatchNorm2d: biased batch statistics over (N, H, W).
    # The reduction axis (N*H*W) is the FULL last dim of the block by
    # construction -- do not tile it, or these stats silently become per-tile.
    mean = jnp.sum(x, axis=-1, keepdims=True) * inv_m              # (block_c, 1)  XLU
    centered = x - mean                                            # two-pass: no cancellation risk
    var = jnp.sum(centered * centered, axis=-1, keepdims=True) * inv_m
    inv = jax.lax.rsqrt(var + EPS)                                 # EUP
    scale = param_ref[:, 0:1].astype(jnp.float32) * inv            # gamma * inv_std  (block_c, 1)
    beta = param_ref[:, 1:2].astype(jnp.float32)
    y = centered * scale + (beta + skip_ref[...].astype(jnp.float32))
    o_ref[...] = jnp.maximum(y, 0.0).astype(o_ref.dtype)


def batchnorm_add_relu(x, skip, gamma, beta, *, block_c=1024):
    """x, skip: NCHW.  gamma, beta: (C,).  Returns NCHW (same dtype as x)."""
    n, c, h, w = x.shape
    m = n * h * w

    # NCHW -> (C, N*H*W).  Free reshape when N == 1; for N > 1 this costs a
    # single transpose (still far cheaper than round-tripping to NHWC).
    if n == 1:
        x2 = x.reshape(c, m)
        s2 = skip.reshape(c, m)
    else:
        x2 = jnp.moveaxis(x, 1, 0).reshape(c, m)
        s2 = jnp.moveaxis(skip, 1, 0).reshape(c, m)
    # Pack gamma/beta into one (C, 2) array: a single tiny parameter DMA per
    # grid step instead of two, and one fewer input in the pipeline.
    params = jnp.stack([gamma, beta], axis=-1).astype(jnp.float32)

    block_c = min(block_c, c)
    assert c % block_c == 0, "channel count must be divisible by block_c"
    assert block_c % 8 == 0, "channel block must be sublane-aligned"
    # Whole reduction axis lives inside one block; guard VMEM (double-buffered
    # x/skip/out/param blocks, lanes padded up to a multiple of 128).  For
    # large N*H*W (real ResNet batches) this design must switch to a two-pass /
    # accumulator scheme with a reduction grid axis marked "arbitrary" --
    # guarded here rather than silently producing wrong statistics.
    m_pad = ((m + 127) // 128) * 128
    vmem_bytes = 2 * (3 * block_c * m_pad + block_c * 128) * 4
    assert vmem_bytes < 24 * 1024 * 1024, (
        "block too large for VMEM; use an accumulator design for large N*H*W")
    # TODO(synk): running_mean / running_var update (track_running_stats) of
    # the PyTorch BatchNorm2d is not produced by this forward-only kernel.

    grid = (c // block_c,)
    out = pl.pallas_call(
        bn_add_relu_kernel,
        out_shape=jax.ShapeDtypeStruct((c, m), x.dtype),
        grid_spec=pltpu.PrefetchScalarGridSpec(
            num_scalar_prefetch=0,
            grid=grid,
            in_specs=[
                pl.BlockSpec((block_c, m), lambda j: (j, 0)),
                pl.BlockSpec((block_c, m), lambda j: (j, 0)),
                pl.BlockSpec((block_c, 2), lambda j: (j, 0)),
            ],
            out_specs=pl.BlockSpec((block_c, m), lambda j: (j, 0)),
        ),
        compiler_params=pltpu.CompilerParams(
            dimension_semantics=("parallel",),
        ),
        cost_estimate=pl.CostEstimate(
            flops=8 * c * m,                      # reduce + normalize + add + relu
            transcendentals=c,                    # one rsqrt per channel
            bytes_accessed=(3 * c * m + 2 * c) * 4,
        ),
    )(x2, s2, params)

    # (C, N*H*W) -> NCHW (free reshape for N == 1)
    if n == 1:
        return out.reshape(n, c, h, w)
    return jnp.moveaxis(out.reshape(c, n, h, w), 0, 1)


if __name__ == "__main__":
    N, C, H, W = 1, 2048, 7, 7
    key = jax.random.PRNGKey(0)
    k1, k2, k3, k4 = jax.random.split(key, 4)

    x339 = jax.random.normal(k1, (N, C, H, W), dtype=jnp.float32)  # BN input
    x332 = jax.random.normal(k2, (N, C, H, W), dtype=jnp.float32)  # residual add
    # BatchNorm2d affine params (deterministic synthetic init)
    gamma = 1.0 + 0.1 * jax.random.normal(k3, (C,), dtype=jnp.float32)
    beta = 0.1 * jax.random.normal(k4, (C,), dtype=jnp.float32)

    out = batchnorm_add_relu(x339, x332, gamma, beta)
    jax.block_until_ready(out)

    # sanity check against pure-JAX reference (training-mode BN)
    mean = jnp.mean(x339, axis=(0, 2, 3), keepdims=True)
    var = jnp.mean((x339 - mean) ** 2, axis=(0, 2, 3), keepdims=True)
    ref = (x339 - mean) * jax.lax.rsqrt(var + EPS)
    ref = ref * gamma.reshape(1, C, 1, 1) + beta.reshape(1, C, 1, 1)
    ref = jnp.maximum(ref + x332, 0.0)
    assert jnp.allclose(out, ref, atol=1e-4, rtol=1e-4)

    print("KERNEL_OK")
</pallas_src>

<mosaic_0001>
module attributes {stable_mosaic.version = 11 : i64} {
  func.func @bn_add_relu_kernel(%arg0: i32, %arg1: memref<1024x49xf32, #tpu.memory_space<vmem>>, %arg2: memref<1024x49xf32, #tpu.memory_space<vmem>>, %arg3: memref<1024x2xf32, #tpu.memory_space<vmem>>, %arg4: memref<1024x49xf32, #tpu.memory_space<vmem>>) attributes {dimension_semantics = [#tpu.dimension_semantics<parallel>], iteration_bounds = array<i64: 2>, scalar_prefetch = 0 : i64, scratch_operands = 0 : i64, tpu.core_type = #tpu.core_type<tc>, window_params = [{transform_indices = @transform_0, window_bounds = array<i64: 1024, 49>}, {transform_indices = @transform_1, window_bounds = array<i64: 1024, 49>}, {transform_indices = @transform_2, window_bounds = array<i64: 1024, 2>}, {transform_indices = @transform_3, window_bounds = array<i64: 1024, 49>}]} {
    %c0 = arith.constant 0 : index
    %c0_0 = arith.constant 0 : index
    %0 = vector.load %arg1[%c0, %c0_0] : memref<1024x49xf32, #tpu.memory_space<vmem>>, vector<1024x49xf32>
    %cst = arith.constant dense<0.000000e+00> : vector<1024xf32>
    %1 = vector.multi_reduction <add>, %0, %cst [1] : vector<1024x49xf32> to vector<1024xf32>
    %2 = vector.shape_cast %1 : vector<1024xf32> to vector<1024x1xf32>
    %cst_1 = arith.constant 0.0204081628 : f32
    %3 = vector.broadcast %cst_1 : f32 to vector<1024x1xf32>
    %4 = arith.mulf %2, %3 : vector<1024x1xf32>
    %5 = vector.broadcast %4 : vector<1024x1xf32> to vector<1024x49xf32>
    %6 = arith.subf %0, %5 : vector<1024x49xf32>
    %7 = arith.mulf %6, %6 : vector<1024x49xf32>
    %cst_2 = arith.constant dense<0.000000e+00> : vector<1024xf32>
    %8 = vector.multi_reduction <add>, %7, %cst_2 [1] : vector<1024x49xf32> to vector<1024xf32>
    %9 = vector.shape_cast %8 : vector<1024xf32> to vector<1024x1xf32>
    %cst_3 = arith.constant 0.0204081628 : f32
    %10 = vector.broadcast %cst_3 : f32 to vector<1024x1xf32>
    %11 = arith.mulf %9, %10 : vector<1024x1xf32>
    %cst_4 = arith.constant 9.99999974E-6 : f32
    %12 = vector.broadcast %cst_4 : f32 to vector<1024x1xf32>
    %13 = arith.addf %11, %12 : vector<1024x1xf32>
    %14 = math.rsqrt %13 : vector<1024x1xf32>
    %c0_5 = arith.constant 0 : index
    %c0_6 = arith.constant 0 : index
    %15 = vector.load %arg3[%c0_5, %c0_6] : memref<1024x2xf32, #tpu.memory_space<vmem>>, vector<1024x1xf32>
    %16 = arith.mulf %15, %14 : vector<1024x1xf32>
    %c0_7 = arith.constant 0 : index
    %c1 = arith.constant 1 : index
    %17 = vector.load %arg3[%c0_7, %c1] : memref<1024x2xf32, #tpu.memory_space<vmem>>, vector<1024x1xf32>
    %18 = vector.broadcast %16 : vector<1024x1xf32> to vector<1024x49xf32>
    %19 = arith.mulf %6, %18 : vector<1024x49xf32>
    %c0_8 = arith.constant 0 : index
    %c0_9 = arith.constant 0 : index
    %20 = vector.load %arg2[%c0_8, %c0_9] : memref<1024x49xf32, #tpu.memory_space<vmem>>, vector<1024x49xf32>
    %21 = vector.broadcast %17 : vector<1024x1xf32> to vector<1024x49xf32>
    %22 = arith.addf %21, %20 : vector<1024x49xf32>
    %23 = arith.addf %19, %22 : vector<1024x49xf32>
    %cst_10 = arith.constant 0.000000e+00 : f32
    %24 = vector.broadcast %cst_10 : f32 to vector<1024x49xf32>
    %25 = arith.maximumf %23, %24 : vector<1024x49xf32>
    %c0_11 = arith.constant 0 : index
    %c0_12 = arith.constant 0 : index
    %26 = vector.load %arg4[%c0_11, %c0_12] : memref<1024x49xf32, #tpu.memory_space<vmem>>, vector<1024x49xf32>
    tpu.vector_store %arg4[%c0_11, %c0_12], %25 {strides = array<i32>} : memref<1024x49xf32, #tpu.memory_space<vmem>>, vector<1024x49xf32>,
    return
  }
  func.func @transform_0(%arg0: i32) -> (i32, i32) {
    %c0_i32 = arith.constant 0 : i32
    %c0_i32_0 = arith.constant 0 : i32
    return %arg0, %c0_i32 : i32, i32
  }
  func.func @transform_1(%arg0: i32) -> (i32, i32) {
    %c0_i32 = arith.constant 0 : i32
    %c0_i32_0 = arith.constant 0 : i32
    return %arg0, %c0_i32 : i32, i32
  }
  func.func @transform_2(%arg0: i32) -> (i32, i32) {
    %c0_i32 = arith.constant 0 : i32
    %c0_i32_0 = arith.constant 0 : i32
    return %arg0, %c0_i32 : i32, i32
  }
  func.func @transform_3(%arg0: i32) -> (i32, i32) {
    %c0_i32 = arith.constant 0 : i32
    %c0_i32_0 = arith.constant 0 : i32
    return %arg0, %c0_i32 : i32, i32
  }
}

</mosaic_0001>

<llo_original>
// kernel: tpu_custom_call.1
$region0: #{tpu_custom_call.1}
  #allocation0 [shape = 'u32[]', space=smem, size = 0x4, offset = 0x4, fixed_abs, tag = 'smem constant byte address 0x4 - core index']
  #allocation1 [shape = 'u32[144,128]{1,0:T(1,128)}', space=vmem, size = 0x12000, scoped, tag = 'internal scratch']
  %s0 = inlined_call_operand.vmem [shape: f32[2048,49], index: 0, kind: input, shape index: {}]
  %s1 = inlined_call_operand.vmem [shape: f32[2048,49], index: 1, kind: input, shape index: {}]
  %s2 = inlined_call_operand.vmem [shape: f32[2048,2], index: 2, kind: input, shape index: {}]
  %s3 = inlined_call_operand.vmem [shape: f32[2048,49], index: 3, kind: output, shape index: {}]
  %s4 = sld [smem:[#allocation0]]
  $region45: #{tpu_custom_call.1} parent=0
    _
  %s6 = ssub.s32 1, %s4
  %s7 = scalar_select 0, %s6, %s4
  loop: start=0, step=1, limit=4
  $region2: #{tpu_custom_call.1} parent=0 // loop_pre_header
    _
  $region3: #{tpu_custom_call.1} parent=0 // loop_header
    %s9 = sphi 0, %s13
    %p10 = scmp.ge.s32.totalorder %s9, 4
    %s19 = sphi 0, %s21
    %s22 = sphi 0, %s19
    %s23 = sphi 0, %s22
    %s39 = sphi 0, %s23
    %s45 = sphi 0, %s47
    %s48 = sphi 0, %s45
    %s49 = sphi 0, %s48
    %s65 = sphi 0, %s49
    %s71 = sphi 0, %s73
    %s74 = sphi 0, %s71
    %s75 = sphi 0, %s74
    %s91 = sphi 0, %s75
    %s97 = sphi 0, %s99
    %s100 = sphi 0, %s97
    %s101 = sphi 0, %s100
    %s117 = sphi 0, %s101
  $region4: #{tpu_custom_call.1} parent=0 // loop_header_branch
    %12 = sbr.rel (%p10) target = $region8
  $region5: #{tpu_custom_call.1} parent=0 // loop_body
    %s14 = ssub.s32 %s9, 1
    %s15 = ssub.s32 %s9, 2
    %s16 = sadd.s32 %s9, 1
    %s17 = ssub.s32 %s9, %s16
    %p18 = scmp.eq.s32.totalorder %s17, 0
    %s20 = sadd.s32 %s19, 1
    %s21 = scalar_select %p18, %s19, %s20
    %p24 = pneg %p18
    %p25 = scmp.eq.s32.totalorder %s9, 1
    %p26 = por %p24, %p25
    %p27 = scmp.ne.s32.totalorder %s19, %s22
    %p28 = scmp.eq.s32.totalorder %s9, 0
    %p29 = por %p27, %p28
    %p30 = scmp.ne.s32.totalorder %s19, %s22
    %p31 = scmp.eq.s32.totalorder %s14, 1
    %p32 = por %p30, %p31
    %p33 = scmp.ne.s32.totalorder %s22, %s23
    %p34 = scmp.eq.s32.totalorder %s14, 0
    %p35 = por %p33, %p34
    %p36 = scmp.ne.s32.totalorder %s22, %s23
    %p37 = scmp.eq.s32.totalorder %s15, 1
    %p38 = por %p36, %p37
    %p40 = scmp.ne.s32.totalorder %s23, %s39
    %p41 = scmp.eq.s32.totalorder %s15, 0
    %p42 = por %p40, %p41
    %s43 = ssub.s32 %s9, %s16
    %p44 = scmp.eq.s32.totalorder %s43, 0
    %s46 = sadd.s32 %s45, 1
    %s47 = scalar_select %p44, %s45, %s46
    %p50 = pneg %p44
    %p51 = scmp.eq.s32.totalorder %s9, 1
    %p52 = por %p50, %p51
    %p53 = scmp.ne.s32.totalorder %s45, %s48
    %p54 = scmp.eq.s32.totalorder %s9, 0
    %p55 = por %p53, %p54
    %p56 = scmp.ne.s32.totalorder %s45, %s48
    %p57 = scmp.eq.s32.totalorder %s14, 1
    %p58 = por %p56, %p57
    %p59 = scmp.ne.s32.totalorder %s48, %s49
    %p60 = scmp.eq.s32.totalorder %s14, 0
    %p61 = por %p59, %p60
    %p62 = scmp.ne.s32.totalorder %s48, %s49
    %p63 = scmp.eq.s32.totalorder %s15, 1
    %p64 = por %p62, %p63
    %p66 = scmp.ne.s32.totalorder %s49, %s65
    %p67 = scmp.eq.s32.totalorder %s15, 0
    %p68 = por %p66, %p67
    %s69 = ssub.s32 %s9, %s16
    %p70 = scmp.eq.s32.totalorder %s69, 0
    %s72 = sadd.s32 %s71, 1
    %s73 = scalar_select %p70, %s71, %s72
    %p76 = pneg %p70
    %p77 = scmp.eq.s32.totalorder %s9, 1
    %p78 = por %p76, %p77
    %p79 = scmp.ne.s32.totalorder %s71, %s74
    %p80 = scmp.eq.s32.totalorder %s9, 0
    %p81 = por %p79, %p80
    %p82 = scmp.ne.s32.totalorder %s71, %s74
    %p83 = scmp.eq.s32.totalorder %s14, 1
    %p84 = por %p82, %p83
    %p85 = scmp.ne.s32.totalorder %s74, %s75
    %p86 = scmp.eq.s32.totalorder %s14, 0
    %p87 = por %p85, %p86
    %p88 = scmp.ne.s32.totalorder %s74, %s75
    %p89 = scmp.eq.s32.totalorder %s15, 1
    %p90 = por %p88, %p89
    %p92 = scmp.ne.s32.totalorder %s75, %s91
    %p93 = scmp.eq.s32.totalorder %s15, 0
    %p94 = por %p92, %p93
    %s95 = ssub.s32 %s9, %s16
    %p96 = scmp.eq.s32.totalorder %s95, 0
    %s98 = sadd.s32 %s97, 1
    %s99 = scalar_select %p96, %s97, %s98
    %p102 = pneg %p96
    %p103 = scmp.eq.s32.totalorder %s9, 1
    %p104 = por %p102, %p103
    %p105 = scmp.ne.s32.totalorder %s97, %s100
    %p106 = scmp.eq.s32.totalorder %s9, 0
    %p107 = por %p105, %p106
    %p108 = scmp.ne.s32.totalorder %s97, %s100
    %p109 = scmp.eq.s32.totalorder %s14, 1
    %p110 = por %p108, %p109
    %p111 = scmp.ne.s32.totalorder %s100, %s101
    %p112 = scmp.eq.s32.totalorder %s14, 0
    %p113 = por %p111, %p112
    %p114 = scmp.ne.s32.totalorder %s100, %s101
    %p115 = scmp.eq.s32.totalorder %s15, 1
    %p116 = por %p114, %p115
    %p118 = scmp.ne.s32.totalorder %s101, %s117
    %p119 = scmp.eq.s32.totalorder %s15, 0
    %p120 = por %p118, %p119
    %p121 = scmp.le.s32.totalorder 1, %s9
    %p122 = scmp.lt.s32.totalorder %s9, 3
    %p123 = pnand %p121, %p122
    %p124 = pneg %p123
    // Predicated region
    $region9: #{tpu_custom_call.1} parent=5 // pred_check
      _
    $region10: #{tpu_custom_call.1} parent=5 // pred_check_branch
      %126 = sbr.rel (%p123) target = $region12
    $region11: #{tpu_custom_call.1} parent=5 // pred_region
      %s127 = ssub.s32 %s9, 1
    $region12: #{tpu_custom_call.1} parent=5 // pred_fallthru
      _
    %p128 = scmp.lt.s32.totalorder %s9, 2
    // Predicated region
    $region13: #{tpu_custom_call.1} parent=5 // pred_check
      %p129 = pneg %p128
    $region14: #{tpu_custom_call.1} parent=5 // pred_check_branch
      %131 = sbr.rel (%p129) target = $region16
    $region15: #{tpu_custom_call.1} parent=5 // pred_region
      // Predicated region
      $region17: #{tpu_custom_call.1} parent=15 // pred_check
        %p132 = pneg %p29
      $region18: #{tpu_custom_call.1} parent=15 // pred_check_branch
        %134 = sbr.rel (%p132) target = $region20
      $region19: #{tpu_custom_call.1} parent=15 // pred_region
        %s135 = smul.u32 128, %s9
        %p136 = scmp.lt.s32.totalorder %s135, 255
        %s137 = scalar_select %p136, %s135, 255
        %s138 = smul.addr %s137, 8
        %s139 = scalar_lea.vmem %s0, %s138
        %s140 = smul.u32 128, %s9
      $region20: #{tpu_custom_call.1} parent=15 // pred_fallthru
        _
      // Predicated region
      $region21: #{tpu_custom_call.1} parent=15 // pred_check
        %p141 = pneg %p55
      $region22: #{tpu_custom_call.1} parent=15 // pred_check_branch
        %143 = sbr.rel (%p141) target = $region24
      $region23: #{tpu_custom_call.1} parent=15 // pred_region
        %s144 = smul.u32 128, %s9
        %p145 = scmp.lt.s32.totalorder %s144, 255
        %s146 = scalar_select %p145, %s144, 255
        %s147 = smul.addr %s146, 8
        %s148 = scalar_lea.vmem %s1, %s147
        %s149 = smul.u32 128, %s9
      $region24: #{tpu_custom_call.1} parent=15 // pred_fallthru
        _
      // Predicated region
      $region25: #{tpu_custom_call.1} parent=15 // pred_check
        %p150 = pneg %p81
      $region26: #{tpu_custom_call.1} parent=15 // pred_check_branch
        %152 = sbr.rel (%p150) target = $region28
      $region27: #{tpu_custom_call.1} parent=15 // pred_region
        %s153 = smul.u32 128, %s9
        %p154 = scmp.lt.s32.totalorder %s153, 255
        %s155 = scalar_select %p154, %s153, 255
        %s156 = smul.addr %s155, 8
        %s157 = scalar_lea.vmem %s2, %s156
        %s158 = smul.u32 128, %s9
      $region28: #{tpu_custom_call.1} parent=15 // pred_fallthru
        _
    $region16: #{tpu_custom_call.1} parent=5 // pred_fallthru
      _
    %p159 = scmp.le.s32.totalorder 1, %s9
    %p160 = scmp.lt.s32.totalorder %s9, 3
    %p161 = pnand %p159, %p160
    %p162 = pneg %p161
    // Predicated region
    $region29: #{tpu_custom_call.1} parent=5 // pred_check
      _
    $region30: #{tpu_custom_call.1} parent=5 // pred_check_branch
      %164 = sbr.rel (%p161) target = $region32
    $region31: #{tpu_custom_call.1} parent=5 // pred_region
      %s165 = ssub.s32 %s9, 1
      %s166 = smul.u32 128, %s14
      %p167 = scmp.lt.s32.totalorder %s166, 255
      %s168 = scalar_select %p167, %s166, 255
      %s169 = smul.addr %s168, 8
      %s170 = scalar_lea.vmem %s0, %s169
      %p171 = pneg %p35
      %p172 = pneg %p32
      %s173 = smul.u32 128, %s14
      %p174 = scmp.lt.s32.totalorder %s173, 255
      %s175 = scalar_select %p174, %s173, 255
      %s176 = smul.addr %s175, 8
      %s177 = scalar_lea.vmem %s1, %s176
      %p178 = pneg %p61
      %p179 = pneg %p58
      %s180 = smul.u32 128, %s14
      %p181 = scmp.lt.s32.totalorder %s180, 255
      %s182 = scalar_select %p181, %s180, 255
      %s183 = smul.addr %s182, 8
      %s184 = scalar_lea.vmem %s2, %s183
      %p185 = pneg %p87
      %p186 = pneg %p84
      %p187 = pneg %p113
      %p188 = pneg %p110
      %s189 = smul.u32 128, %s14
      %p190 = scmp.lt.s32.totalorder %s189, 255
      %s191 = scalar_select %p190, %s189, 255
      %s192 = smul.addr %s191, 8
      %s193 = scalar_lea.vmem %s3, %s192
      %s194 = smul.u32 128, %s14
      %p195 = scmp.lt.s32.totalorder %s194, 255
      %s196 = scalar_select %p195, %s194, 255
      %s197 = smul.addr %s196, 8
      %s198 = scalar_lea.vmem %s0, %s197
      %s199 = smul.u32 128, %s14
      %s200 = smul.u32 128, %s14
      %p201 = scmp.lt.s32.totalorder %s200, 255
      %s202 = scalar_select %p201, %s200, 255
      %s203 = smul.addr %s202, 8
      %s204 = scalar_lea.vmem %s1, %s203
      %s205 = smul.u32 128, %s14
      %s206 = smul.u32 128, %s14
      %p207 = scmp.lt.s32.totalorder %s206, 255
      %s208 = scalar_select %p207, %s206, 255
      %s209 = smul.addr %s208, 8
      %s210 = scalar_lea.vmem %s2, %s209
      %s211 = smul.u32 128, %s14
      %s212 = smul.u32 128, %s14
      %p213 = scmp.lt.s32.totalorder %s212, 255
      %s214 = scalar_select %p213, %s212, 255
      %s215 = smul.addr %s214, 8
      %s216 = scalar_lea.vmem %s3, %s215
      %s217 = smul.u32 128, %s14
      %v218 = vld [vmem:[%s198] sm:$0xff]
      %v219 = vld [vmem:[%s198 + $0x8] sm:$0xff]
      %v220 = vld [vmem:[%s198 + $0x10] sm:$0xff]
      %v221 = vld [vmem:[%s198 + $0x18] sm:$0xff]
      %v222 = vld [vmem:[%s198 + $0x20] sm:$0xff]
      %v223 = vld [vmem:[%s198 + $0x28] sm:$0xff]
      %v224 = vld [vmem:[%s198 + $0x30] sm:$0xff]
      %v225 = vld [vmem:[%s198 + $0x38] sm:$0xff]
      %v226 = vld [vmem:[%s198 + $0x40] sm:$0xff]
      %v227 = vld [vmem:[%s198 + $0x48] sm:$0xff]
      %v228 = vld [vmem:[%s198 + $0x50] sm:$0xff]
      %v229 = vld [vmem:[%s198 + $0x58] sm:$0xff]
      %v230 = vld [vmem:[%s198 + $0x60] sm:$0xff]
      %v231 = vld [vmem:[%s198 + $0x68] sm:$0xff]
      %v232 = vld [vmem:[%s198 + $0x70] sm:$0xff]
      %v233 = vld [vmem:[%s198 + $0x78] sm:$0xff]
      %v234 = vld [vmem:[%s198 + $0x80] sm:$0xff]
      %v235 = vld [vmem:[%s198 + $0x88] sm:$0xff]
      %v236 = vld [vmem:[%s198 + $0x90] sm:$0xff]
      %v237 = vld [vmem:[%s198 + $0x98] sm:$0xff]
      %v238 = vld [vmem:[%s198 + $0xa0] sm:$0xff]
      %v239 = vld [vmem:[%s198 + $0xa8] sm:$0xff]
      %v240 = vld [vmem:[%s198 + $0xb0] sm:$0xff]
      %v241 = vld [vmem:[%s198 + $0xb8] sm:$0xff]
      %v242 = vld [vmem:[%s198 + $0xc0] sm:$0xff]
      %v243 = vld [vmem:[%s198 + $0xc8] sm:$0xff]
      %v244 = vld [vmem:[%s198 + $0xd0] sm:$0xff]
      %v245 = vld [vmem:[%s198 + $0xd8] sm:$0xff]
      %v246 = vld [vmem:[%s198 + $0xe0] sm:$0xff]
      %v247 = vld [vmem:[%s198 + $0xe8] sm:$0xff]
      %v248 = vld [vmem:[%s198 + $0xf0] sm:$0xff]
      %v249 = vld [vmem:[%s198 + $0xf8] sm:$0xff]
      %v250 = vld [vmem:[%s198 + $0x100] sm:$0xff]
      %v251 = vld [vmem:[%s198 + $0x108] sm:$0xff]
      %v252 = vld [vmem:[%s198 + $0x110] sm:$0xff]
      %v253 = vld [vmem:[%s198 + $0x118] sm:$0xff]
      %v254 = vld [vmem:[%s198 + $0x120] sm:$0xff]
      %v255 = vld [vmem:[%s198 + $0x128] sm:$0xff]
      %v256 = vld [vmem:[%s198 + $0x130] sm:$0xff]
      %v257 = vld [vmem:[%s198 + $0x138] sm:$0xff]
      %v258 = vld [vmem:[%s198 + $0x140] sm:$0xff]
      %v259 = vld [vmem:[%s198 + $0x148] sm:$0xff]
      %v260 = vld [vmem:[%s198 + $0x150] sm:$0xff]
      %v261 = vld [vmem:[%s198 + $0x158] sm:$0xff]
      %v262 = vld [vmem:[%s198 + $0x160] sm:$0xff]
      %v263 = vld [vmem:[%s198 + $0x168] sm:$0xff]
      %v264 = vld [vmem:[%s198 + $0x170] sm:$0xff]
      %v265 = vld [vmem:[%s198 + $0x178] sm:$0xff]
      %v266 = vld [vmem:[%s198 + $0x180] sm:$0xff]
      %v267 = vld [vmem:[%s198 + $0x188] sm:$0xff]
      %v268 = vld [vmem:[%s198 + $0x190] sm:$0xff]
      %v269 = vld [vmem:[%s198 + $0x198] sm:$0xff]
      %v270 = vld [vmem:[%s198 + $0x1a0] sm:$0xff]
      %v271 = vld [vmem:[%s198 + $0x1a8] sm:$0xff]
      %v272 = vld [vmem:[%s198 + $0x1b0] sm:$0xff]
      %v273 = vld [vmem:[%s198 + $0x1b8] sm:$0xff]
      %v274 = vld [vmem:[%s198 + $0x1c0] sm:$0xff]
      %v275 = vld [vmem:[%s198 + $0x1c8] sm:$0xff]
      %v276 = vld [vmem:[%s198 + $0x1d0] sm:$0xff]
      %v277 = vld [vmem:[%s198 + $0x1d8] sm:$0xff]
      %v278 = vld [vmem:[%s198 + $0x1e0] sm:$0xff]
      %v279 = vld [vmem:[%s198 + $0x1e8] sm:$0xff]
      %v280 = vld [vmem:[%s198 + $0x1f0] sm:$0xff]
      %v281 = vld [vmem:[%s198 + $0x1f8] sm:$0xff]
      %v282 = vld [vmem:[%s198 + $0x200] sm:$0xff]
      %v283 = vld [vmem:[%s198 + $0x208] sm:$0xff]
      %v284 = vld [vmem:[%s198 + $0x210] sm:$0xff]
      %v285 = vld [vmem:[%s198 + $0x218] sm:$0xff]
      %v286 = vld [vmem:[%s198 + $0x220] sm:$0xff]
      %v287 = vld [vmem:[%s198 + $0x228] sm:$0xff]
      %v288 = vld [vmem:[%s198 + $0x230] sm:$0xff]
      %v289 = vld [vmem:[%s198 + $0x238] sm:$0xff]
      %v290 = vld [vmem:[%s198 + $0x240] sm:$0xff]
      %v291 = vld [vmem:[%s198 + $0x248] sm:$0xff]
      %v292 = vld [vmem:[%s198 + $0x250] sm:$0xff]
      %v293 = vld [vmem:[%s198 + $0x258] sm:$0xff]
      %v294 = vld [vmem:[%s198 + $0x260] sm:$0xff]
      %v295 = vld [vmem:[%s198 + $0x268] sm:$0xff]
      %v296 = vld [vmem:[%s198 + $0x270] sm:$0xff]
      %v297 = vld [vmem:[%s198 + $0x278] sm:$0xff]
      %v298 = vld [vmem:[%s198 + $0x280] sm:$0xff]
      %v299 = vld [vmem:[%s198 + $0x288] sm:$0xff]
      %v300 = vld [vmem:[%s198 + $0x290] sm:$0xff]
      %v301 = vld [vmem:[%s198 + $0x298] sm:$0xff]
      %v302 = vld [vmem:[%s198 + $0x2a0] sm:$0xff]
      %v303 = vld [vmem:[%s198 + $0x2a8] sm:$0xff]
      %v304 = vld [vmem:[%s198 + $0x2b0] sm:$0xff]
      %v305 = vld [vmem:[%s198 + $0x2b8] sm:$0xff]
      %v306 = vld [vmem:[%s198 + $0x2c0] sm:$0xff]
      %v307 = vld [vmem:[%s198 + $0x2c8] sm:$0xff]
      %v308 = vld [vmem:[%s198 + $0x2d0] sm:$0xff]
      %v309 = vld [vmem:[%s198 + $0x2d8] sm:$0xff]
      %v310 = vld [vmem:[%s198 + $0x2e0] sm:$0xff]
      %v311 = vld [vmem:[%s198 + $0x2e8] sm:$0xff]
      %v312 = vld [vmem:[%s198 + $0x2f0] sm:$0xff]
      %v313 = vld [vmem:[%s198 + $0x2f8] sm:$0xff]
      %v314 = vld [vmem:[%s198 + $0x300] sm:$0xff]
      %v315 = vld [vmem:[%s198 + $0x308] sm:$0xff]
      %v316 = vld [vmem:[%s198 + $0x310] sm:$0xff]
      %v317 = vld [vmem:[%s198 + $0x318] sm:$0xff]
      %v318 = vld [vmem:[%s198 + $0x320] sm:$0xff]
      %v319 = vld [vmem:[%s198 + $0x328] sm:$0xff]
      %v320 = vld [vmem:[%s198 + $0x330] sm:$0xff]
      %v321 = vld [vmem:[%s198 + $0x338] sm:$0xff]
      %v322 = vld [vmem:[%s198 + $0x340] sm:$0xff]
      %v323 = vld [vmem:[%s198 + $0x348] sm:$0xff]
      %v324 = vld [vmem:[%s198 + $0x350] sm:$0xff]
      %v325 = vld [vmem:[%s198 + $0x358] sm:$0xff]
      %v326 = vld [vmem:[%s198 + $0x360] sm:$0xff]
      %v327 = vld [vmem:[%s198 + $0x368] sm:$0xff]
      %v328 = vld [vmem:[%s198 + $0x370] sm:$0xff]
      %v329 = vld [vmem:[%s198 + $0x378] sm:$0xff]
      %v330 = vld [vmem:[%s198 + $0x380] sm:$0xff]
      %v331 = vld [vmem:[%s198 + $0x388] sm:$0xff]
      %v332 = vld [vmem:[%s198 + $0x390] sm:$0xff]
      %v333 = vld [vmem:[%s198 + $0x398] sm:$0xff]
      %v334 = vld [vmem:[%s198 + $0x3a0] sm:$0xff]
      %v335 = vld [vmem:[%s198 + $0x3a8] sm:$0xff]
      %v336 = vld [vmem:[%s198 + $0x3b0] sm:$0xff]
      %v337 = vld [vmem:[%s198 + $0x3b8] sm:$0xff]
      %v338 = vld [vmem:[%s198 + $0x3c0] sm:$0xff]
      %v339 = vld [vmem:[%s198 + $0x3c8] sm:$0xff]
      %v340 = vld [vmem:[%s198 + $0x3d0] sm:$0xff]
      %v341 = vld [vmem:[%s198 + $0x3d8] sm:$0xff]
      %v342 = vld [vmem:[%s198 + $0x3e0] sm:$0xff]
      %v343 = vld [vmem:[%s198 + $0x3e8] sm:$0xff]
      %v344 = vld [vmem:[%s198 + $0x3f0] sm:$0xff]
      %v345 = vld [vmem:[%s198 + $0x3f8] sm:$0xff]
      %vm346 = vcmask 400384
      %v347 = vsel %vm346, %v218, 0.0
      %348 = vadd.xlane.f32.xlu0 %v347
      %v349 = vpop.xlane.xlu0 %348
      %v350 = vsel %vm346, %v219, 0.0
      %351 = vadd.xlane.f32.xlu0 %v350
      %v352 = vpop.xlane.xlu0 %351
      %v353 = vsel %vm346, %v220, 0.0
      %354 = vadd.xlane.f32.xlu0 %v353
      %v355 = vpop.xlane.xlu0 %354
      %v356 = vsel %vm346, %v221, 0.0
      %357 = vadd.xlane.f32.xlu0 %v356
      %v358 = vpop.xlane.xlu0 %357
      %v359 = vsel %vm346, %v222, 0.0
      %360 = vadd.xlane.f32.xlu0 %v359
      %v361 = vpop.xlane.xlu0 %360
      %v362 = vsel %vm346, %v223, 0.0
      %363 = vadd.xlane.f32.xlu0 %v362
      %v364 = vpop.xlane.xlu0 %363
      %v365 = vsel %vm346, %v224, 0.0
      %366 = vadd.xlane.f32.xlu0 %v365
      %v367 = vpop.xlane.xlu0 %366
      %v368 = vsel %vm346, %v225, 0.0
      %369 = vadd.xlane.f32.xlu0 %v368
      %v370 = vpop.xlane.xlu0 %369
      %v371 = vsel %vm346, %v226, 0.0
      %372 = vadd.xlane.f32.xlu0 %v371
      %v373 = vpop.xlane.xlu0 %372
      %v374 = vsel %vm346, %v227, 0.0
      %375 = vadd.xlane.f32.xlu0 %v374
      %v376 = vpop.xlane.xlu0 %375
      %v377 = vsel %vm346, %v228, 0.0
      %378 = vadd.xlane.f32.xlu0 %v377
      %v379 = vpop.xlane.xlu0 %378
      %v380 = vsel %vm346, %v229, 0.0
      %381 = vadd.xlane.f32.xlu0 %v380
      %v382 = vpop.xlane.xlu0 %381
      %v383 = vsel %vm346, %v230, 0.0
      %384 = vadd.xlane.f32.xlu0 %v383
      %v385 = vpop.xlane.xlu0 %384
      %v386 = vsel %vm346, %v231, 0.0
      %387 = vadd.xlane.f32.xlu0 %v386
      %v388 = vpop.xlane.xlu0 %387
      %v389 = vsel %vm346, %v232, 0.0
      %390 = vadd.xlane.f32.xlu0 %v389
      %v391 = vpop.xlane.xlu0 %390
      %v392 = vsel %vm346, %v233, 0.0
      %393 = vadd.xlane.f32.xlu0 %v392
      %v394 = vpop.xlane.xlu0 %393
      %v395 = vsel %vm346, %v234, 0.0
      %396 = vadd.xlane.f32.xlu0 %v395
      %v397 = vpop.xlane.xlu0 %396
      %v398 = vsel %vm346, %v235, 0.0
      %399 = vadd.xlane.f32.xlu0 %v398
      %v400 = vpop.xlane.xlu0 %399
      %v401 = vsel %vm346, %v236, 0.0
      %402 = vadd.xlane.f32.xlu0 %v401
      %v403 = vpop.xlane.xlu0 %402
      %v404 = vsel %vm346, %v237, 0.0
      %405 = vadd.xlane.f32.xlu0 %v404
      %v406 = vpop.xlane.xlu0 %405
      %v407 = vsel %vm346, %v238, 0.0
      %408 = vadd.xlane.f32.xlu0 %v407
      %v409 = vpop.xlane.xlu0 %408
      %v410 = vsel %vm346, %v239, 0.0
      %411 = vadd.xlane.f32.xlu0 %v410
      %v412 = vpop.xlane.xlu0 %411
      %v413 = vsel %vm346, %v240, 0.0
      %414 = vadd.xlane.f32.xlu0 %v413
      %v415 = vpop.xlane.xlu0 %414
      %v416 = vsel %vm346, %v241, 0.0
      %417 = vadd.xlane.f32.xlu0 %v416
      %v418 = vpop.xlane.xlu0 %417
      %v419 = vsel %vm346, %v242, 0.0
      %420 = vadd.xlane.f32.xlu0 %v419
      %v421 = vpop.xlane.xlu0 %420
      %v422 = vsel %vm346, %v243, 0.0
      %423 = vadd.xlane.f32.xlu0 %v422
      %v424 = vpop.xlane.xlu0 %423
      %v425 = vsel %vm346, %v244, 0.0
      %426 = vadd.xlane.f32.xlu0 %v425
      %v427 = vpop.xlane.xlu0 %426
      %v428 = vsel %vm346, %v245, 0.0
      %429 = vadd.xlane.f32.xlu0 %v428
      %v430 = vpop.xlane.xlu0 %429
      %v431 = vsel %vm346, %v246, 0.0
      %432 = vadd.xlane.f32.xlu0 %v431
      %v433 = vpop.xlane.xlu0 %432
      %v434 = vsel %vm346, %v247, 0.0
      %435 = vadd.xlane.f32.xlu0 %v434
      %v436 = vpop.xlane.xlu0 %435
      %v437 = vsel %vm346, %v248, 0.0
      %438 = vadd.xlane.f32.xlu0 %v437
      %v439 = vpop.xlane.xlu0 %438
      %v440 = vsel %vm346, %v249, 0.0
      %441 = vadd.xlane.f32.xlu0 %v440
      %v442 = vpop.xlane.xlu0 %441
      %v443 = vsel %vm346, %v250, 0.0
      %444 = vadd.xlane.f32.xlu0 %v443
      %v445 = vpop.xlane.xlu0 %444
      %v446 = vsel %vm346, %v251, 0.0
      %447 = vadd.xlane.f32.xlu0 %v446
      %v448 = vpop.xlane.xlu0 %447
      %v449 = vsel %vm346, %v252, 0.0
      %450 = vadd.xlane.f32.xlu0 %v449
      %v451 = vpop.xlane.xlu0 %450
      %v452 = vsel %vm346, %v253, 0.0
      %453 = vadd.xlane.f32.xlu0 %v452
      %v454 = vpop.xlane.xlu0 %453
      %v455 = vsel %vm346, %v254, 0.0
      %456 = vadd.xlane.f32.xlu0 %v455
      %v457 = vpop.xlane.xlu0 %456
      %v458 = vsel %vm346, %v255, 0.0
      %459 = vadd.xlane.f32.xlu0 %v458
      %v460 = vpop.xlane.xlu0 %459
      %v461 = vsel %vm346, %v256, 0.0
      %462 = vadd.xlane.f32.xlu0 %v461
      %v463 = vpop.xlane.xlu0 %462
      %v464 = vsel %vm346, %v257, 0.0
      %465 = vadd.xlane.f32.xlu0 %v464
      %v466 = vpop.xlane.xlu0 %465
      %v467 = vsel %vm346, %v258, 0.0
      %468 = vadd.xlane.f32.xlu0 %v467
      %v469 = vpop.xlane.xlu0 %468
      %v470 = vsel %vm346, %v259, 0.0
      %471 = vadd.xlane.f32.xlu0 %v470
      %v472 = vpop.xlane.xlu0 %471
      %v473 = vsel %vm346, %v260, 0.0
      %474 = vadd.xlane.f32.xlu0 %v473
      %v475 = vpop.xlane.xlu0 %474
      %v476 = vsel %vm346, %v261, 0.0
      %477 = vadd.xlane.f32.xlu0 %v476
      %v478 = vpop.xlane.xlu0 %477
      %v479 = vsel %vm346, %v262, 0.0
      %480 = vadd.xlane.f32.xlu0 %v479
      %v481 = vpop.xlane.xlu0 %480
      %v482 = vsel %vm346, %v263, 0.0
      %483 = vadd.xlane.f32.xlu0 %v482
      %v484 = vpop.xlane.xlu0 %483
      %v485 = vsel %vm346, %v264, 0.0
      %486 = vadd.xlane.f32.xlu0 %v485
      %v487 = vpop.xlane.xlu0 %486
      %v488 = vsel %vm346, %v265, 0.0
      %489 = vadd.xlane.f32.xlu0 %v488
      %v490 = vpop.xlane.xlu0 %489
      %v491 = vsel %vm346, %v266, 0.0
      %492 = vadd.xlane.f32.xlu0 %v491
      %v493 = vpop.xlane.xlu0 %492
      %v494 = vsel %vm346, %v267, 0.0
      %495 = vadd.xlane.f32.xlu0 %v494
      %v496 = vpop.xlane.xlu0 %495
      %v497 = vsel %vm346, %v268, 0.0
      %498 = vadd.xlane.f32.xlu0 %v497
      %v499 = vpop.xlane.xlu0 %498
      %v500 = vsel %vm346, %v269, 0.0
      %501 = vadd.xlane.f32.xlu0 %v500
      %v502 = vpop.xlane.xlu0 %501
      %v503 = vsel %vm346, %v270, 0.0
      %504 = vadd.xlane.f32.xlu0 %v503
      %v505 = vpop.xlane.xlu0 %504
      %v506 = vsel %vm346, %v271, 0.0
      %507 = vadd.xlane.f32.xlu0 %v506
      %v508 = vpop.xlane.xlu0 %507
      %v509 = vsel %vm346, %v272, 0.0
      %510 = vadd.xlane.f32.xlu0 %v509
      %v511 = vpop.xlane.xlu0 %510
      %v512 = vsel %vm346, %v273, 0.0
      %513 = vadd.xlane.f32.xlu0 %v512
      %v514 = vpop.xlane.xlu0 %513
      %v515 = vsel %vm346, %v274, 0.0
      %516 = vadd.xlane.f32.xlu0 %v515
      %v517 = vpop.xlane.xlu0 %516
      %v518 = vsel %vm346, %v275, 0.0
      %519 = vadd.xlane.f32.xlu0 %v518
      %v520 = vpop.xlane.xlu0 %519
      %v521 = vsel %vm346, %v276, 0.0
      %522 = vadd.xlane.f32.xlu0 %v521
      %v523 = vpop.xlane.xlu0 %522
      %v524 = vsel %vm346, %v277, 0.0
      %525 = vadd.xlane.f32.xlu0 %v524
      %v526 = vpop.xlane.xlu0 %525
      %v527 = vsel %vm346, %v278, 0.0
      %528 = vadd.xlane.f32.xlu0 %v527
      %v529 = vpop.xlane.xlu0 %528
      %v530 = vsel %vm346, %v279, 0.0
      %531 = vadd.xlane.f32.xlu0 %v530
      %v532 = vpop.xlane.xlu0 %531
      %v533 = vsel %vm346, %v280, 0.0
      %534 = vadd.xlane.f32.xlu0 %v533
      %v535 = vpop.xlane.xlu0 %534
      %v536 = vsel %vm346, %v281, 0.0
      %537 = vadd.xlane.f32.xlu0 %v536
      %v538 = vpop.xlane.xlu0 %537
      %v539 = vsel %vm346, %v282, 0.0
      %540 = vadd.xlane.f32.xlu0 %v539
      %v541 = vpop.xlane.xlu0 %540
      %v542 = vsel %vm346, %v283, 0.0
      %543 = vadd.xlane.f32.xlu0 %v542
      %v544 = vpop.xlane.xlu0 %543
      %v545 = vsel %vm346, %v284, 0.0
      %546 = vadd.xlane.f32.xlu0 %v545
      %v547 = vpop.xlane.xlu0 %546
      %v548 = vsel %vm346, %v285, 0.0
      %549 = vadd.xlane.f32.xlu0 %v548
      %v550 = vpop.xlane.xlu0 %549
      %v551 = vsel %vm346, %v286, 0.0
      %552 = vadd.xlane.f32.xlu0 %v551
      %v553 = vpop.xlane.xlu0 %552
      %v554 = vsel %vm346, %v287, 0.0
      %555 = vadd.xlane.f32.xlu0 %v554
      %v556 = vpop.xlane.xlu0 %555
      %v557 = vsel %vm346, %v288, 0.0
      %558 = vadd.xlane.f32.xlu0 %v557
      %v559 = vpop.xlane.xlu0 %558
      %v560 = vsel %vm346, %v289, 0.0
      %561 = vadd.xlane.f32.xlu0 %v560
      %v562 = vpop.xlane.xlu0 %561
      %v563 = vsel %vm346, %v290, 0.0
      %564 = vadd.xlane.f32.xlu0 %v563
      %v565 = vpop.xlane.xlu0 %564
      %v566 = vsel %vm346, %v291, 0.0
      %567 = vadd.xlane.f32.xlu0 %v566
      %v568 = vpop.xlane.xlu0 %567
      %v569 = vsel %vm346, %v292, 0.0
      %570 = vadd.xlane.f32.xlu0 %v569
      %v571 = vpop.xlane.xlu0 %570
      %v572 = vsel %vm346, %v293, 0.0
      %573 = vadd.xlane.f32.xlu0 %v572
      %v574 = vpop.xlane.xlu0 %573
      %v575 = vsel %vm346, %v294, 0.0
      %576 = vadd.xlane.f32.xlu0 %v575
      %v577 = vpop.xlane.xlu0 %576
      %v578 = vsel %vm346, %v295, 0.0
      %579 = vadd.xlane.f32.xlu0 %v578
      %v580 = vpop.xlane.xlu0 %579
      %v581 = vsel %vm346, %v296, 0.0
      %582 = vadd.xlane.f32.xlu0 %v581
      %v583 = vpop.xlane.xlu0 %582
      %v584 = vsel %vm346, %v297, 0.0
      %585 = vadd.xlane.f32.xlu0 %v584
      %v586 = vpop.xlane.xlu0 %585
      %v587 = vsel %vm346, %v298, 0.0
      %588 = vadd.xlane.f32.xlu0 %v587
      %v589 = vpop.xlane.xlu0 %588
      %v590 = vsel %vm346, %v299, 0.0
      %591 = vadd.xlane.f32.xlu0 %v590
      %v592 = vpop.xlane.xlu0 %591
      %v593 = vsel %vm346, %v300, 0.0
      %594 = vadd.xlane.f32.xlu0 %v593
      %v595 = vpop.xlane.xlu0 %594
      %v596 = vsel %vm346, %v301, 0.0
      %597 = vadd.xlane.f32.xlu0 %v596
      %v598 = vpop.xlane.xlu0 %597
      %v599 = vsel %vm346, %v302, 0.0
      %600 = vadd.xlane.f32.xlu0 %v599
      %v601 = vpop.xlane.xlu0 %600
      %v602 = vsel %vm346, %v303, 0.0
      %603 = vadd.xlane.f32.xlu0 %v602
      %v604 = vpop.xlane.xlu0 %603
      %v605 = vsel %vm346, %v304, 0.0
      %606 = vadd.xlane.f32.xlu0 %v605
      %v607 = vpop.xlane.xlu0 %606
      %v608 = vsel %vm346, %v305, 0.0
      %609 = vadd.xlane.f32.xlu0 %v608
      %v610 = vpop.xlane.xlu0 %609
      %v611 = vsel %vm346, %v306, 0.0
      %612 = vadd.xlane.f32.xlu0 %v611
      %v613 = vpop.xlane.xlu0 %612
      %v614 = vsel %vm346, %v307, 0.0
      %615 = vadd.xlane.f32.xlu0 %v614
      %v616 = vpop.xlane.xlu0 %615
      %v617 = vsel %vm346, %v308, 0.0
      %618 = vadd.xlane.f32.xlu0 %v617
      %v619 = vpop.xlane.xlu0 %618
      %v620 = vsel %vm346, %v309, 0.0
      %621 = vadd.xlane.f32.xlu0 %v620
      %v622 = vpop.xlane.xlu0 %621
      %v623 = vsel %vm346, %v310, 0.0
      %624 = vadd.xlane.f32.xlu0 %v623
      %v625 = vpop.xlane.xlu0 %624
      %v626 = vsel %vm346, %v311, 0.0
      %627 = vadd.xlane.f32.xlu0 %v626
      %v628 = vpop.xlane.xlu0 %627
      %v629 = vsel %vm346, %v312, 0.0
      %630 = vadd.xlane.f32.xlu0 %v629
      %v631 = vpop.xlane.xlu0 %630
      %v632 = vsel %vm346, %v313, 0.0
      %633 = vadd.xlane.f32.xlu0 %v632
      %v634 = vpop.xlane.xlu0 %633
      %v635 = vsel %vm346, %v314, 0.0
      %636 = vadd.xlane.f32.xlu0 %v635
      %v637 = vpop.xlane.xlu0 %636
      %v638 = vsel %vm346, %v315, 0.0
      %639 = vadd.xlane.f32.xlu0 %v638
      %v640 = vpop.xlane.xlu0 %639
      %v641 = vsel %vm346, %v316, 0.0
      %642 = vadd.xlane.f32.xlu0 %v641
      %v643 = vpop.xlane.xlu0 %642
      %v644 = vsel %vm346, %v317, 0.0
      %645 = vadd.xlane.f32.xlu0 %v644
      %v646 = vpop.xlane.xlu0 %645
      %v647 = vsel %vm346, %v318, 0.0
      %648 = vadd.xlane.f32.xlu0 %v647
      %v649 = vpop.xlane.xlu0 %648
      %v650 = vsel %vm346, %v319, 0.0
      %651 = vadd.xlane.f32.xlu0 %v650
      %v652 = vpop.xlane.xlu0 %651
      %v653 = vsel %vm346, %v320, 0.0
      %654 = vadd.xlane.f32.xlu0 %v653
      %v655 = vpop.xlane.xlu0 %654
      %v656 = vsel %vm346, %v321, 0.0
      %657 = vadd.xlane.f32.xlu0 %v656
      %v658 = vpop.xlane.xlu0 %657
      %v659 = vsel %vm346, %v322, 0.0
      %660 = vadd.xlane.f32.xlu0 %v659
      %v661 = vpop.xlane.xlu0 %660
      %v662 = vsel %vm346, %v323, 0.0
      %663 = vadd.xlane.f32.xlu0 %v662
      %v664 = vpop.xlane.xlu0 %663
      %v665 = vsel %vm346, %v324, 0.0
      %666 = vadd.xlane.f32.xlu0 %v665
      %v667 = vpop.xlane.xlu0 %666
      %v668 = vsel %vm346, %v325, 0.0
      %669 = vadd.xlane.f32.xlu0 %v668
      %v670 = vpop.xlane.xlu0 %669
      %v671 = vsel %vm346, %v326, 0.0
      %672 = vadd.xlane.f32.xlu0 %v671
      %v673 = vpop.xlane.xlu0 %672
      %v674 = vsel %vm346, %v327, 0.0
      %675 = vadd.xlane.f32.xlu0 %v674
      %v676 = vpop.xlane.xlu0 %675
      %v677 = vsel %vm346, %v328, 0.0
      %678 = vadd.xlane.f32.xlu0 %v677
      %v679 = vpop.xlane.xlu0 %678
      %v680 = vsel %vm346, %v329, 0.0
      %681 = vadd.xlane.f32.xlu0 %v680
      %v682 = vpop.xlane.xlu0 %681
      %v683 = vsel %vm346, %v330, 0.0
      %684 = vadd.xlane.f32.xlu0 %v683
      %v685 = vpop.xlane.xlu0 %684
      %v686 = vsel %vm346, %v331, 0.0
      %687 = vadd.xlane.f32.xlu0 %v686
      %v688 = vpop.xlane.xlu0 %687
      %v689 = vsel %vm346, %v332, 0.0
      %690 = vadd.xlane.f32.xlu0 %v689
      %v691 = vpop.xlane.xlu0 %690
      %v692 = vsel %vm346, %v333, 0.0
      %693 = vadd.xlane.f32.xlu0 %v692
      %v694 = vpop.xlane.xlu0 %693
      %v695 = vsel %vm346, %v334, 0.0
      %696 = vadd.xlane.f32.xlu0 %v695
      %v697 = vpop.xlane.xlu0 %696
      %v698 = vsel %vm346, %v335, 0.0
      %699 = vadd.xlane.f32.xlu0 %v698
      %v700 = vpop.xlane.xlu0 %699
      %v701 = vsel %vm346, %v336, 0.0
      %702 = vadd.xlane.f32.xlu0 %v701
      %v703 = vpop.xlane.xlu0 %702
      %v704 = vsel %vm346, %v337, 0.0
      %705 = vadd.xlane.f32.xlu0 %v704
      %v706 = vpop.xlane.xlu0 %705
      %v707 = vsel %vm346, %v338, 0.0
      %708 = vadd.xlane.f32.xlu0 %v707
      %v709 = vpop.xlane.xlu0 %708
      %v710 = vsel %vm346, %v339, 0.0
      %711 = vadd.xlane.f32.xlu0 %v710
      %v712 = vpop.xlane.xlu0 %711
      %v713 = vsel %vm346, %v340, 0.0
      %714 = vadd.xlane.f32.xlu0 %v713
      %v715 = vpop.xlane.xlu0 %714
      %v716 = vsel %vm346, %v341, 0.0
      %717 = vadd.xlane.f32.xlu0 %v716
      %v718 = vpop.xlane.xlu0 %717
      %v719 = vsel %vm346, %v342, 0.0
      %720 = vadd.xlane.f32.xlu0 %v719
      %v721 = vpop.xlane.xlu0 %720
      %v722 = vsel %vm346, %v343, 0.0
      %723 = vadd.xlane.f32.xlu0 %v722
      %v724 = vpop.xlane.xlu0 %723
      %v725 = vsel %vm346, %v344, 0.0
      %726 = vadd.xlane.f32.xlu0 %v725
      %v727 = vpop.xlane.xlu0 %726
      %v728 = vsel %vm346, %v345, 0.0
      %729 = vadd.xlane.f32.xlu0 %v728
      %v730 = vpop.xlane.xlu0 %729
      %v731 = vmul.f32 %v349, 0.020408163
      %v732 = vmul.f32 %v352, 0.020408163
      %v733 = vmul.f32 %v355, 0.020408163
      %v734 = vmul.f32 %v358, 0.020408163
      %v735 = vmul.f32 %v361, 0.020408163
      %v736 = vmul.f32 %v364, 0.020408163
      %v737 = vmul.f32 %v367, 0.020408163
      %v738 = vmul.f32 %v370, 0.020408163
      %v739 = vmul.f32 %v373, 0.020408163
      %v740 = vmul.f32 %v376, 0.020408163
      %v741 = vmul.f32 %v379, 0.020408163
      %v742 = vmul.f32 %v382, 0.020408163
      %v743 = vmul.f32 %v385, 0.020408163
      %v744 = vmul.f32 %v388, 0.020408163
      %v745 = vmul.f32 %v391, 0.020408163
      %v746 = vmul.f32 %v394, 0.020408163
      %v747 = vmul.f32 %v397, 0.020408163
      %v748 = vmul.f32 %v400, 0.020408163
      %v749 = vmul.f32 %v403, 0.020408163
      %v750 = vmul.f32 %v406, 0.020408163
      %v751 = vmul.f32 %v409, 0.020408163
      %v752 = vmul.f32 %v412, 0.020408163
      %v753 = vmul.f32 %v415, 0.020408163
      %v754 = vmul.f32 %v418, 0.020408163
      %v755 = vmul.f32 %v421, 0.020408163
      %v756 = vmul.f32 %v424, 0.020408163
      %v757 = vmul.f32 %v427, 0.020408163
      %v758 = vmul.f32 %v430, 0.020408163
      %v759 = vmul.f32 %v433, 0.020408163
      %v760 = vmul.f32 %v436, 0.020408163
      %v761 = vmul.f32 %v439, 0.020408163
      %v762 = vmul.f32 %v442, 0.020408163
      %v763 = vmul.f32 %v445, 0.020408163
      %v764 = vmul.f32 %v448, 0.020408163
      %v765 = vmul.f32 %v451, 0.020408163
      %v766 = vmul.f32 %v454, 0.020408163
      %v767 = vmul.f32 %v457, 0.020408163
      %v768 = vmul.f32 %v460, 0.020408163
      %v769 = vmul.f32 %v463, 0.020408163
      %v770 = vmul.f32 %v466, 0.020408163
      %v771 = vmul.f32 %v469, 0.020408163
      %v772 = vmul.f32 %v472, 0.020408163
      %v773 = vmul.f32 %v475, 0.020408163
      %v774 = vmul.f32 %v478, 0.020408163
      %v775 = vmul.f32 %v481, 0.020408163
      %v776 = vmul.f32 %v484, 0.020408163
      %v777 = vmul.f32 %v487, 0.020408163
      %v778 = vmul.f32 %v490, 0.020408163
      %v779 = vmul.f32 %v493, 0.020408163
      %v780 = vmul.f32 %v496, 0.020408163
      %v781 = vmul.f32 %v499, 0.020408163
      %v782 = vmul.f32 %v502, 0.020408163
      %v783 = vmul.f32 %v505, 0.020408163
      %v784 = vmul.f32 %v508, 0.020408163
      %v785 = vmul.f32 %v511, 0.020408163
      %v786 = vmul.f32 %v514, 0.020408163
      %v787 = vmul.f32 %v517, 0.020408163
      %v788 = vmul.f32 %v520, 0.020408163
      %v789 = vmul.f32 %v523, 0.020408163
      %v790 = vmul.f32 %v526, 0.020408163
      %v791 = vmul.f32 %v529, 0.020408163
      %v792 = vmul.f32 %v532, 0.020408163
      %v793 = vmul.f32 %v535, 0.020408163
      %v794 = vmul.f32 %v538, 0.020408163
      %v795 = vmul.f32 %v541, 0.020408163
      %v796 = vmul.f32 %v544, 0.020408163
      %v797 = vmul.f32 %v547, 0.020408163
      %v798 = vmul.f32 %v550, 0.020408163
      %v799 = vmul.f32 %v553, 0.020408163
      %v800 = vmul.f32 %v556, 0.020408163
      %v801 = vmul.f32 %v559, 0.020408163
      %v802 = vmul.f32 %v562, 0.020408163
      %v803 = vmul.f32 %v565, 0.020408163
      %v804 = vmul.f32 %v568, 0.020408163
      %v805 = vmul.f32 %v571, 0.020408163
      %v806 = vmul.f32 %v574, 0.020408163
      %v807 = vmul.f32 %v577, 0.020408163
      %v808 = vmul.f32 %v580, 0.020408163
      %v809 = vmul.f32 %v583, 0.020408163
      %v810 = vmul.f32 %v586, 0.020408163
      %v811 = vmul.f32 %v589, 0.020408163
      %v812 = vmul.f32 %v592, 0.020408163
      %v813 = vmul.f32 %v595, 0.020408163
      %v814 = vmul.f32 %v598, 0.020408163
      %v815 = vmul.f32 %v601, 0.020408163
      %v816 = vmul.f32 %v604, 0.020408163
      %v817 = vmul.f32 %v607, 0.020408163
      %v818 = vmul.f32 %v610, 0.020408163
      %v819 = vmul.f32 %v613, 0.020408163
      %v820 = vmul.f32 %v616, 0.020408163
      %v821 = vmul.f32 %v619, 0.020408163
      %v822 = vmul.f32 %v622, 0.020408163
      %v823 = vmul.f32 %v625, 0.020408163
      %v824 = vmul.f32 %v628, 0.020408163
      %v825 = vmul.f32 %v631, 0.020408163
      %v826 = vmul.f32 %v634, 0.020408163
      %v827 = vmul.f32 %v637, 0.020408163
      %v828 = vmul.f32 %v640, 0.020408163
      %v829 = vmul.f32 %v643, 0.020408163
      %v830 = vmul.f32 %v646, 0.020408163
      %v831 = vmul.f32 %v649, 0.020408163
      %v832 = vmul.f32 %v652, 0.020408163
      %v833 = vmul.f32 %v655, 0.020408163
      %v834 = vmul.f32 %v658, 0.020408163
      %v835 = vmul.f32 %v661, 0.020408163
      %v836 = vmul.f32 %v664, 0.020408163
      %v837 = vmul.f32 %v667, 0.020408163
      %v838 = vmul.f32 %v670, 0.020408163
      %v839 = vmul.f32 %v673, 0.020408163
      %v840 = vmul.f32 %v676, 0.020408163
      %v841 = vmul.f32 %v679, 0.020408163
      %v842 = vmul.f32 %v682, 0.020408163
      %v843 = vmul.f32 %v685, 0.020408163
      %v844 = vmul.f32 %v688, 0.020408163
      %v845 = vmul.f32 %v691, 0.020408163
      %v846 = vmul.f32 %v694, 0.020408163
      %v847 = vmul.f32 %v697, 0.020408163
      %v848 = vmul.f32 %v700, 0.020408163
      %v849 = vmul.f32 %v703, 0.020408163
      %v850 = vmul.f32 %v706, 0.020408163
      %v851 = vmul.f32 %v709, 0.020408163
      %v852 = vmul.f32 %v712, 0.020408163
      %v853 = vmul.f32 %v715, 0.020408163
      %v854 = vmul.f32 %v718, 0.020408163
      %v855 = vmul.f32 %v721, 0.020408163
      %v856 = vmul.f32 %v724, 0.020408163
      %v857 = vmul.f32 %v727, 0.020408163
      %v858 = vmul.f32 %v730, 0.020408163
      %v859 = vsub.f32 %v218, %v731
      %v860 = vsub.f32 %v219, %v732
      %v861 = vsub.f32 %v220, %v733
      %v862 = vsub.f32 %v221, %v734
      %v863 = vsub.f32 %v222, %v735
      %v864 = vsub.f32 %v223, %v736
      %v865 = vsub.f32 %v224, %v737
      %v866 = vsub.f32 %v225, %v738
      %v867 = vsub.f32 %v226, %v739
      %v868 = vsub.f32 %v227, %v740
      %v869 = vsub.f32 %v228, %v741
      %v870 = vsub.f32 %v229, %v742
      %v871 = vsub.f32 %v230, %v743
      %v872 = vsub.f32 %v231, %v744
      %v873 = vsub.f32 %v232, %v745
      %v874 = vsub.f32 %v233, %v746
      %v875 = vsub.f32 %v234, %v747
      %v876 = vsub.f32 %v235, %v748
      %v877 = vsub.f32 %v236, %v749
      %v878 = vsub.f32 %v237, %v750
      %v879 = vsub.f32 %v238, %v751
      %v880 = vsub.f32 %v239, %v752
      %v881 = vsub.f32 %v240, %v753
      %v882 = vsub.f32 %v241, %v754
      %v883 = vsub.f32 %v242, %v755
      %v884 = vsub.f32 %v243, %v756
      %v885 = vsub.f32 %v244, %v757
      %v886 = vsub.f32 %v245, %v758
      %v887 = vsub.f32 %v246, %v759
      %v888 = vsub.f32 %v247, %v760
      %v889 = vsub.f32 %v248, %v761
      %v890 = vsub.f32 %v249, %v762
      %v891 = vsub.f32 %v250, %v763
      %v892 = vsub.f32 %v251, %v764
      %v893 = vsub.f32 %v252, %v765
      %v894 = vsub.f32 %v253, %v766
      %v895 = vsub.f32 %v254, %v767
      %v896 = vsub.f32 %v255, %v768
      %v897 = vsub.f32 %v256, %v769
      %v898 = vsub.f32 %v257, %v770
      %v899 = vsub.f32 %v258, %v771
      %v900 = vsub.f32 %v259, %v772
      %v901 = vsub.f32 %v260, %v773
      %v902 = vsub.f32 %v261, %v774
      %v903 = vsub.f32 %v262, %v775
      %v904 = vsub.f32 %v263, %v776
      %v905 = vsub.f32 %v264, %v777
      %v906 = vsub.f32 %v265, %v778
      %v907 = vsub.f32 %v266, %v779
      %v908 = vsub.f32 %v267, %v780
      %v909 = vsub.f32 %v268, %v781
      %v910 = vsub.f32 %v269, %v782
      %v911 = vsub.f32 %v270, %v783
      %v912 = vsub.f32 %v271, %v784
      %v913 = vsub.f32 %v272, %v785
      %v914 = vsub.f32 %v273, %v786
      %v915 = vsub.f32 %v274, %v787
      %v916 = vsub.f32 %v275, %v788
      %v917 = vsub.f32 %v276, %v789
      %v918 = vsub.f32 %v277, %v790
      %v919 = vsub.f32 %v278, %v791
      %v920 = vsub.f32 %v279, %v792
      %v921 = vsub.f32 %v280, %v793
      %v922 = vsub.f32 %v281, %v794
      %v923 = vsub.f32 %v282, %v795
      %v924 = vsub.f32 %v283, %v796
      %v925 = vsub.f32 %v284, %v797
      %v926 = vsub.f32 %v285, %v798
      %v927 = vsub.f32 %v286, %v799
      %v928 = vsub.f32 %v287, %v800
      %v929 = vsub.f32 %v288, %v801
      %v930 = vsub.f32 %v289, %v802
      %v931 = vsub.f32 %v290, %v803
      %v932 = vsub.f32 %v291, %v804
      %v933 = vsub.f32 %v292, %v805
      %v934 = vsub.f32 %v293, %v806
      %v935 = vsub.f32 %v294, %v807
      %v936 = vsub.f32 %v295, %v808
      %v937 = vsub.f32 %v296, %v809
      %v938 = vsub.f32 %v297, %v810
      %v939 = vsub.f32 %v298, %v811
      %v940 = vsub.f32 %v299, %v812
      %v941 = vsub.f32 %v300, %v813
      %v942 = vsub.f32 %v301, %v814
      %v943 = vsub.f32 %v302, %v815
      %v944 = vsub.f32 %v303, %v816
      %v945 = vsub.f32 %v304, %v817
      %v946 = vsub.f32 %v305, %v818
      %v947 = vsub.f32 %v306, %v819
      %v948 = vsub.f32 %v307, %v820
      %v949 = vsub.f32 %v308, %v821
      %v950 = vsub.f32 %v309, %v822
      %v951 = vsub.f32 %v310, %v823
      %v952 = vsub.f32 %v311, %v824
      %v953 = vsub.f32 %v312, %v825
      %v954 = vsub.f32 %v313, %v826
      %v955 = vsub.f32 %v314, %v827
      %v956 = vsub.f32 %v315, %v828
      %v957 = vsub.f32 %v316, %v829
      %v958 = vsub.f32 %v317, %v830
      %v959 = vsub.f32 %v318, %v831
      %v960 = vsub.f32 %v319, %v832
      %v961 = vsub.f32 %v320, %v833
      %v962 = vsub.f32 %v321, %v834
      %v963 = vsub.f32 %v322, %v835
      %v964 = vsub.f32 %v323, %v836
      %v965 = vsub.f32 %v324, %v837
      %v966 = vsub.f32 %v325, %v838
      %v967 = vsub.f32 %v326, %v839
      %v968 = vsub.f32 %v327, %v840
      %v969 = vsub.f32 %v328, %v841
      %v970 = vsub.f32 %v329, %v842
      %v971 = vsub.f32 %v330, %v843
      %v972 = vsub.f32 %v331, %v844
      %v973 = vsub.f32 %v332, %v845
      %v974 = vsub.f32 %v333, %v846
      %v975 = vsub.f32 %v334, %v847
      %v976 = vsub.f32 %v335, %v848
      %v977 = vsub.f32 %v336, %v849
      %v978 = vsub.f32 %v337, %v850
      %v979 = vsub.f32 %v338, %v851
      %v980 = vsub.f32 %v339, %v852
      %v981 = vsub.f32 %v340, %v853
      %v982 = vsub.f32 %v341, %v854
      %v983 = vsub.f32 %v342, %v855
      %v984 = vsub.f32 %v343, %v856
      %v985 = vsub.f32 %v344, %v857
      %v986 = vsub.f32 %v345, %v858
      %v987 = vmul.f32 %v859, %v859
      %v988 = vmul.f32 %v860, %v860
      %v989 = vmul.f32 %v861, %v861
      %v990 = vmul.f32 %v862, %v862
      %v991 = vmul.f32 %v863, %v863
      %v992 = vmul.f32 %v864, %v864
      %v993 = vmul.f32 %v865, %v865
      %v994 = vmul.f32 %v866, %v866
      %v995 = vmul.f32 %v867, %v867
      %v996 = vmul.f32 %v868, %v868
      %v997 = vmul.f32 %v869, %v869
      %v998 = vmul.f32 %v870, %v870
      %v999 = vmul.f32 %v871, %v871
      %v1000 = vmul.f32 %v872, %v872
      %v1001 = vmul.f32 %v873, %v873
      %v1002 = vmul.f32 %v874, %v874
      %v1003 = vmul.f32 %v875, %v875
      %v1004 = vmul.f32 %v876, %v876
      %v1005 = vmul.f32 %v877, %v877
      %v1006 = vmul.f32 %v878, %v878
      %v1007 = vmul.f32 %v879, %v879
      %v1008 = vmul.f32 %v880, %v880
      %v1009 = vmul.f32 %v881, %v881
      %v1010 = vmul.f32 %v882, %v882
      %v1011 = vmul.f32 %v883, %v883
      %v1012 = vmul.f32 %v884, %v884
      %v1013 = vmul.f32 %v885, %v885
      %v1014 = vmul.f32 %v886, %v886
      %v1015 = vmul.f32 %v887, %v887
      %v1016 = vmul.f32 %v888, %v888
      %v1017 = vmul.f32 %v889, %v889
      %v1018 = vmul.f32 %v890, %v890
      %v1019 = vmul.f32 %v891, %v891
      %v1020 = vmul.f32 %v892, %v892
      %v1021 = vmul.f32 %v893, %v893
      %v1022 = vmul.f32 %v894, %v894
      %v1023 = vmul.f32 %v895, %v895
      %v1024 = vmul.f32 %v896, %v896
      %v1025 = vmul.f32 %v897, %v897
      %v1026 = vmul.f32 %v898, %v898
      %v1027 = vmul.f32 %v899, %v899
      %v1028 = vmul.f32 %v900, %v900
      %v1029 = vmul.f32 %v901, %v901
      %v1030 = vmul.f32 %v902, %v902
      %v1031 = vmul.f32 %v903, %v903
      %v1032 = vmul.f32 %v904, %v904
      %v1033 = vmul.f32 %v905, %v905
      %v1034 = vmul.f32 %v906, %v906
      %v1035 = vmul.f32 %v907, %v907
      %v1036 = vmul.f32 %v908, %v908
      %v1037 = vmul.f32 %v909, %v909
      %v1038 = vmul.f32 %v910, %v910
      %v1039 = vmul.f32 %v911, %v911
      %v1040 = vmul.f32 %v912, %v912
      %v1041 = vmul.f32 %v913, %v913
      %v1042 = vmul.f32 %v914, %v914
      %v1043 = vmul.f32 %v915, %v915
      %v1044 = vmul.f32 %v916, %v916
      %v1045 = vmul.f32 %v917, %v917
      %v1046 = vmul.f32 %v918, %v918
      %v1047 = vmul.f32 %v919, %v919
      %v1048 = vmul.f32 %v920, %v920
      %v1049 = vmul.f32 %v921, %v921
      %v1050 = vmul.f32 %v922, %v922
      %v1051 = vmul.f32 %v923, %v923
      %v1052 = vmul.f32 %v924, %v924
      %v1053 = vmul.f32 %v925, %v925
      %v1054 = vmul.f32 %v926, %v926
      %v1055 = vmul.f32 %v927, %v927
      %v1056 = vmul.f32 %v928, %v928
      %v1057 = vmul.f32 %v929, %v929
      %v1058 = vmul.f32 %v930, %v930
      %v1059 = vmul.f32 %v931, %v931
      %v1060 = vmul.f32 %v932, %v932
      %v1061 = vmul.f32 %v933, %v933
      %v1062 = vmul.f32 %v934, %v934
      %v1063 = vmul.f32 %v935, %v935
      %v1064 = vmul.f32 %v936, %v936
      %v1065 = vmul.f32 %v937, %v937
      %v1066 = vmul.f32 %v938, %v938
      %v1067 = vmul.f32 %v939, %v939
      %v1068 = vmul.f32 %v940, %v940
      %v1069 = vmul.f32 %v941, %v941
      %v1070 = vmul.f32 %v942, %v942
      %v1071 = vmul.f32 %v943, %v943
      %v1072 = vmul.f32 %v944, %v944
      %v1073 = vmul.f32 %v945, %v945
      %v1074 = vmul.f32 %v946, %v946
      %v1075 = vmul.f32 %v947, %v947
      %v1076 = vmul.f32 %v948, %v948
      %v1077 = vmul.f32 %v949, %v949
      %v1078 = vmul.f32 %v950, %v950
      %v1079 = vmul.f32 %v951, %v951
      %v1080 = vmul.f32 %v952, %v952
      %v1081 = vmul.f32 %v953, %v953
      %v1082 = vmul.f32 %v954, %v954
      %v1083 = vmul.f32 %v955, %v955
      %v1084 = vmul.f32 %v956, %v956
      %v1085 = vmul.f32 %v957, %v957
      %v1086 = vmul.f32 %v958, %v958
      %v1087 = vmul.f32 %v959, %v959
      %v1088 = vmul.f32 %v960, %v960
      %v1089 = vmul.f32 %v961, %v961
      %v1090 = vmul.f32 %v962, %v962
      %v1091 = vmul.f32 %v963, %v963
      %v1092 = vmul.f32 %v964, %v964
      %v1093 = vmul.f32 %v965, %v965
      %v1094 = vmul.f32 %v966, %v966
      %v1095 = vmul.f32 %v967, %v967
      %v1096 = vmul.f32 %v968, %v968
      %v1097 = vmul.f32 %v969, %v969
      %v1098 = vmul.f32 %v970, %v970
      %v1099 = vmul.f32 %v971, %v971
      %v1100 = vmul.f32 %v972, %v972
      %v1101 = vmul.f32 %v973, %v973
      %v1102 = vmul.f32 %v974, %v974
      %v1103 = vmul.f32 %v975, %v975
      %v1104 = vmul.f32 %v976, %v976
      %v1105 = vmul.f32 %v977, %v977
      %v1106 = vmul.f32 %v978, %v978
      %v1107 = vmul.f32 %v979, %v979
      %v1108 = vmul.f32 %v980, %v980
      %v1109 = vmul.f32 %v981, %v981
      %v1110 = vmul.f32 %v982, %v982
      %v1111 = vmul.f32 %v983, %v983
      %v1112 = vmul.f32 %v984, %v984
      %v1113 = vmul.f32 %v985, %v985
      %v1114 = vmul.f32 %v986, %v986
      %v1115 = vsel %vm346, %v987, 0.0
      %1116 = vadd.xlane.f32.xlu0 %v1115
      %v1117 = vpop.xlane.xlu0 %1116
      %v1118 = vsel %vm346, %v988, 0.0
      %1119 = vadd.xlane.f32.xlu0 %v1118
      %v1120 = vpop.xlane.xlu0 %1119
      %v1121 = vsel %vm346, %v989, 0.0
      %1122 = vadd.xlane.f32.xlu0 %v1121
      %v1123 = vpop.xlane.xlu0 %1122
      %v1124 = vsel %vm346, %v990, 0.0
      %1125 = vadd.xlane.f32.xlu0 %v1124
      %v1126 = vpop.xlane.xlu0 %1125
      %v1127 = vsel %vm346, %v991, 0.0
      %1128 = vadd.xlane.f32.xlu0 %v1127
      %v1129 = vpop.xlane.xlu0 %1128
      %v1130 = vsel %vm346, %v992, 0.0
      %1131 = vadd.xlane.f32.xlu0 %v1130
      %v1132 = vpop.xlane.xlu0 %1131
      %v1133 = vsel %vm346, %v993, 0.0
      %1134 = vadd.xlane.f32.xlu0 %v1133
      %v1135 = vpop.xlane.xlu0 %1134
      %v1136 = vsel %vm346, %v994, 0.0
      %1137 = vadd.xlane.f32.xlu0 %v1136
      %v1138 = vpop.xlane.xlu0 %1137
      %v1139 = vsel %vm346, %v995, 0.0
      %1140 = vadd.xlane.f32.xlu0 %v1139
      %v1141 = vpop.xlane.xlu0 %1140
      %v1142 = vsel %vm346, %v996, 0.0
      %1143 = vadd.xlane.f32.xlu0 %v1142
      %v1144 = vpop.xlane.xlu0 %1143
      %v1145 = vsel %vm346, %v997, 0.0
      %1146 = vadd.xlane.f32.xlu0 %v1145
      %v1147 = vpop.xlane.xlu0 %1146
      %v1148 = vsel %vm346, %v998, 0.0
      %1149 = vadd.xlane.f32.xlu0 %v1148
      %v1150 = vpop.xlane.xlu0 %1149
      %v1151 = vsel %vm346, %v999, 0.0
      %1152 = vadd.xlane.f32.xlu0 %v1151
      %v1153 = vpop.xlane.xlu0 %1152
      %v1154 = vsel %vm346, %v1000, 0.0
      %1155 = vadd.xlane.f32.xlu0 %v1154
      %v1156 = vpop.xlane.xlu0 %1155
      %v1157 = vsel %vm346, %v1001, 0.0
      %1158 = vadd.xlane.f32.xlu0 %v1157
      %v1159 = vpop.xlane.xlu0 %1158
      %v1160 = vsel %vm346, %v1002, 0.0
      %1161 = vadd.xlane.f32.xlu0 %v1160
      %v1162 = vpop.xlane.xlu0 %1161
      %v1163 = vsel %vm346, %v1003, 0.0
      %1164 = vadd.xlane.f32.xlu0 %v1163
      %v1165 = vpop.xlane.xlu0 %1164
      %v1166 = vsel %vm346, %v1004, 0.0
      %1167 = vadd.xlane.f32.xlu0 %v1166
      %v1168 = vpop.xlane.xlu0 %1167
      %v1169 = vsel %vm346, %v1005, 0.0
      %1170 = vadd.xlane.f32.xlu0 %v1169
      %v1171 = vpop.xlane.xlu0 %1170
      %v1172 = vsel %vm346, %v1006, 0.0
      %1173 = vadd.xlane.f32.xlu0 %v1172
      %v1174 = vpop.xlane.xlu0 %1173
      %v1175 = vsel %vm346, %v1007, 0.0
      %1176 = vadd.xlane.f32.xlu0 %v1175
      %v1177 = vpop.xlane.xlu0 %1176
      %v1178 = vsel %vm346, %v1008, 0.0
      %1179 = vadd.xlane.f32.xlu0 %v1178
      %v1180 = vpop.xlane.xlu0 %1179
      %v1181 = vsel %vm346, %v1009, 0.0
      %1182 = vadd.xlane.f32.xlu0 %v1181
      %v1183 = vpop.xlane.xlu0 %1182
      %v1184 = vsel %vm346, %v1010, 0.0
      %1185 = vadd.xlane.f32.xlu0 %v1184
      %v1186 = vpop.xlane.xlu0 %1185
      %v1187 = vsel %vm346, %v1011, 0.0
      %1188 = vadd.xlane.f32.xlu0 %v1187
      %v1189 = vpop.xlane.xlu0 %1188
      %v1190 = vsel %vm346, %v1012, 0.0
      %1191 = vadd.xlane.f32.xlu0 %v1190
      %v1192 = vpop.xlane.xlu0 %1191
      %v1193 = vsel %vm346, %v1013, 0.0
      %1194 = vadd.xlane.f32.xlu0 %v1193
      %v1195 = vpop.xlane.xlu0 %1194
      %v1196 = vsel %vm346, %v1014, 0.0
      %1197 = vadd.xlane.f32.xlu0 %v1196
      %v1198 = vpop.xlane.xlu0 %1197
      %v1199 = vsel %vm346, %v1015, 0.0
      %1200 = vadd.xlane.f32.xlu0 %v1199
      %v1201 = vpop.xlane.xlu0 %1200
      %v1202 = vsel %vm346, %v1016, 0.0
      %1203 = vadd.xlane.f32.xlu0 %v1202
      %v1204 = vpop.xlane.xlu0 %1203
      %v1205 = vsel %vm346, %v1017, 0.0
      %1206 = vadd.xlane.f32.xlu0 %v1205
      %v1207 = vpop.xlane.xlu0 %1206
      %v1208 = vsel %vm346, %v1018, 0.0
      %1209 = vadd.xlane.f32.xlu0 %v1208
      %v1210 = vpop.xlane.xlu0 %1209
      %v1211 = vsel %vm346, %v1019, 0.0
      %1212 = vadd.xlane.f32.xlu0 %v1211
      %v1213 = vpop.xlane.xlu0 %1212
      %v1214 = vsel %vm346, %v1020, 0.0
      %1215 = vadd.xlane.f32.xlu0 %v1214
      %v1216 = vpop.xlane.xlu0 %1215
      %v1217 = vsel %vm346, %v1021, 0.0
      %1218 = vadd.xlane.f32.xlu0 %v1217
      %v1219 = vpop.xlane.xlu0 %1218
      %v1220 = vsel %vm346, %v1022, 0.0
      %1221 = vadd.xlane.f32.xlu0 %v1220
      %v1222 = vpop.xlane.xlu0 %1221
      %v1223 = vsel %vm346, %v1023, 0.0
      %1224 = vadd.xlane.f32.xlu0 %v1223
      %v1225 = vpop.xlane.xlu0 %1224
      %v1226 = vsel %vm346, %v1024, 0.0
      %1227 = vadd.xlane.f32.xlu0 %v1226
      %v1228 = vpop.xlane.xlu0 %1227
      %v1229 = vsel %vm346, %v1025, 0.0
      %1230 = vadd.xlane.f32.xlu0 %v1229
      %v1231 = vpop.xlane.xlu0 %1230
      %v1232 = vsel %vm346, %v1026, 0.0
      %1233 = vadd.xlane.f32.xlu0 %v1232
      %v1234 = vpop.xlane.xlu0 %1233
      %v1235 = vsel %vm346, %v1027, 0.0
      %1236 = vadd.xlane.f32.xlu0 %v1235
      %v1237 = vpop.xlane.xlu0 %1236
      %v1238 = vsel %vm346, %v1028, 0.0
      %1239 = vadd.xlane.f32.xlu0 %v1238
      %v1240 = vpop.xlane.xlu0 %1239
      %v1241 = vsel %vm346, %v1029, 0.0
      %1242 = vadd.xlane.f32.xlu0 %v1241
      %v1243 = vpop.xlane.xlu0 %1242
      %v1244 = vsel %vm346, %v1030, 0.0
      %1245 = vadd.xlane.f32.xlu0 %v1244
      %v1246 = vpop.xlane.xlu0 %1245
      %v1247 = vsel %vm346, %v1031, 0.0
      %1248 = vadd.xlane.f32.xlu0 %v1247
      %v1249 = vpop.xlane.xlu0 %1248
      %v1250 = vsel %vm346, %v1032, 0.0
      %1251 = vadd.xlane.f32.xlu0 %v1250
      %v1252 = vpop.xlane.xlu0 %1251
      %v1253 = vsel %vm346, %v1033, 0.0
      %1254 = vadd.xlane.f32.xlu0 %v1253
      %v1255 = vpop.xlane.xlu0 %1254
      %v1256 = vsel %vm346, %v1034, 0.0
      %1257 = vadd.xlane.f32.xlu0 %v1256
      %v1258 = vpop.xlane.xlu0 %1257
      %v1259 = vsel %vm346, %v1035, 0.0
      %1260 = vadd.xlane.f32.xlu0 %v1259
      %v1261 = vpop.xlane.xlu0 %1260
      %v1262 = vsel %vm346, %v1036, 0.0
      %1263 = vadd.xlane.f32.xlu0 %v1262
      %v1264 = vpop.xlane.xlu0 %1263
      %v1265 = vsel %vm346, %v1037, 0.0
      %1266 = vadd.xlane.f32.xlu0 %v1265
      %v1267 = vpop.xlane.xlu0 %1266
      %v1268 = vsel %vm346, %v1038, 0.0
      %1269 = vadd.xlane.f32.xlu0 %v1268
      %v1270 = vpop.xlane.xlu0 %1269
      %v1271 = vsel %vm346, %v1039, 0.0
      %1272 = vadd.xlane.f32.xlu0 %v1271
      %v1273 = vpop.xlane.xlu0 %1272
      %v1274 = vsel %vm346, %v1040, 0.0
      %1275 = vadd.xlane.f32.xlu0 %v1274
      %v1276 = vpop.xlane.xlu0 %1275
      %v1277 = vsel %vm346, %v1041, 0.0
      %1278 = vadd.xlane.f32.xlu0 %v1277
      %v1279 = vpop.xlane.xlu0 %1278
      %v1280 = vsel %vm346, %v1042, 0.0
      %1281 = vadd.xlane.f32.xlu0 %v1280
      %v1282 = vpop.xlane.xlu0 %1281
      %v1283 = vsel %vm346, %v1043, 0.0
      %1284 = vadd.xlane.f32.xlu0 %v1283
      %v1285 = vpop.xlane.xlu0 %1284
      %v1286 = vsel %vm346, %v1044, 0.0
      %1287 = vadd.xlane.f32.xlu0 %v1286
      %v1288 = vpop.xlane.xlu0 %1287
      %v1289 = vsel %vm346, %v1045, 0.0
      %1290 = vadd.xlane.f32.xlu0 %v1289
      %v1291 = vpop.xlane.xlu0 %1290
      %v1292 = vsel %vm346, %v1046, 0.0
      %1293 = vadd.xlane.f32.xlu0 %v1292
      %v1294 = vpop.xlane.xlu0 %1293
      %v1295 = vsel %vm346, %v1047, 0.0
      %1296 = vadd.xlane.f32.xlu0 %v1295
      %v1297 = vpop.xlane.xlu0 %1296
      %v1298 = vsel %vm346, %v1048, 0.0
      %1299 = vadd.xlane.f32.xlu0 %v1298
      %v1300 = vpop.xlane.xlu0 %1299
      %v1301 = vsel %vm346, %v1049, 0.0
      %1302 = vadd.xlane.f32.xlu0 %v1301
      %v1303 = vpop.xlane.xlu0 %1302
      %v1304 = vsel %vm346, %v1050, 0.0
      %1305 = vadd.xlane.f32.xlu0 %v1304
      %v1306 = vpop.xlane.xlu0 %1305
      %v1307 = vsel %vm346, %v1051, 0.0
      %1308 = vadd.xlane.f32.xlu0 %v1307
      %v1309 = vpop.xlane.xlu0 %1308
      %v1310 = vsel %vm346, %v1052, 0.0
      %1311 = vadd.xlane.f32.xlu0 %v1310
      %v1312 = vpop.xlane.xlu0 %1311
      %v1313 = vsel %vm346, %v1053, 0.0
      %1314 = vadd.xlane.f32.xlu0 %v1313
      %v1315 = vpop.xlane.xlu0 %1314
      %v1316 = vsel %vm346, %v1054, 0.0
      %1317 = vadd.xlane.f32.xlu0 %v1316
      %v1318 = vpop.xlane.xlu0 %1317
      %v1319 = vsel %vm346, %v1055, 0.0
      %1320 = vadd.xlane.f32.xlu0 %v1319
      %v1321 = vpop.xlane.xlu0 %1320
      %v1322 = vsel %vm346, %v1056, 0.0
      %1323 = vadd.xlane.f32.xlu0 %v1322
      %v1324 = vpop.xlane.xlu0 %1323
      %v1325 = vsel %vm346, %v1057, 0.0
      %1326 = vadd.xlane.f32.xlu0 %v1325
      %v1327 = vpop.xlane.xlu0 %1326
      %v1328 = vsel %vm346, %v1058, 0.0
      %1329 = vadd.xlane.f32.xlu0 %v1328
      %v1330 = vpop.xlane.xlu0 %1329
      %v1331 = vsel %vm346, %v1059, 0.0
      %1332 = vadd.xlane.f32.xlu0 %v1331
      %v1333 = vpop.xlane.xlu0 %1332
      %v1334 = vsel %vm346, %v1060, 0.0
      %1335 = vadd.xlane.f32.xlu0 %v1334
      %v1336 = vpop.xlane.xlu0 %1335
      %v1337 = vsel %vm346, %v1061, 0.0
      %1338 = vadd.xlane.f32.xlu0 %v1337
      %v1339 = vpop.xlane.xlu0 %1338
      %v1340 = vsel %vm346, %v1062, 0.0
      %1341 = vadd.xlane.f32.xlu0 %v1340
      %v1342 = vpop.xlane.xlu0 %1341
      %v1343 = vsel %vm346, %v1063, 0.0
      %1344 = vadd.xlane.f32.xlu0 %v1343
      %v1345 = vpop.xlane.xlu0 %1344
      %v1346 = vsel %vm346, %v1064, 0.0
      %1347 = vadd.xlane.f32.xlu0 %v1346
      %v1348 = vpop.xlane.xlu0 %1347
      %v1349 = vsel %vm346, %v1065, 0.0
      %1350 = vadd.xlane.f32.xlu0 %v1349
      %v1351 = vpop.xlane.xlu0 %1350
      %v1352 = vsel %vm346, %v1066, 0.0
      %1353 = vadd.xlane.f32.xlu0 %v1352
      %v1354 = vpop.xlane.xlu0 %1353
      %v1355 = vsel %vm346, %v1067, 0.0
      %1356 = vadd.xlane.f32.xlu0 %v1355
      %v1357 = vpop.xlane.xlu0 %1356
      %v1358 = vsel %vm346, %v1068, 0.0
      %1359 = vadd.xlane.f32.xlu0 %v1358
      %v1360 = vpop.xlane.xlu0 %1359
      %v1361 = vsel %vm346, %v1069, 0.0
      %1362 = vadd.xlane.f32.xlu0 %v1361
      %v1363 = vpop.xlane.xlu0 %1362
      %v1364 = vsel %vm346, %v1070, 0.0
      %1365 = vadd.xlane.f32.xlu0 %v1364
      %v1366 = vpop.xlane.xlu0 %1365
      %v1367 = vsel %vm346, %v1071, 0.0
      %1368 = vadd.xlane.f32.xlu0 %v1367
      %v1369 = vpop.xlane.xlu0 %1368
      %v1370 = vsel %vm346, %v1072, 0.0
      %1371 = vadd.xlane.f32.xlu0 %v1370
      %v1372 = vpop.xlane.xlu0 %1371
      %v1373 = vsel %vm346, %v1073, 0.0
      %1374 = vadd.xlane.f32.xlu0 %v1373
      %v1375 = vpop.xlane.xlu0 %1374
      %v1376 = vsel %vm346, %v1074, 0.0
      %1377 = vadd.xlane.f32.xlu0 %v1376
      %v1378 = vpop.xlane.xlu0 %1377
      %v1379 = vsel %vm346, %v1075, 0.0
      %1380 = vadd.xlane.f32.xlu0 %v1379
      %v1381 = vpop.xlane.xlu0 %1380
      %v1382 = vsel %vm346, %v1076, 0.0
      %1383 = vadd.xlane.f32.xlu0 %v1382
      %v1384 = vpop.xlane.xlu0 %1383
      %v1385 = vsel %vm346, %v1077, 0.0
      %1386 = vadd.xlane.f32.xlu0 %v1385
      %v1387 = vpop.xlane.xlu0 %1386
      %v1388 = vsel %vm346, %v1078, 0.0
      %1389 = vadd.xlane.f32.xlu0 %v1388
      %v1390 = vpop.xlane.xlu0 %1389
      %v1391 = vsel %vm346, %v1079, 0.0
      %1392 = vadd.xlane.f32.xlu0 %v1391
      %v1393 = vpop.xlane.xlu0 %1392
      %v1394 = vsel %vm346, %v1080, 0.0
      %1395 = vadd.xlane.f32.xlu0 %v1394
      %v1396 = vpop.xlane.xlu0 %1395
      %v1397 = vsel %vm346, %v1081, 0.0
      %1398 = vadd.xlane.f32.xlu0 %v1397
      %v1399 = vpop.xlane.xlu0 %1398
      %v1400 = vsel %vm346, %v1082, 0.0
      %1401 = vadd.xlane.f32.xlu0 %v1400
      %v1402 = vpop.xlane.xlu0 %1401
      %v1403 = vsel %vm346, %v1083, 0.0
      %1404 = vadd.xlane.f32.xlu0 %v1403
      %v1405 = vpop.xlane.xlu0 %1404
      %v1406 = vsel %vm346, %v1084, 0.0
      %1407 = vadd.xlane.f32.xlu0 %v1406
      %v1408 = vpop.xlane.xlu0 %1407
      %v1409 = vsel %vm346, %v1085, 0.0
      %1410 = vadd.xlane.f32.xlu0 %v1409
      %v1411 = vpop.xlane.xlu0 %1410
      %v1412 = vsel %vm346, %v1086, 0.0
      %1413 = vadd.xlane.f32.xlu0 %v1412
      %v1414 = vpop.xlane.xlu0 %1413
      %v1415 = vsel %vm346, %v1087, 0.0
      %1416 = vadd.xlane.f32.xlu0 %v1415
      %v1417 = vpop.xlane.xlu0 %1416
      %v1418 = vsel %vm346, %v1088, 0.0
      %1419 = vadd.xlane.f32.xlu0 %v1418
      %v1420 = vpop.xlane.xlu0 %1419
      %v1421 = vsel %vm346, %v1089, 0.0
      %1422 = vadd.xlane.f32.xlu0 %v1421
      %v1423 = vpop.xlane.xlu0 %1422
      %v1424 = vsel %vm346, %v1090, 0.0
      %1425 = vadd.xlane.f32.xlu0 %v1424
      %v1426 = vpop.xlane.xlu0 %1425
      %v1427 = vsel %vm346, %v1091, 0.0
      %1428 = vadd.xlane.f32.xlu0 %v1427
      %v1429 = vpop.xlane.xlu0 %1428
      %v1430 = vsel %vm346, %v1092, 0.0
      %1431 = vadd.xlane.f32.xlu0 %v1430
      %v1432 = vpop.xlane.xlu0 %1431
      %v1433 = vsel %vm346, %v1093, 0.0
      %1434 = vadd.xlane.f32.xlu0 %v1433
      %v1435 = vpop.xlane.xlu0 %1434
      %v1436 = vsel %vm346, %v1094, 0.0
      %1437 = vadd.xlane.f32.xlu0 %v1436
      %v1438 = vpop.xlane.xlu0 %1437
      %v1439 = vsel %vm346, %v1095, 0.0
      %1440 = vadd.xlane.f32.xlu0 %v1439
      %v1441 = vpop.xlane.xlu0 %1440
      %v1442 = vsel %vm346, %v1096, 0.0
      %1443 = vadd.xlane.f32.xlu0 %v1442
      %v1444 = vpop.xlane.xlu0 %1443
      %v1445 = vsel %vm346, %v1097, 0.0
      %1446 = vadd.xlane.f32.xlu0 %v1445
      %v1447 = vpop.xlane.xlu0 %1446
      %v1448 = vsel %vm346, %v1098, 0.0
      %1449 = vadd.xlane.f32.xlu0 %v1448
      %v1450 = vpop.xlane.xlu0 %1449
      %v1451 = vsel %vm346, %v1099, 0.0
      %1452 = vadd.xlane.f32.xlu0 %v1451
      %v1453 = vpop.xlane.xlu0 %1452
      %v1454 = vsel %vm346, %v1100, 0.0
      %1455 = vadd.xlane.f32.xlu0 %v1454
      %v1456 = vpop.xlane.xlu0 %1455
      %v1457 = vsel %vm346, %v1101, 0.0
      %1458 = vadd.xlane.f32.xlu0 %v1457
      %v1459 = vpop.xlane.xlu0 %1458
      %v1460 = vsel %vm346, %v1102, 0.0
      %1461 = vadd.xlane.f32.xlu0 %v1460
      %v1462 = vpop.xlane.xlu0 %1461
      %v1463 = vsel %vm346, %v1103, 0.0
      %1464 = vadd.xlane.f32.xlu0 %v1463
      %v1465 = vpop.xlane.xlu0 %1464
      %v1466 = vsel %vm346, %v1104, 0.0
      %1467 = vadd.xlane.f32.xlu0 %v1466
      %v1468 = vpop.xlane.xlu0 %1467
      %v1469 = vsel %vm346, %v1105, 0.0
      %1470 = vadd.xlane.f32.xlu0 %v1469
      %v1471 = vpop.xlane.xlu0 %1470
      %v1472 = vsel %vm346, %v1106, 0.0
      %1473 = vadd.xlane.f32.xlu0 %v1472
      %v1474 = vpop.xlane.xlu0 %1473
      %v1475 = vsel %vm346, %v1107, 0.0
      %1476 = vadd.xlane.f32.xlu0 %v1475
      %v1477 = vpop.xlane.xlu0 %1476
      %v1478 = vsel %vm346, %v1108, 0.0
      %1479 = vadd.xlane.f32.xlu0 %v1478
      %v1480 = vpop.xlane.xlu0 %1479
      %v1481 = vsel %vm346, %v1109, 0.0
      %1482 = vadd.xlane.f32.xlu0 %v1481
      %v1483 = vpop.xlane.xlu0 %1482
      %v1484 = vsel %vm346, %v1110, 0.0
      %1485 = vadd.xlane.f32.xlu0 %v1484
      %v1486 = vpop.xlane.xlu0 %1485
      %v1487 = vsel %vm346, %v1111, 0.0
      %1488 = vadd.xlane.f32.xlu0 %v1487
      %v1489 = vpop.xlane.xlu0 %1488
      %v1490 = vsel %vm346, %v1112, 0.0
      %1491 = vadd.xlane.f32.xlu0 %v1490
      %v1492 = vpop.xlane.xlu0 %1491
      %v1493 = vsel %vm346, %v1113, 0.0
      %1494 = vadd.xlane.f32.xlu0 %v1493
      %v1495 = vpop.xlane.xlu0 %1494
      %v1496 = vsel %vm346, %v1114, 0.0
      %1497 = vadd.xlane.f32.xlu0 %v1496
      %v1498 = vpop.xlane.xlu0 %1497
      %v1499 = vmul.f32 %v1117, 0.020408163
      %v1500 = vmul.f32 %v1120, 0.020408163
      %v1501 = vmul.f32 %v1123, 0.020408163
      %v1502 = vmul.f32 %v1126, 0.020408163
      %v1503 = vmul.f32 %v1129, 0.020408163
      %v1504 = vmul.f32 %v1132, 0.020408163
      %v1505 = vmul.f32 %v1135, 0.020408163
      %v1506 = vmul.f32 %v1138, 0.020408163
      %v1507 = vmul.f32 %v1141, 0.020408163
      %v1508 = vmul.f32 %v1144, 0.020408163
      %v1509 = vmul.f32 %v1147, 0.020408163
      %v1510 = vmul.f32 %v1150, 0.020408163
      %v1511 = vmul.f32 %v1153, 0.020408163
      %v1512 = vmul.f32 %v1156, 0.020408163
      %v1513 = vmul.f32 %v1159, 0.020408163
      %v1514 = vmul.f32 %v1162, 0.020408163
      %v1515 = vmul.f32 %v1165, 0.020408163
      %v1516 = vmul.f32 %v1168, 0.020408163
      %v1517 = vmul.f32 %v1171, 0.020408163
      %v1518 = vmul.f32 %v1174, 0.020408163
      %v1519 = vmul.f32 %v1177, 0.020408163
      %v1520 = vmul.f32 %v1180, 0.020408163
      %v1521 = vmul.f32 %v1183, 0.020408163
      %v1522 = vmul.f32 %v1186, 0.020408163
      %v1523 = vmul.f32 %v1189, 0.020408163
      %v1524 = vmul.f32 %v1192, 0.020408163
      %v1525 = vmul.f32 %v1195, 0.020408163
      %v1526 = vmul.f32 %v1198, 0.020408163
      %v1527 = vmul.f32 %v1201, 0.020408163
      %v1528 = vmul.f32 %v1204, 0.020408163
      %v1529 = vmul.f32 %v1207, 0.020408163
      %v1530 = vmul.f32 %v1210, 0.020408163
      %v1531 = vmul.f32 %v1213, 0.020408163
      %v1532 = vmul.f32 %v1216, 0.020408163
      %v1533 = vmul.f32 %v1219, 0.020408163
      %v1534 = vmul.f32 %v1222, 0.020408163
      %v1535 = vmul.f32 %v1225, 0.020408163
      %v1536 = vmul.f32 %v1228, 0.020408163
      %v1537 = vmul.f32 %v1231, 0.020408163
      %v1538 = vmul.f32 %v1234, 0.020408163
      %v1539 = vmul.f32 %v1237, 0.020408163
      %v1540 = vmul.f32 %v1240, 0.020408163
      %v1541 = vmul.f32 %v1243, 0.020408163
      %v1542 = vmul.f32 %v1246, 0.020408163
      %v1543 = vmul.f32 %v1249, 0.020408163
      %v1544 = vmul.f32 %v1252, 0.020408163
      %v1545 = vmul.f32 %v1255, 0.020408163
      %v1546 = vmul.f32 %v1258, 0.020408163
      %v1547 = vmul.f32 %v1261, 0.020408163
      %v1548 = vmul.f32 %v1264, 0.020408163
      %v1549 = vmul.f32 %v1267, 0.020408163
      %v1550 = vmul.f32 %v1270, 0.020408163
      %v1551 = vmul.f32 %v1273, 0.020408163
      %v1552 = vmul.f32 %v1276, 0.020408163
      %v1553 = vmul.f32 %v1279, 0.020408163
      %v1554 = vmul.f32 %v1282, 0.020408163
      %v1555 = vmul.f32 %v1285, 0.020408163
      %v1556 = vmul.f32 %v1288, 0.020408163
      %v1557 = vmul.f32 %v1291, 0.020408163
      %v1558 = vmul.f32 %v1294, 0.020408163
      %v1559 = vmul.f32 %v1297, 0.020408163
      %v1560 = vmul.f32 %v1300, 0.020408163
      %v1561 = vmul.f32 %v1303, 0.020408163
      %v1562 = vmul.f32 %v1306, 0.020408163
      %v1563 = vmul.f32 %v1309, 0.020408163
      %v1564 = vmul.f32 %v1312, 0.020408163
      %v1565 = vmul.f32 %v1315, 0.020408163
      %v1566 = vmul.f32 %v1318, 0.020408163
      %v1567 = vmul.f32 %v1321, 0.020408163
      %v1568 = vmul.f32 %v1324, 0.020408163
      %v1569 = vmul.f32 %v1327, 0.020408163
      %v1570 = vmul.f32 %v1330, 0.020408163
      %v1571 = vmul.f32 %v1333, 0.020408163
      %v1572 = vmul.f32 %v1336, 0.020408163
      %v1573 = vmul.f32 %v1339, 0.020408163
      %v1574 = vmul.f32 %v1342, 0.020408163
      %v1575 = vmul.f32 %v1345, 0.020408163
      %v1576 = vmul.f32 %v1348, 0.020408163
      %v1577 = vmul.f32 %v1351, 0.020408163
      %v1578 = vmul.f32 %v1354, 0.020408163
      %v1579 = vmul.f32 %v1357, 0.020408163
      %v1580 = vmul.f32 %v1360, 0.020408163
      %v1581 = vmul.f32 %v1363, 0.020408163
      %v1582 = vmul.f32 %v1366, 0.020408163
      %v1583 = vmul.f32 %v1369, 0.020408163
      %v1584 = vmul.f32 %v1372, 0.020408163
      %v1585 = vmul.f32 %v1375, 0.020408163
      %v1586 = vmul.f32 %v1378, 0.020408163
      %v1587 = vmul.f32 %v1381, 0.020408163
      %v1588 = vmul.f32 %v1384, 0.020408163
      %v1589 = vmul.f32 %v1387, 0.020408163
      %v1590 = vmul.f32 %v1390, 0.020408163
      %v1591 = vmul.f32 %v1393, 0.020408163
      %v1592 = vmul.f32 %v1396, 0.020408163
      %v1593 = vmul.f32 %v1399, 0.020408163
      %v1594 = vmul.f32 %v1402, 0.020408163
      %v1595 = vmul.f32 %v1405, 0.020408163
      %v1596 = vmul.f32 %v1408, 0.020408163
      %v1597 = vmul.f32 %v1411, 0.020408163
      %v1598 = vmul.f32 %v1414, 0.020408163
      %v1599 = vmul.f32 %v1417, 0.020408163
      %v1600 = vmul.f32 %v1420, 0.020408163
      %v1601 = vmul.f32 %v1423, 0.020408163
      %v1602 = vmul.f32 %v1426, 0.020408163
      %v1603 = vmul.f32 %v1429, 0.020408163
      %v1604 = vmul.f32 %v1432, 0.020408163
      %v1605 = vmul.f32 %v1435, 0.020408163
      %v1606 = vmul.f32 %v1438, 0.020408163
      %v1607 = vmul.f32 %v1441, 0.020408163
      %v1608 = vmul.f32 %v1444, 0.020408163
      %v1609 = vmul.f32 %v1447, 0.020408163
      %v1610 = vmul.f32 %v1450, 0.020408163
      %v1611 = vmul.f32 %v1453, 0.020408163
      %v1612 = vmul.f32 %v1456, 0.020408163
      %v1613 = vmul.f32 %v1459, 0.020408163
      %v1614 = vmul.f32 %v1462, 0.020408163
      %v1615 = vmul.f32 %v1465, 0.020408163
      %v1616 = vmul.f32 %v1468, 0.020408163
      %v1617 = vmul.f32 %v1471, 0.020408163
      %v1618 = vmul.f32 %v1474, 0.020408163
      %v1619 = vmul.f32 %v1477, 0.020408163
      %v1620 = vmul.f32 %v1480, 0.020408163
      %v1621 = vmul.f32 %v1483, 0.020408163
      %v1622 = vmul.f32 %v1486, 0.020408163
      %v1623 = vmul.f32 %v1489, 0.020408163
      %v1624 = vmul.f32 %v1492, 0.020408163
      %v1625 = vmul.f32 %v1495, 0.020408163
      %v1626 = vmul.f32 %v1498, 0.020408163
      %v1627 = vadd.f32 %v1499, 1e-05
      %v1628 = vadd.f32 %v1500, 1e-05
      %v1629 = vadd.f32 %v1501, 1e-05
      %v1630 = vadd.f32 %v1502, 1e-05
      %v1631 = vadd.f32 %v1503, 1e-05
      %v1632 = vadd.f32 %v1504, 1e-05
      %v1633 = vadd.f32 %v1505, 1e-05
      %v1634 = vadd.f32 %v1506, 1e-05
      %v1635 = vadd.f32 %v1507, 1e-05
      %v1636 = vadd.f32 %v1508, 1e-05
      %v1637 = vadd.f32 %v1509, 1e-05
      %v1638 = vadd.f32 %v1510, 1e-05
      %v1639 = vadd.f32 %v1511, 1e-05
      %v1640 = vadd.f32 %v1512, 1e-05
      %v1641 = vadd.f32 %v1513, 1e-05
      %v1642 = vadd.f32 %v1514, 1e-05
      %v1643 = vadd.f32 %v1515, 1e-05
      %v1644 = vadd.f32 %v1516, 1e-05
      %v1645 = vadd.f32 %v1517, 1e-05
      %v1646 = vadd.f32 %v1518, 1e-05
      %v1647 = vadd.f32 %v1519, 1e-05
      %v1648 = vadd.f32 %v1520, 1e-05
      %v1649 = vadd.f32 %v1521, 1e-05
      %v1650 = vadd.f32 %v1522, 1e-05
      %v1651 = vadd.f32 %v1523, 1e-05
      %v1652 = vadd.f32 %v1524, 1e-05
      %v1653 = vadd.f32 %v1525, 1e-05
      %v1654 = vadd.f32 %v1526, 1e-05
      %v1655 = vadd.f32 %v1527, 1e-05
      %v1656 = vadd.f32 %v1528, 1e-05
      %v1657 = vadd.f32 %v1529, 1e-05
      %v1658 = vadd.f32 %v1530, 1e-05
      %v1659 = vadd.f32 %v1531, 1e-05
      %v1660 = vadd.f32 %v1532, 1e-05
      %v1661 = vadd.f32 %v1533, 1e-05
      %v1662 = vadd.f32 %v1534, 1e-05
      %v1663 = vadd.f32 %v1535, 1e-05
      %v1664 = vadd.f32 %v1536, 1e-05
      %v1665 = vadd.f32 %v1537, 1e-05
      %v1666 = vadd.f32 %v1538, 1e-05
      %v1667 = vadd.f32 %v1539, 1e-05
      %v1668 = vadd.f32 %v1540, 1e-05
      %v1669 = vadd.f32 %v1541, 1e-05
      %v1670 = vadd.f32 %v1542, 1e-05
      %v1671 = vadd.f32 %v1543, 1e-05
      %v1672 = vadd.f32 %v1544, 1e-05
      %v1673 = vadd.f32 %v1545, 1e-05
      %v1674 = vadd.f32 %v1546, 1e-05
      %v1675 = vadd.f32 %v1547, 1e-05
      %v1676 = vadd.f32 %v1548, 1e-05
      %v1677 = vadd.f32 %v1549, 1e-05
      %v1678 = vadd.f32 %v1550, 1e-05
      %v1679 = vadd.f32 %v1551, 1e-05
      %v1680 = vadd.f32 %v1552, 1e-05
      %v1681 = vadd.f32 %v1553, 1e-05
      %v1682 = vadd.f32 %v1554, 1e-05
      %v1683 = vadd.f32 %v1555, 1e-05
      %v1684 = vadd.f32 %v1556, 1e-05
      %v1685 = vadd.f32 %v1557, 1e-05
      %v1686 = vadd.f32 %v1558, 1e-05
      %v1687 = vadd.f32 %v1559, 1e-05
      %v1688 = vadd.f32 %v1560, 1e-05
      %v1689 = vadd.f32 %v1561, 1e-05
      %v1690 = vadd.f32 %v1562, 1e-05
      %v1691 = vadd.f32 %v1563, 1e-05
      %v1692 = vadd.f32 %v1564, 1e-05
      %v1693 = vadd.f32 %v1565, 1e-05
      %v1694 = vadd.f32 %v1566, 1e-05
      %v1695 = vadd.f32 %v1567, 1e-05
      %v1696 = vadd.f32 %v1568, 1e-05
      %v1697 = vadd.f32 %v1569, 1e-05
      %v1698 = vadd.f32 %v1570, 1e-05
      %v1699 = vadd.f32 %v1571, 1e-05
      %v1700 = vadd.f32 %v1572, 1e-05
      %v1701 = vadd.f32 %v1573, 1e-05
      %v1702 = vadd.f32 %v1574, 1e-05
      %v1703 = vadd.f32 %v1575, 1e-05
      %v1704 = vadd.f32 %v1576, 1e-05
      %v1705 = vadd.f32 %v1577, 1e-05
      %v1706 = vadd.f32 %v1578, 1e-05
      %v1707 = vadd.f32 %v1579, 1e-05
      %v1708 = vadd.f32 %v1580, 1e-05
      %v1709 = vadd.f32 %v1581, 1e-05
      %v1710 = vadd.f32 %v1582, 1e-05
      %v1711 = vadd.f32 %v1583, 1e-05
      %v1712 = vadd.f32 %v1584, 1e-05
      %v1713 = vadd.f32 %v1585, 1e-05
      %v1714 = vadd.f32 %v1586, 1e-05
      %v1715 = vadd.f32 %v1587, 1e-05
      %v1716 = vadd.f32 %v1588, 1e-05
      %v1717 = vadd.f32 %v1589, 1e-05
      %v1718 = vadd.f32 %v1590, 1e-05
      %v1719 = vadd.f32 %v1591, 1e-05
      %v1720 = vadd.f32 %v1592, 1e-05
      %v1721 = vadd.f32 %v1593, 1e-05
      %v1722 = vadd.f32 %v1594, 1e-05
      %v1723 = vadd.f32 %v1595, 1e-05
      %v1724 = vadd.f32 %v1596, 1e-05
      %v1725 = vadd.f32 %v1597, 1e-05
      %v1726 = vadd.f32 %v1598, 1e-05
      %v1727 = vadd.f32 %v1599, 1e-05
      %v1728 = vadd.f32 %v1600, 1e-05
      %v1729 = vadd.f32 %v1601, 1e-05
      %v1730 = vadd.f32 %v1602, 1e-05
      %v1731 = vadd.f32 %v1603, 1e-05
      %v1732 = vadd.f32 %v1604, 1e-05
      %v1733 = vadd.f32 %v1605, 1e-05
      %v1734 = vadd.f32 %v1606, 1e-05
      %v1735 = vadd.f32 %v1607, 1e-05
      %v1736 = vadd.f32 %v1608, 1e-05
      %v1737 = vadd.f32 %v1609, 1e-05
      %v1738 = vadd.f32 %v1610, 1e-05
      %v1739 = vadd.f32 %v1611, 1e-05
      %v1740 = vadd.f32 %v1612, 1e-05
      %v1741 = vadd.f32 %v1613, 1e-05
      %v1742 = vadd.f32 %v1614, 1e-05
      %v1743 = vadd.f32 %v1615, 1e-05
      %v1744 = vadd.f32 %v1616, 1e-05
      %v1745 = vadd.f32 %v1617, 1e-05
      %v1746 = vadd.f32 %v1618, 1e-05
      %v1747 = vadd.f32 %v1619, 1e-05
      %v1748 = vadd.f32 %v1620, 1e-05
      %v1749 = vadd.f32 %v1621, 1e-05
      %v1750 = vadd.f32 %v1622, 1e-05
      %v1751 = vadd.f32 %v1623, 1e-05
      %v1752 = vadd.f32 %v1624, 1e-05
      %v1753 = vadd.f32 %v1625, 1e-05
      %v1754 = vadd.f32 %v1626, 1e-05
      %v1755 = vrsqrt.pop %v1627
      %v1756 = vrsqrt.pop %v1628
      %v1757 = vrsqrt.pop %v1629
      %v1758 = vrsqrt.pop %v1630
      %v1759 = vrsqrt.pop %v1631
      %v1760 = vrsqrt.pop %v1632
      %v1761 = vrsqrt.pop %v1633
      %v1762 = vrsqrt.pop %v1634
      %v1763 = vrsqrt.pop %v1635
      %v1764 = vrsqrt.pop %v1636
      %v1765 = vrsqrt.pop %v1637
      %v1766 = vrsqrt.pop %v1638
      %v1767 = vrsqrt.pop %v1639
      %v1768 = vrsqrt.pop %v1640
      %v1769 = vrsqrt.pop %v1641
      %v1770 = vrsqrt.pop %v1642
      %v1771 = vrsqrt.pop %v1643
      %v1772 = vrsqrt.pop %v1644
      %v1773 = vrsqrt.pop %v1645
      %v1774 = vrsqrt.pop %v1646
      %v1775 = vrsqrt.pop %v1647
      %v1776 = vrsqrt.pop %v1648
      %v1777 = vrsqrt.pop %v1649
      %v1778 = vrsqrt.pop %v1650
      %v1779 = vrsqrt.pop %v1651
      %v1780 = vrsqrt.pop %v1652
      %v1781 = vrsqrt.pop %v1653
      %v1782 = vrsqrt.pop %v1654
      %v1783 = vrsqrt.pop %v1655
      %v1784 = vrsqrt.pop %v1656
      %v1785 = vrsqrt.pop %v1657
      %v1786 = vrsqrt.pop %v1658
      %v1787 = vrsqrt.pop %v1659
      %v1788 = vrsqrt.pop %v1660
      %v1789 = vrsqrt.pop %v1661
      %v1790 = vrsqrt.pop %v1662
      %v1791 = vrsqrt.pop %v1663
      %v1792 = vrsqrt.pop %v1664
      %v1793 = vrsqrt.pop %v1665
      %v1794 = vrsqrt.pop %v1666
      %v1795 = vrsqrt.pop %v1667
      %v1796 = vrsqrt.pop %v1668
      %v1797 = vrsqrt.pop %v1669
      %v1798 = vrsqrt.pop %v1670
      %v1799 = vrsqrt.pop %v1671
      %v1800 = vrsqrt.pop %v1672
      %v1801 = vrsqrt.pop %v1673
      %v1802 = vrsqrt.pop %v1674
      %v1803 = vrsqrt.pop %v1675
      %v1804 = vrsqrt.pop %v1676
      %v1805 = vrsqrt.pop %v1677
      %v1806 = vrsqrt.pop %v1678
      %v1807 = vrsqrt.pop %v1679
      %v1808 = vrsqrt.pop %v1680
      %v1809 = vrsqrt.pop %v1681
      %v1810 = vrsqrt.pop %v1682
      %v1811 = vrsqrt.pop %v1683
      %v1812 = vrsqrt.pop %v1684
      %v1813 = vrsqrt.pop %v1685
      %v1814 = vrsqrt.pop %v1686
      %v1815 = vrsqrt.pop %v1687
      %v1816 = vrsqrt.pop %v1688
      %v1817 = vrsqrt.pop %v1689
      %v1818 = vrsqrt.pop %v1690
      %v1819 = vrsqrt.pop %v1691
      %v1820 = vrsqrt.pop %v1692
      %v1821 = vrsqrt.pop %v1693
      %v1822 = vrsqrt.pop %v1694
      %v1823 = vrsqrt.pop %v1695
      %v1824 = vrsqrt.pop %v1696
      %v1825 = vrsqrt.pop %v1697
      %v1826 = vrsqrt.pop %v1698
      %v1827 = vrsqrt.pop %v1699
      %v1828 = vrsqrt.pop %v1700
      %v1829 = vrsqrt.pop %v1701
      %v1830 = vrsqrt.pop %v1702
      %v1831 = vrsqrt.pop %v1703
      %v1832 = vrsqrt.pop %v1704
      %v1833 = vrsqrt.pop %v1705
      %v1834 = vrsqrt.pop %v1706
      %v1835 = vrsqrt.pop %v1707
      %v1836 = vrsqrt.pop %v1708
      %v1837 = vrsqrt.pop %v1709
      %v1838 = vrsqrt.pop %v1710
      %v1839 = vrsqrt.pop %v1711
      %v1840 = vrsqrt.pop %v1712
      %v1841 = vrsqrt.pop %v1713
      %v1842 = vrsqrt.pop %v1714
      %v1843 = vrsqrt.pop %v1715
      %v1844 = vrsqrt.pop %v1716
      %v1845 = vrsqrt.pop %v1717
      %v1846 = vrsqrt.pop %v1718
      %v1847 = vrsqrt.pop %v1719
      %v1848 = vrsqrt.pop %v1720
      %v1849 = vrsqrt.pop %v1721
      %v1850 = vrsqrt.pop %v1722
      %v1851 = vrsqrt.pop %v1723
      %v1852 = vrsqrt.pop %v1724
      %v1853 = vrsqrt.pop %v1725
      %v1854 = vrsqrt.pop %v1726
      %v1855 = vrsqrt.pop %v1727
      %v1856 = vrsqrt.pop %v1728
      %v1857 = vrsqrt.pop %v1729
      %v1858 = vrsqrt.pop %v1730
      %v1859 = vrsqrt.pop %v1731
      %v1860 = vrsqrt.pop %v1732
      %v1861 = vrsqrt.pop %v1733
      %v1862 = vrsqrt.pop %v1734
      %v1863 = vrsqrt.pop %v1735
      %v1864 = vrsqrt.pop %v1736
      %v1865 = vrsqrt.pop %v1737
      %v1866 = vrsqrt.pop %v1738
      %v1867 = vrsqrt.pop %v1739
      %v1868 = vrsqrt.pop %v1740
      %v1869 = vrsqrt.pop %v1741
      %v1870 = vrsqrt.pop %v1742
      %v1871 = vrsqrt.pop %v1743
      %v1872 = vrsqrt.pop %v1744
      %v1873 = vrsqrt.pop %v1745
      %v1874 = vrsqrt.pop %v1746
      %v1875 = vrsqrt.pop %v1747
      %v1876 = vrsqrt.pop %v1748
      %v1877 = vrsqrt.pop %v1749
      %v1878 = vrsqrt.pop %v1750
      %v1879 = vrsqrt.pop %v1751
      %v1880 = vrsqrt.pop %v1752
      %v1881 = vrsqrt.pop %v1753
      %v1882 = vrsqrt.pop %v1754
      %v1883 = vld [vmem:[%s210] sm:$0xff]
      %v1884 = vld [vmem:[%s210 + $0x8] sm:$0xff]
      %v1885 = vld [vmem:[%s210 + $0x10] sm:$0xff]
      %v1886 = vld [vmem:[%s210 + $0x18] sm:$0xff]
      %v1887 = vld [vmem:[%s210 + $0x20] sm:$0xff]
      %v1888 = vld [vmem:[%s210 + $0x28] sm:$0xff]
      %v1889 = vld [vmem:[%s210 + $0x30] sm:$0xff]
      %v1890 = vld [vmem:[%s210 + $0x38] sm:$0xff]
      %v1891 = vld [vmem:[%s210 + $0x40] sm:$0xff]
      %v1892 = vld [vmem:[%s210 + $0x48] sm:$0xff]
      %v1893 = vld [vmem:[%s210 + $0x50] sm:$0xff]
      %v1894 = vld [vmem:[%s210 + $0x58] sm:$0xff]
      %v1895 = vld [vmem:[%s210 + $0x60] sm:$0xff]
      %v1896 = vld [vmem:[%s210 + $0x68] sm:$0xff]
      %v1897 = vld [vmem:[%s210 + $0x70] sm:$0xff]
      %v1898 = vld [vmem:[%s210 + $0x78] sm:$0xff]
      %v1899 = vld [vmem:[%s210 + $0x80] sm:$0xff]
      %v1900 = vld [vmem:[%s210 + $0x88] sm:$0xff]
      %v1901 = vld [vmem:[%s210 + $0x90] sm:$0xff]
      %v1902 = vld [vmem:[%s210 + $0x98] sm:$0xff]
      %v1903 = vld [vmem:[%s210 + $0xa0] sm:$0xff]
      %v1904 = vld [vmem:[%s210 + $0xa8] sm:$0xff]
      %v1905 = vld [vmem:[%s210 + $0xb0] sm:$0xff]
      %v1906 = vld [vmem:[%s210 + $0xb8] sm:$0xff]
      %v1907 = vld [vmem:[%s210 + $0xc0] sm:$0xff]
      %v1908 = vld [vmem:[%s210 + $0xc8] sm:$0xff]
      %v1909 = vld [vmem:[%s210 + $0xd0] sm:$0xff]
      %v1910 = vld [vmem:[%s210 + $0xd8] sm:$0xff]
      %v1911 = vld [vmem:[%s210 + $0xe0] sm:$0xff]
      %v1912 = vld [vmem:[%s210 + $0xe8] sm:$0xff]
      %v1913 = vld [vmem:[%s210 + $0xf0] sm:$0xff]
      %v1914 = vld [vmem:[%s210 + $0xf8] sm:$0xff]
      %v1915 = vld [vmem:[%s210 + $0x100] sm:$0xff]
      %v1916 = vld [vmem:[%s210 + $0x108] sm:$0xff]
      %v1917 = vld [vmem:[%s210 + $0x110] sm:$0xff]
      %v1918 = vld [vmem:[%s210 + $0x118] sm:$0xff]
      %v1919 = vld [vmem:[%s210 + $0x120] sm:$0xff]
      %v1920 = vld [vmem:[%s210 + $0x128] sm:$0xff]
      %v1921 = vld [vmem:[%s210 + $0x130] sm:$0xff]
      %v1922 = vld [vmem:[%s210 + $0x138] sm:$0xff]
      %v1923 = vld [vmem:[%s210 + $0x140] sm:$0xff]
      %v1924 = vld [vmem:[%s210 + $0x148] sm:$0xff]
      %v1925 = vld [vmem:[%s210 + $0x150] sm:$0xff]
      %v1926 = vld [vmem:[%s210 + $0x158] sm:$0xff]
      %v1927 = vld [vmem:[%s210 + $0x160] sm:$0xff]
      %v1928 = vld [vmem:[%s210 + $0x168] sm:$0xff]
      %v1929 = vld [vmem:[%s210 + $0x170] sm:$0xff]
      %v1930 = vld [vmem:[%s210 + $0x178] sm:$0xff]
      %v1931 = vld [vmem:[%s210 + $0x180] sm:$0xff]
      %v1932 = vld [vmem:[%s210 + $0x188] sm:$0xff]
      %v1933 = vld [vmem:[%s210 + $0x190] sm:$0xff]
      %v1934 = vld [vmem:[%s210 + $0x198] sm:$0xff]
      %v1935 = vld [vmem:[%s210 + $0x1a0] sm:$0xff]
      %v1936 = vld [vmem:[%s210 + $0x1a8] sm:$0xff]
      %v1937 = vld [vmem:[%s210 + $0x1b0] sm:$0xff]
      %v1938 = vld [vmem:[%s210 + $0x1b8] sm:$0xff]
      %v1939 = vld [vmem:[%s210 + $0x1c0] sm:$0xff]
      %v1940 = vld [vmem:[%s210 + $0x1c8] sm:$0xff]
      %v1941 = vld [vmem:[%s210 + $0x1d0] sm:$0xff]
      %v1942 = vld [vmem:[%s210 + $0x1d8] sm:$0xff]
      %v1943 = vld [vmem:[%s210 + $0x1e0] sm:$0xff]
      %v1944 = vld [vmem:[%s210 + $0x1e8] sm:$0xff]
      %v1945 = vld [vmem:[%s210 + $0x1f0] sm:$0xff]
      %v1946 = vld [vmem:[%s210 + $0x1f8] sm:$0xff]
      %v1947 = vld [vmem:[%s210 + $0x200] sm:$0xff]
      %v1948 = vld [vmem:[%s210 + $0x208] sm:$0xff]
      %v1949 = vld [vmem:[%s210 + $0x210] sm:$0xff]
      %v1950 = vld [vmem:[%s210 + $0x218] sm:$0xff]
      %v1951 = vld [vmem:[%s210 + $0x220] sm:$0xff]
      %v1952 = vld [vmem:[%s210 + $0x228] sm:$0xff]
      %v1953 = vld [vmem:[%s210 + $0x230] sm:$0xff]
      %v1954 = vld [vmem:[%s210 + $0x238] sm:$0xff]
      %v1955 = vld [vmem:[%s210 + $0x240] sm:$0xff]
      %v1956 = vld [vmem:[%s210 + $0x248] sm:$0xff]
      %v1957 = vld [vmem:[%s210 + $0x250] sm:$0xff]
      %v1958 = vld [vmem:[%s210 + $0x258] sm:$0xff]
      %v1959 = vld [vmem:[%s210 + $0x260] sm:$0xff]
      %v1960 = vld [vmem:[%s210 + $0x268] sm:$0xff]
      %v1961 = vld [vmem:[%s210 + $0x270] sm:$0xff]
      %v1962 = vld [vmem:[%s210 + $0x278] sm:$0xff]
      %v1963 = vld [vmem:[%s210 + $0x280] sm:$0xff]
      %v1964 = vld [vmem:[%s210 + $0x288] sm:$0xff]
      %v1965 = vld [vmem:[%s210 + $0x290] sm:$0xff]
      %v1966 = vld [vmem:[%s210 + $0x298] sm:$0xff]
      %v1967 = vld [vmem:[%s210 + $0x2a0] sm:$0xff]
      %v1968 = vld [vmem:[%s210 + $0x2a8] sm:$0xff]
      %v1969 = vld [vmem:[%s210 + $0x2b0] sm:$0xff]
      %v1970 = vld [vmem:[%s210 + $0x2b8] sm:$0xff]
      %v1971 = vld [vmem:[%s210 + $0x2c0] sm:$0xff]
      %v1972 = vld [vmem:[%s210 + $0x2c8] sm:$0xff]
      %v1973 = vld [vmem:[%s210 + $0x2d0] sm:$0xff]
      %v1974 = vld [vmem:[%s210 + $0x2d8] sm:$0xff]
      %v1975 = vld [vmem:[%s210 + $0x2e0] sm:$0xff]
      %v1976 = vld [vmem:[%s210 + $0x2e8] sm:$0xff]
      %v1977 = vld [vmem:[%s210 + $0x2f0] sm:$0xff]
      %v1978 = vld [vmem:[%s210 + $0x2f8] sm:$0xff]
      %v1979 = vld [vmem:[%s210 + $0x300] sm:$0xff]
      %v1980 = vld [vmem:[%s210 + $0x308] sm:$0xff]
      %v1981 = vld [vmem:[%s210 + $0x310] sm:$0xff]
      %v1982 = vld [vmem:[%s210 + $0x318] sm:$0xff]
      %v1983 = vld [vmem:[%s210 + $0x320] sm:$0xff]
      %v1984 = vld [vmem:[%s210 + $0x328] sm:$0xff]
      %v1985 = vld [vmem:[%s210 + $0x330] sm:$0xff]
      %v1986 = vld [vmem:[%s210 + $0x338] sm:$0xff]
      %v1987 = vld [vmem:[%s210 + $0x340] sm:$0xff]
      %v1988 = vld [vmem:[%s210 + $0x348] sm:$0xff]
      %v1989 = vld [vmem:[%s210 + $0x350] sm:$0xff]
      %v1990 = vld [vmem:[%s210 + $0x358] sm:$0xff]
      %v1991 = vld [vmem:[%s210 + $0x360] sm:$0xff]
      %v1992 = vld [vmem:[%s210 + $0x368] sm:$0xff]
      %v1993 = vld [vmem:[%s210 + $0x370] sm:$0xff]
      %v1994 = vld [vmem:[%s210 + $0x378] sm:$0xff]
      %v1995 = vld [vmem:[%s210 + $0x380] sm:$0xff]
      %v1996 = vld [vmem:[%s210 + $0x388] sm:$0xff]
      %v1997 = vld [vmem:[%s210 + $0x390] sm:$0xff]
      %v1998 = vld [vmem:[%s210 + $0x398] sm:$0xff]
      %v1999 = vld [vmem:[%s210 + $0x3a0] sm:$0xff]
      %v2000 = vld [vmem:[%s210 + $0x3a8] sm:$0xff]
      %v2001 = vld [vmem:[%s210 + $0x3b0] sm:$0xff]
      %v2002 = vld [vmem:[%s210 + $0x3b8] sm:$0xff]
      %v2003 = vld [vmem:[%s210 + $0x3c0] sm:$0xff]
      %v2004 = vld [vmem:[%s210 + $0x3c8] sm:$0xff]
      %v2005 = vld [vmem:[%s210 + $0x3d0] sm:$0xff]
      %v2006 = vld [vmem:[%s210 + $0x3d8] sm:$0xff]
      %v2007 = vld [vmem:[%s210 + $0x3e0] sm:$0xff]
      %v2008 = vld [vmem:[%s210 + $0x3e8] sm:$0xff]
      %v2009 = vld [vmem:[%s210 + $0x3f0] sm:$0xff]
      %v2010 = vld [vmem:[%s210 + $0x3f8] sm:$0xff]
      %v2011 = vmul.f32 %v1883, %v1755
      %v2012 = vmul.f32 %v1884, %v1756
      %v2013 = vmul.f32 %v1885, %v1757
      %v2014 = vmul.f32 %v1886, %v1758
      %v2015 = vmul.f32 %v1887, %v1759
      %v2016 = vmul.f32 %v1888, %v1760
      %v2017 = vmul.f32 %v1889, %v1761
      %v2018 = vmul.f32 %v1890, %v1762
      %v2019 = vmul.f32 %v1891, %v1763
      %v2020 = vmul.f32 %v1892, %v1764
      %v2021 = vmul.f32 %v1893, %v1765
      %v2022 = vmul.f32 %v1894, %v1766
      %v2023 = vmul.f32 %v1895, %v1767
      %v2024 = vmul.f32 %v1896, %v1768
      %v2025 = vmul.f32 %v1897, %v1769
      %v2026 = vmul.f32 %v1898, %v1770
      %v2027 = vmul.f32 %v1899, %v1771
      %v2028 = vmul.f32 %v1900, %v1772
      %v2029 = vmul.f32 %v1901, %v1773
      %v2030 = vmul.f32 %v1902, %v1774
      %v2031 = vmul.f32 %v1903, %v1775
      %v2032 = vmul.f32 %v1904, %v1776
      %v2033 = vmul.f32 %v1905, %v1777
      %v2034 = vmul.f32 %v1906, %v1778
      %v2035 = vmul.f32 %v1907, %v1779
      %v2036 = vmul.f32 %v1908, %v1780
      %v2037 = vmul.f32 %v1909, %v1781
      %v2038 = vmul.f32 %v1910, %v1782
      %v2039 = vmul.f32 %v1911, %v1783
      %v2040 = vmul.f32 %v1912, %v1784
      %v2041 = vmul.f32 %v1913, %v1785
      %v2042 = vmul.f32 %v1914, %v1786
      %v2043 = vmul.f32 %v1915, %v1787
      %v2044 = vmul.f32 %v1916, %v1788
      %v2045 = vmul.f32 %v1917, %v1789
      %v2046 = vmul.f32 %v1918, %v1790
      %v2047 = vmul.f32 %v1919, %v1791
      %v2048 = vmul.f32 %v1920, %v1792
      %v2049 = vmul.f32 %v1921, %v1793
      %v2050 = vmul.f32 %v1922, %v1794
      %v2051 = vmul.f32 %v1923, %v1795
      %v2052 = vmul.f32 %v1924, %v1796
      %v2053 = vmul.f32 %v1925, %v1797
      %v2054 = vmul.f32 %v1926, %v1798
      %v2055 = vmul.f32 %v1927, %v1799
      %v2056 = vmul.f32 %v1928, %v1800
      %v2057 = vmul.f32 %v1929, %v1801
      %v2058 = vmul.f32 %v1930, %v1802
      %v2059 = vmul.f32 %v1931, %v1803
      %v2060 = vmul.f32 %v1932, %v1804
      %v2061 = vmul.f32 %v1933, %v1805
      %v2062 = vmul.f32 %v1934, %v1806
      %v2063 = vmul.f32 %v1935, %v1807
      %v2064 = vmul.f32 %v1936, %v1808
      %v2065 = vmul.f32 %v1937, %v1809
      %v2066 = vmul.f32 %v1938, %v1810
      %v2067 = vmul.f32 %v1939, %v1811
      %v2068 = vmul.f32 %v1940, %v1812
      %v2069 = vmul.f32 %v1941, %v1813
      %v2070 = vmul.f32 %v1942, %v1814
      %v2071 = vmul.f32 %v1943, %v1815
      %v2072 = vmul.f32 %v1944, %v1816
      %v2073 = vmul.f32 %v1945, %v1817
      %v2074 = vmul.f32 %v1946, %v1818
      %v2075 = vmul.f32 %v1947, %v1819
      %v2076 = vmul.f32 %v1948, %v1820
      %v2077 = vmul.f32 %v1949, %v1821
      %v2078 = vmul.f32 %v1950, %v1822
      %v2079 = vmul.f32 %v1951, %v1823
      %v2080 = vmul.f32 %v1952, %v1824
      %v2081 = vmul.f32 %v1953, %v1825
      %v2082 = vmul.f32 %v1954, %v1826
      %v2083 = vmul.f32 %v1955, %v1827
      %v2084 = vmul.f32 %v1956, %v1828
      %v2085 = vmul.f32 %v1957, %v1829
      %v2086 = vmul.f32 %v1958, %v1830
      %v2087 = vmul.f32 %v1959, %v1831
      %v2088 = vmul.f32 %v1960, %v1832
      %v2089 = vmul.f32 %v1961, %v1833
      %v2090 = vmul.f32 %v1962, %v1834
      %v2091 = vmul.f32 %v1963, %v1835
      %v2092 = vmul.f32 %v1964, %v1836
      %v2093 = vmul.f32 %v1965, %v1837
      %v2094 = vmul.f32 %v1966, %v1838
      %v2095 = vmul.f32 %v1967, %v1839
      %v2096 = vmul.f32 %v1968, %v1840
      %v2097 = vmul.f32 %v1969, %v1841
      %v2098 = vmul.f32 %v1970, %v1842
      %v2099 = vmul.f32 %v1971, %v1843
      %v2100 = vmul.f32 %v1972, %v1844
      %v2101 = vmul.f32 %v1973, %v1845
      %v2102 = vmul.f32 %v1974, %v1846
      %v2103 = vmul.f32 %v1975, %v1847
      %v2104 = vmul.f32 %v1976, %v1848
      %v2105 = vmul.f32 %v1977, %v1849
      %v2106 = vmul.f32 %v1978, %v1850
      %v2107 = vmul.f32 %v1979, %v1851
      %v2108 = vmul.f32 %v1980, %v1852
      %v2109 = vmul.f32 %v1981, %v1853
      %v2110 = vmul.f32 %v1982, %v1854
      %v2111 = vmul.f32 %v1983, %v1855
      %v2112 = vmul.f32 %v1984, %v1856
      %v2113 = vmul.f32 %v1985, %v1857
      %v2114 = vmul.f32 %v1986, %v1858
      %v2115 = vmul.f32 %v1987, %v1859
      %v2116 = vmul.f32 %v1988, %v1860
      %v2117 = vmul.f32 %v1989, %v1861
      %v2118 = vmul.f32 %v1990, %v1862
      %v2119 = vmul.f32 %v1991, %v1863
      %v2120 = vmul.f32 %v1992, %v1864
      %v2121 = vmul.f32 %v1993, %v1865
      %v2122 = vmul.f32 %v1994, %v1866
      %v2123 = vmul.f32 %v1995, %v1867
      %v2124 = vmul.f32 %v1996, %v1868
      %v2125 = vmul.f32 %v1997, %v1869
      %v2126 = vmul.f32 %v1998, %v1870
      %v2127 = vmul.f32 %v1999, %v1871
      %v2128 = vmul.f32 %v2000, %v1872
      %v2129 = vmul.f32 %v2001, %v1873
      %v2130 = vmul.f32 %v2002, %v1874
      %v2131 = vmul.f32 %v2003, %v1875
      %v2132 = vmul.f32 %v2004, %v1876
      %v2133 = vmul.f32 %v2005, %v1877
      %v2134 = vmul.f32 %v2006, %v1878
      %v2135 = vmul.f32 %v2007, %v1879
      %v2136 = vmul.f32 %v2008, %v1880
      %v2137 = vmul.f32 %v2009, %v1881
      %v2138 = vmul.f32 %v2010, %v1882
      %2140 = vset.pattern.permute.xlu0 0
      %2141 = vperm.xlu0 %2140, %v2011
      %v2142 = vpop.permute.xlu0 %2141
      %2145 = vset.pattern.permute.xlu0 0
      %2146 = vperm.xlu0 %2145, %v2012
      %v2147 = vpop.permute.xlu0 %2146
      %2150 = vset.pattern.permute.xlu0 0
      %2151 = vperm.xlu0 %2150, %v2013
      %v2152 = vpop.permute.xlu0 %2151
      %2155 = vset.pattern.permute.xlu0 0
      %2156 = vperm.xlu0 %2155, %v2014
      %v2157 = vpop.permute.xlu0 %2156
      %2160 = vset.pattern.permute.xlu0 0
      %2161 = vperm.xlu0 %2160, %v2015
      %v2162 = vpop.permute.xlu0 %2161
      %2165 = vset.pattern.permute.xlu0 0
      %2166 = vperm.xlu0 %2165, %v2016
      %v2167 = vpop.permute.xlu0 %2166
      %2170 = vset.pattern.permute.xlu0 0
      %2171 = vperm.xlu0 %2170, %v2017
      %v2172 = vpop.permute.xlu0 %2171
      %2175 = vset.pattern.permute.xlu0 0
      %2176 = vperm.xlu0 %2175, %v2018
      %v2177 = vpop.permute.xlu0 %2176
      %2180 = vset.pattern.permute.xlu0 0
      %2181 = vperm.xlu0 %2180, %v2019
      %v2182 = vpop.permute.xlu0 %2181
      %2185 = vset.pattern.permute.xlu0 0
      %2186 = vperm.xlu0 %2185, %v2020
      %v2187 = vpop.permute.xlu0 %2186
      %2190 = vset.pattern.permute.xlu0 0
      %2191 = vperm.xlu0 %2190, %v2021
      %v2192 = vpop.permute.xlu0 %2191
      %2195 = vset.pattern.permute.xlu0 0
      %2196 = vperm.xlu0 %2195, %v2022
      %v2197 = vpop.permute.xlu0 %2196
      %2200 = vset.pattern.permute.xlu0 0
      %2201 = vperm.xlu0 %2200, %v2023
      %v2202 = vpop.permute.xlu0 %2201
      %2205 = vset.pattern.permute.xlu0 0
      %2206 = vperm.xlu0 %2205, %v2024
      %v2207 = vpop.permute.xlu0 %2206
      %2210 = vset.pattern.permute.xlu0 0
      %2211 = vperm.xlu0 %2210, %v2025
      %v2212 = vpop.permute.xlu0 %2211
      %2215 = vset.pattern.permute.xlu0 0
      %2216 = vperm.xlu0 %2215, %v2026
      %v2217 = vpop.permute.xlu0 %2216
      %2220 = vset.pattern.permute.xlu0 0
      %2221 = vperm.xlu0 %2220, %v2027
      %v2222 = vpop.permute.xlu0 %2221
      %2225 = vset.pattern.permute.xlu0 0
      %2226 = vperm.xlu0 %2225, %v2028
      %v2227 = vpop.permute.xlu0 %2226
      %2230 = vset.pattern.permute.xlu0 0
      %2231 = vperm.xlu0 %2230, %v2029
      %v2232 = vpop.permute.xlu0 %2231
      %2235 = vset.pattern.permute.xlu0 0
      %2236 = vperm.xlu0 %2235, %v2030
      %v2237 = vpop.permute.xlu0 %2236
      %2240 = vset.pattern.permute.xlu0 0
      %2241 = vperm.xlu0 %2240, %v2031
      %v2242 = vpop.permute.xlu0 %2241
      %2245 = vset.pattern.permute.xlu0 0
      %2246 = vperm.xlu0 %2245, %v2032
      %v2247 = vpop.permute.xlu0 %2246
      %2250 = vset.pattern.permute.xlu0 0
      %2251 = vperm.xlu0 %2250, %v2033
      %v2252 = vpop.permute.xlu0 %2251
      %2255 = vset.pattern.permute.xlu0 0
      %2256 = vperm.xlu0 %2255, %v2034
      %v2257 = vpop.permute.xlu0 %2256
      %2260 = vset.pattern.permute.xlu0 0
      %2261 = vperm.xlu0 %2260, %v2035
      %v2262 = vpop.permute.xlu0 %2261
      %2265 = vset.pattern.permute.xlu0 0
      %2266 = vperm.xlu0 %2265, %v2036
      %v2267 = vpop.permute.xlu0 %2266
      %2270 = vset.pattern.permute.xlu0 0
      %2271 = vperm.xlu0 %2270, %v2037
      %v2272 = vpop.permute.xlu0 %2271
      %2275 = vset.pattern.permute.xlu0 0
      %2276 = vperm.xlu0 %2275, %v2038
      %v2277 = vpop.permute.xlu0 %2276
      %2280 = vset.pattern.permute.xlu0 0
      %2281 = vperm.xlu0 %2280, %v2039
      %v2282 = vpop.permute.xlu0 %2281
      %2285 = vset.pattern.permute.xlu0 0
      %2286 = vperm.xlu0 %2285, %v2040
      %v2287 = vpop.permute.xlu0 %2286
      %2290 = vset.pattern.permute.xlu0 0
      %2291 = vperm.xlu0 %2290, %v2041
      %v2292 = vpop.permute.xlu0 %2291
      %2295 = vset.pattern.permute.xlu0 0
      %2296 = vperm.xlu0 %2295, %v2042
      %v2297 = vpop.permute.xlu0 %2296
      %2300 = vset.pattern.permute.xlu0 0
      %2301 = vperm.xlu0 %2300, %v2043
      %v2302 = vpop.permute.xlu0 %2301
      %2305 = vset.pattern.permute.xlu0 0
      %2306 = vperm.xlu0 %2305, %v2044
      %v2307 = vpop.permute.xlu0 %2306
      %2310 = vset.pattern.permute.xlu0 0
      %2311 = vperm.xlu0 %2310, %v2045
      %v2312 = vpop.permute.xlu0 %2311
      %2315 = vset.pattern.permute.xlu0 0
      %2316 = vperm.xlu0 %2315, %v2046
      %v2317 = vpop.permute.xlu0 %2316
      %2320 = vset.pattern.permute.xlu0 0
      %2321 = vperm.xlu0 %2320, %v2047
      %v2322 = vpop.permute.xlu0 %2321
      %2325 = vset.pattern.permute.xlu0 0
      %2326 = vperm.xlu0 %2325, %v2048
      %v2327 = vpop.permute.xlu0 %2326
      %2330 = vset.pattern.permute.xlu0 0
      %2331 = vperm.xlu0 %2330, %v2049
      %v2332 = vpop.permute.xlu0 %2331
      %2335 = vset.pattern.permute.xlu0 0
      %2336 = vperm.xlu0 %2335, %v2050
      %v2337 = vpop.permute.xlu0 %2336
      %2340 = vset.pattern.permute.xlu0 0
      %2341 = vperm.xlu0 %2340, %v2051
      %v2342 = vpop.permute.xlu0 %2341
      %2345 = vset.pattern.permute.xlu0 0
      %2346 = vperm.xlu0 %2345, %v2052
      %v2347 = vpop.permute.xlu0 %2346
      %2350 = vset.pattern.permute.xlu0 0
      %2351 = vperm.xlu0 %2350, %v2053
      %v2352 = vpop.permute.xlu0 %2351
      %2355 = vset.pattern.permute.xlu0 0
      %2356 = vperm.xlu0 %2355, %v2054
      %v2357 = vpop.permute.xlu0 %2356
      %2360 = vset.pattern.permute.xlu0 0
      %2361 = vperm.xlu0 %2360, %v2055
      %v2362 = vpop.permute.xlu0 %2361
      %2365 = vset.pattern.permute.xlu0 0
      %2366 = vperm.xlu0 %2365, %v2056
      %v2367 = vpop.permute.xlu0 %2366
      %2370 = vset.pattern.permute.xlu0 0
      %2371 = vperm.xlu0 %2370, %v2057
      %v2372 = vpop.permute.xlu0 %2371
      %2375 = vset.pattern.permute.xlu0 0
      %2376 = vperm.xlu0 %2375, %v2058
      %v2377 = vpop.permute.xlu0 %2376
      %2380 = vset.pattern.permute.xlu0 0
      %2381 = vperm.xlu0 %2380, %v2059
      %v2382 = vpop.permute.xlu0 %2381
      %2385 = vset.pattern.permute.xlu0 0
      %2386 = vperm.xlu0 %2385, %v2060
      %v2387 = vpop.permute.xlu0 %2386
      %2390 = vset.pattern.permute.xlu0 0
      %2391 = vperm.xlu0 %2390, %v2061
      %v2392 = vpop.permute.xlu0 %2391
      %2395 = vset.pattern.permute.xlu0 0
      %2396 = vperm.xlu0 %2395, %v2062
      %v2397 = vpop.permute.xlu0 %2396
      %2400 = vset.pattern.permute.xlu0 0
      %2401 = vperm.xlu0 %2400, %v2063
      %v2402 = vpop.permute.xlu0 %2401
      %2405 = vset.pattern.permute.xlu0 0
      %2406 = vperm.xlu0 %2405, %v2064
      %v2407 = vpop.permute.xlu0 %2406
      %2410 = vset.pattern.permute.xlu0 0
      %2411 = vperm.xlu0 %2410, %v2065
      %v2412 = vpop.permute.xlu0 %2411
      %2415 = vset.pattern.permute.xlu0 0
      %2416 = vperm.xlu0 %2415, %v2066
      %v2417 = vpop.permute.xlu0 %2416
      %2420 = vset.pattern.permute.xlu0 0
      %2421 = vperm.xlu0 %2420, %v2067
      %v2422 = vpop.permute.xlu0 %2421
      %2425 = vset.pattern.permute.xlu0 0
      %2426 = vperm.xlu0 %2425, %v2068
      %v2427 = vpop.permute.xlu0 %2426
      %2430 = vset.pattern.permute.xlu0 0
      %2431 = vperm.xlu0 %2430, %v2069
      %v2432 = vpop.permute.xlu0 %2431
      %2435 = vset.pattern.permute.xlu0 0
      %2436 = vperm.xlu0 %2435, %v2070
      %v2437 = vpop.permute.xlu0 %2436
      %2440 = vset.pattern.permute.xlu0 0
      %2441 = vperm.xlu0 %2440, %v2071
      %v2442 = vpop.permute.xlu0 %2441
      %2445 = vset.pattern.permute.xlu0 0
      %2446 = vperm.xlu0 %2445, %v2072
      %v2447 = vpop.permute.xlu0 %2446
      %2450 = vset.pattern.permute.xlu0 0
      %2451 = vperm.xlu0 %2450, %v2073
      %v2452 = vpop.permute.xlu0 %2451
      %2455 = vset.pattern.permute.xlu0 0
      %2456 = vperm.xlu0 %2455, %v2074
      %v2457 = vpop.permute.xlu0 %2456
      %2460 = vset.pattern.permute.xlu0 0
      %2461 = vperm.xlu0 %2460, %v2075
      %v2462 = vpop.permute.xlu0 %2461
      %2465 = vset.pattern.permute.xlu0 0
      %2466 = vperm.xlu0 %2465, %v2076
      %v2467 = vpop.permute.xlu0 %2466
      %2470 = vset.pattern.permute.xlu0 0
      %2471 = vperm.xlu0 %2470, %v2077
      %v2472 = vpop.permute.xlu0 %2471
      %2475 = vset.pattern.permute.xlu0 0
      %2476 = vperm.xlu0 %2475, %v2078
      %v2477 = vpop.permute.xlu0 %2476
      %2480 = vset.pattern.permute.xlu0 0
      %2481 = vperm.xlu0 %2480, %v2079
      %v2482 = vpop.permute.xlu0 %2481
      %2485 = vset.pattern.permute.xlu0 0
      %2486 = vperm.xlu0 %2485, %v2080
      %v2487 = vpop.permute.xlu0 %2486
      %2490 = vset.pattern.permute.xlu0 0
      %2491 = vperm.xlu0 %2490, %v2081
      %v2492 = vpop.permute.xlu0 %2491
      %2495 = vset.pattern.permute.xlu0 0
      %2496 = vperm.xlu0 %2495, %v2082
      %v2497 = vpop.permute.xlu0 %2496
      %2500 = vset.pattern.permute.xlu0 0
      %2501 = vperm.xlu0 %2500, %v2083
      %v2502 = vpop.permute.xlu0 %2501
      %2505 = vset.pattern.permute.xlu0 0
      %2506 = vperm.xlu0 %2505, %v2084
      %v2507 = vpop.permute.xlu0 %2506
      %2510 = vset.pattern.permute.xlu0 0
      %2511 = vperm.xlu0 %2510, %v2085
      %v2512 = vpop.permute.xlu0 %2511
      %2515 = vset.pattern.permute.xlu0 0
      %2516 = vperm.xlu0 %2515, %v2086
      %v2517 = vpop.permute.xlu0 %2516
      %2520 = vset.pattern.permute.xlu0 0
      %2521 = vperm.xlu0 %2520, %v2087
      %v2522 = vpop.permute.xlu0 %2521
      %2525 = vset.pattern.permute.xlu0 0
      %2526 = vperm.xlu0 %2525, %v2088
      %v2527 = vpop.permute.xlu0 %2526
      %2530 = vset.pattern.permute.xlu0 0
      %2531 = vperm.xlu0 %2530, %v2089
      %v2532 = vpop.permute.xlu0 %2531
      %2535 = vset.pattern.permute.xlu0 0
      %2536 = vperm.xlu0 %2535, %v2090
      %v2537 = vpop.permute.xlu0 %2536
      %2540 = vset.pattern.permute.xlu0 0
      %2541 = vperm.xlu0 %2540, %v2091
      %v2542 = vpop.permute.xlu0 %2541
      %2545 = vset.pattern.permute.xlu0 0
      %2546 = vperm.xlu0 %2545, %v2092
      %v2547 = vpop.permute.xlu0 %2546
      %2550 = vset.pattern.permute.xlu0 0
      %2551 = vperm.xlu0 %2550, %v2093
      %v2552 = vpop.permute.xlu0 %2551
      %2555 = vset.pattern.permute.xlu0 0
      %2556 = vperm.xlu0 %2555, %v2094
      %v2557 = vpop.permute.xlu0 %2556
      %2560 = vset.pattern.permute.xlu0 0
      %2561 = vperm.xlu0 %2560, %v2095
      %v2562 = vpop.permute.xlu0 %2561
      %2565 = vset.pattern.permute.xlu0 0
      %2566 = vperm.xlu0 %2565, %v2096
      %v2567 = vpop.permute.xlu0 %2566
      %2570 = vset.pattern.permute.xlu0 0
      %2571 = vperm.xlu0 %2570, %v2097
      %v2572 = vpop.permute.xlu0 %2571
      %2575 = vset.pattern.permute.xlu0 0
      %2576 = vperm.xlu0 %2575, %v2098
      %v2577 = vpop.permute.xlu0 %2576
      %2580 = vset.pattern.permute.xlu0 0
      %2581 = vperm.xlu0 %2580, %v2099
      %v2582 = vpop.permute.xlu0 %2581
      %2585 = vset.pattern.permute.xlu0 0
      %2586 = vperm.xlu0 %2585, %v2100
      %v2587 = vpop.permute.xlu0 %2586
      %2590 = vset.pattern.permute.xlu0 0
      %2591 = vperm.xlu0 %2590, %v2101
      %v2592 = vpop.permute.xlu0 %2591
      %2595 = vset.pattern.permute.xlu0 0
      %2596 = vperm.xlu0 %2595, %v2102
      %v2597 = vpop.permute.xlu0 %2596
      %2600 = vset.pattern.permute.xlu0 0
      %2601 = vperm.xlu0 %2600, %v2103
      %v2602 = vpop.permute.xlu0 %2601
      %2605 = vset.pattern.permute.xlu0 0
      %2606 = vperm.xlu0 %2605, %v2104
      %v2607 = vpop.permute.xlu0 %2606
      %2610 = vset.pattern.permute.xlu0 0
      %2611 = vperm.xlu0 %2610, %v2105
      %v2612 = vpop.permute.xlu0 %2611
      %2615 = vset.pattern.permute.xlu0 0
      %2616 = vperm.xlu0 %2615, %v2106
      %v2617 = vpop.permute.xlu0 %2616
      %2620 = vset.pattern.permute.xlu0 0
      %2621 = vperm.xlu0 %2620, %v2107
      %v2622 = vpop.permute.xlu0 %2621
      %2625 = vset.pattern.permute.xlu0 0
      %2626 = vperm.xlu0 %2625, %v2108
      %v2627 = vpop.permute.xlu0 %2626
      %2630 = vset.pattern.permute.xlu0 0
      %2631 = vperm.xlu0 %2630, %v2109
      %v2632 = vpop.permute.xlu0 %2631
      %2635 = vset.pattern.permute.xlu0 0
      %2636 = vperm.xlu0 %2635, %v2110
      %v2637 = vpop.permute.xlu0 %2636
      %2640 = vset.pattern.permute.xlu0 0
      %2641 = vperm.xlu0 %2640, %v2111
      %v2642 = vpop.permute.xlu0 %2641
      %2645 = vset.pattern.permute.xlu0 0
      %2646 = vperm.xlu0 %2645, %v2112
      %v2647 = vpop.permute.xlu0 %2646
      %2650 = vset.pattern.permute.xlu0 0
      %2651 = vperm.xlu0 %2650, %v2113
      %v2652 = vpop.permute.xlu0 %2651
      %2655 = vset.pattern.permute.xlu0 0
      %2656 = vperm.xlu0 %2655, %v2114
      %v2657 = vpop.permute.xlu0 %2656
      %2660 = vset.pattern.permute.xlu0 0
      %2661 = vperm.xlu0 %2660, %v2115
      %v2662 = vpop.permute.xlu0 %2661
      %2665 = vset.pattern.permute.xlu0 0
      %2666 = vperm.xlu0 %2665, %v2116
      %v2667 = vpop.permute.xlu0 %2666
      %2670 = vset.pattern.permute.xlu0 0
      %2671 = vperm.xlu0 %2670, %v2117
      %v2672 = vpop.permute.xlu0 %2671
      %2675 = vset.pattern.permute.xlu0 0
      %2676 = vperm.xlu0 %2675, %v2118
      %v2677 = vpop.permute.xlu0 %2676
      %2680 = vset.pattern.permute.xlu0 0
      %2681 = vperm.xlu0 %2680, %v2119
      %v2682 = vpop.permute.xlu0 %2681
      %2685 = vset.pattern.permute.xlu0 0
      %2686 = vperm.xlu0 %2685, %v2120
      %v2687 = vpop.permute.xlu0 %2686
      %2690 = vset.pattern.permute.xlu0 0
      %2691 = vperm.xlu0 %2690, %v2121
      %v2692 = vpop.permute.xlu0 %2691
      %2695 = vset.pattern.permute.xlu0 0
      %2696 = vperm.xlu0 %2695, %v2122
      %v2697 = vpop.permute.xlu0 %2696
      %2700 = vset.pattern.permute.xlu0 0
      %2701 = vperm.xlu0 %2700, %v2123
      %v2702 = vpop.permute.xlu0 %2701
      %2705 = vset.pattern.permute.xlu0 0
      %2706 = vperm.xlu0 %2705, %v2124
      %v2707 = vpop.permute.xlu0 %2706
      %2710 = vset.pattern.permute.xlu0 0
      %2711 = vperm.xlu0 %2710, %v2125
      %v2712 = vpop.permute.xlu0 %2711
      %2715 = vset.pattern.permute.xlu0 0
      %2716 = vperm.xlu0 %2715, %v2126
      %v2717 = vpop.permute.xlu0 %2716
      %2720 = vset.pattern.permute.xlu0 0
      %2721 = vperm.xlu0 %2720, %v2127
      %v2722 = vpop.permute.xlu0 %2721
      %2725 = vset.pattern.permute.xlu0 0
      %2726 = vperm.xlu0 %2725, %v2128
      %v2727 = vpop.permute.xlu0 %2726
      %2730 = vset.pattern.permute.xlu0 0
      %2731 = vperm.xlu0 %2730, %v2129
      %v2732 = vpop.permute.xlu0 %2731
      %2735 = vset.pattern.permute.xlu0 0
      %2736 = vperm.xlu0 %2735, %v2130
      %v2737 = vpop.permute.xlu0 %2736
      %2740 = vset.pattern.permute.xlu0 0
      %2741 = vperm.xlu0 %2740, %v2131
      %v2742 = vpop.permute.xlu0 %2741
      %2745 = vset.pattern.permute.xlu0 0
      %2746 = vperm.xlu0 %2745, %v2132
      %v2747 = vpop.permute.xlu0 %2746
      %2750 = vset.pattern.permute.xlu0 0
      %2751 = vperm.xlu0 %2750, %v2133
      %v2752 = vpop.permute.xlu0 %2751
      %2755 = vset.pattern.permute.xlu0 0
      %2756 = vperm.xlu0 %2755, %v2134
      %v2757 = vpop.permute.xlu0 %2756
      %2760 = vset.pattern.permute.xlu0 0
      %2761 = vperm.xlu0 %2760, %v2135
      %v2762 = vpop.permute.xlu0 %2761
      %2765 = vset.pattern.permute.xlu0 0
      %2766 = vperm.xlu0 %2765, %v2136
      %v2767 = vpop.permute.xlu0 %2766
      %2770 = vset.pattern.permute.xlu0 0
      %2771 = vperm.xlu0 %2770, %v2137
      %v2772 = vpop.permute.xlu0 %2771
      %2775 = vset.pattern.permute.xlu0 0
      %2776 = vperm.xlu0 %2775, %v2138
      %v2777 = vpop.permute.xlu0 %2776
      %v2779 = vmul.f32 %v859, %v2142
      %v2780 = vmul.f32 %v860, %v2147
      %v2781 = vmul.f32 %v861, %v2152
      %v2782 = vmul.f32 %v862, %v2157
      %v2783 = vmul.f32 %v863, %v2162
      %v2784 = vmul.f32 %v864, %v2167
      %v2785 = vmul.f32 %v865, %v2172
      %v2786 = vmul.f32 %v866, %v2177
      %v2787 = vmul.f32 %v867, %v2182
      %v2788 = vmul.f32 %v868, %v2187
      %v2789 = vmul.f32 %v869, %v2192
      %v2790 = vmul.f32 %v870, %v2197
      %v2791 = vmul.f32 %v871, %v2202
      %v2792 = vmul.f32 %v872, %v2207
      %v2793 = vmul.f32 %v873, %v2212
      %v2794 = vmul.f32 %v874, %v2217
      %v2795 = vmul.f32 %v875, %v2222
      %v2796 = vmul.f32 %v876, %v2227
      %v2797 = vmul.f32 %v877, %v2232
      %v2798 = vmul.f32 %v878, %v2237
      %v2799 = vmul.f32 %v879, %v2242
      %v2800 = vmul.f32 %v880, %v2247
      %v2801 = vmul.f32 %v881, %v2252
      %v2802 = vmul.f32 %v882, %v2257
      %v2803 = vmul.f32 %v883, %v2262
      %v2804 = vmul.f32 %v884, %v2267
      %v2805 = vmul.f32 %v885, %v2272
      %v2806 = vmul.f32 %v886, %v2277
      %v2807 = vmul.f32 %v887, %v2282
      %v2808 = vmul.f32 %v888, %v2287
      %v2809 = vmul.f32 %v889, %v2292
      %v2810 = vmul.f32 %v890, %v2297
      %v2811 = vmul.f32 %v891, %v2302
      %v2812 = vmul.f32 %v892, %v2307
      %v2813 = vmul.f32 %v893, %v2312
      %v2814 = vmul.f32 %v894, %v2317
      %v2815 = vmul.f32 %v895, %v2322
      %v2816 = vmul.f32 %v896, %v2327
      %v2817 = vmul.f32 %v897, %v2332
      %v2818 = vmul.f32 %v898, %v2337
      %v2819 = vmul.f32 %v899, %v2342
      %v2820 = vmul.f32 %v900, %v2347
      %v2821 = vmul.f32 %v901, %v2352
      %v2822 = vmul.f32 %v902, %v2357
      %v2823 = vmul.f32 %v903, %v2362
      %v2824 = vmul.f32 %v904, %v2367
      %v2825 = vmul.f32 %v905, %v2372
      %v2826 = vmul.f32 %v906, %v2377
      %v2827 = vmul.f32 %v907, %v2382
      %v2828 = vmul.f32 %v908, %v2387
      %v2829 = vmul.f32 %v909, %v2392
      %v2830 = vmul.f32 %v910, %v2397
      %v2831 = vmul.f32 %v911, %v2402
      %v2832 = vmul.f32 %v912, %v2407
      %v2833 = vmul.f32 %v913, %v2412
      %v2834 = vmul.f32 %v914, %v2417
      %v2835 = vmul.f32 %v915, %v2422
      %v2836 = vmul.f32 %v916, %v2427
      %v2837 = vmul.f32 %v917, %v2432
      %v2838 = vmul.f32 %v918, %v2437
      %v2839 = vmul.f32 %v919, %v2442
      %v2840 = vmul.f32 %v920, %v2447
      %v2841 = vmul.f32 %v921, %v2452
      %v2842 = vmul.f32 %v922, %v2457
      %v2843 = vmul.f32 %v923, %v2462
      %v2844 = vmul.f32 %v924, %v2467
      %v2845 = vmul.f32 %v925, %v2472
      %v2846 = vmul.f32 %v926, %v2477
      %v2847 = vmul.f32 %v927, %v2482
      %v2848 = vmul.f32 %v928, %v2487
      %v2849 = vmul.f32 %v929, %v2492
      %v2850 = vmul.f32 %v930, %v2497
      %v2851 = vmul.f32 %v931, %v2502
      %v2852 = vmul.f32 %v932, %v2507
      %v2853 = vmul.f32 %v933, %v2512
      %v2854 = vmul.f32 %v934, %v2517
      %v2855 = vmul.f32 %v935, %v2522
      %v2856 = vmul.f32 %v936, %v2527
      %v2857 = vmul.f32 %v937, %v2532
      %v2858 = vmul.f32 %v938, %v2537
      %v2859 = vmul.f32 %v939, %v2542
      %v2860 = vmul.f32 %v940, %v2547
      %v2861 = vmul.f32 %v941, %v2552
      %v2862 = vmul.f32 %v942, %v2557
      %v2863 = vmul.f32 %v943, %v2562
      %v2864 = vmul.f32 %v944, %v2567
      %v2865 = vmul.f32 %v945, %v2572
      %v2866 = vmul.f32 %v946, %v2577
      %v2867 = vmul.f32 %v947, %v2582
      %v2868 = vmul.f32 %v948, %v2587
      %v2869 = vmul.f32 %v949, %v2592
      %v2870 = vmul.f32 %v950, %v2597
      %v2871 = vmul.f32 %v951, %v2602
      %v2872 = vmul.f32 %v952, %v2607
      %v2873 = vmul.f32 %v953, %v2612
      %v2874 = vmul.f32 %v954, %v2617
      %v2875 = vmul.f32 %v955, %v2622
      %v2876 = vmul.f32 %v956, %v2627
      %v2877 = vmul.f32 %v957, %v2632
      %v2878 = vmul.f32 %v958, %v2637
      %v2879 = vmul.f32 %v959, %v2642
      %v2880 = vmul.f32 %v960, %v2647
      %v2881 = vmul.f32 %v961, %v2652
      %v2882 = vmul.f32 %v962, %v2657
      %v2883 = vmul.f32 %v963, %v2662
      %v2884 = vmul.f32 %v964, %v2667
      %v2885 = vmul.f32 %v965, %v2672
      %v2886 = vmul.f32 %v966, %v2677
      %v2887 = vmul.f32 %v967, %v2682
      %v2888 = vmul.f32 %v968, %v2687
      %v2889 = vmul.f32 %v969, %v2692
      %v2890 = vmul.f32 %v970, %v2697
      %v2891 = vmul.f32 %v971, %v2702
      %v2892 = vmul.f32 %v972, %v2707
      %v2893 = vmul.f32 %v973, %v2712
      %v2894 = vmul.f32 %v974, %v2717
      %v2895 = vmul.f32 %v975, %v2722
      %v2896 = vmul.f32 %v976, %v2727
      %v2897 = vmul.f32 %v977, %v2732
      %v2898 = vmul.f32 %v978, %v2737
      %v2899 = vmul.f32 %v979, %v2742
      %v2900 = vmul.f32 %v980, %v2747
      %v2901 = vmul.f32 %v981, %v2752
      %v2902 = vmul.f32 %v982, %v2757
      %v2903 = vmul.f32 %v983, %v2762
      %v2904 = vmul.f32 %v984, %v2767
      %v2905 = vmul.f32 %v985, %v2772
      %v2906 = vmul.f32 %v986, %v2777
      %v2907 = vld [vmem:[%s204] sm:$0xff]
      %v2908 = vld [vmem:[%s204 + $0x8] sm:$0xff]
      %v2909 = vld [vmem:[%s204 + $0x10] sm:$0xff]
      %v2910 = vld [vmem:[%s204 + $0x18] sm:$0xff]
      %v2911 = vld [vmem:[%s204 + $0x20] sm:$0xff]
      %v2912 = vld [vmem:[%s204 + $0x28] sm:$0xff]
      %v2913 = vld [vmem:[%s204 + $0x30] sm:$0xff]
      %v2914 = vld [vmem:[%s204 + $0x38] sm:$0xff]
      %v2915 = vld [vmem:[%s204 + $0x40] sm:$0xff]
      %v2916 = vld [vmem:[%s204 + $0x48] sm:$0xff]
      %v2917 = vld [vmem:[%s204 + $0x50] sm:$0xff]
      %v2918 = vld [vmem:[%s204 + $0x58] sm:$0xff]
      %v2919 = vld [vmem:[%s204 + $0x60] sm:$0xff]
      %v2920 = vld [vmem:[%s204 + $0x68] sm:$0xff]
      %v2921 = vld [vmem:[%s204 + $0x70] sm:$0xff]
      %v2922 = vld [vmem:[%s204 + $0x78] sm:$0xff]
      %v2923 = vld [vmem:[%s204 + $0x80] sm:$0xff]
      %v2924 = vld [vmem:[%s204 + $0x88] sm:$0xff]
      %v2925 = vld [vmem:[%s204 + $0x90] sm:$0xff]
      %v2926 = vld [vmem:[%s204 + $0x98] sm:$0xff]
      %v2927 = vld [vmem:[%s204 + $0xa0] sm:$0xff]
      %v2928 = vld [vmem:[%s204 + $0xa8] sm:$0xff]
      %v2929 = vld [vmem:[%s204 + $0xb0] sm:$0xff]
      %v2930 = vld [vmem:[%s204 + $0xb8] sm:$0xff]
      %v2931 = vld [vmem:[%s204 + $0xc0] sm:$0xff]
      %v2932 = vld [vmem:[%s204 + $0xc8] sm:$0xff]
      %v2933 = vld [vmem:[%s204 + $0xd0] sm:$0xff]
      %v2934 = vld [vmem:[%s204 + $0xd8] sm:$0xff]
      %v2935 = vld [vmem:[%s204 + $0xe0] sm:$0xff]
      %v2936 = vld [vmem:[%s204 + $0xe8] sm:$0xff]
      %v2937 = vld [vmem:[%s204 + $0xf0] sm:$0xff]
      %v2938 = vld [vmem:[%s204 + $0xf8] sm:$0xff]
      %v2939 = vld [vmem:[%s204 + $0x100] sm:$0xff]
      %v2940 = vld [vmem:[%s204 + $0x108] sm:$0xff]
      %v2941 = vld [vmem:[%s204 + $0x110] sm:$0xff]
      %v2942 = vld [vmem:[%s204 + $0x118] sm:$0xff]
      %v2943 = vld [vmem:[%s204 + $0x120] sm:$0xff]
      %v2944 = vld [vmem:[%s204 + $0x128] sm:$0xff]
      %v2945 = vld [vmem:[%s204 + $0x130] sm:$0xff]
      %v2946 = vld [vmem:[%s204 + $0x138] sm:$0xff]
      %v2947 = vld [vmem:[%s204 + $0x140] sm:$0xff]
      %v2948 = vld [vmem:[%s204 + $0x148] sm:$0xff]
      %v2949 = vld [vmem:[%s204 + $0x150] sm:$0xff]
      %v2950 = vld [vmem:[%s204 + $0x158] sm:$0xff]
      %v2951 = vld [vmem:[%s204 + $0x160] sm:$0xff]
      %v2952 = vld [vmem:[%s204 + $0x168] sm:$0xff]
      %v2953 = vld [vmem:[%s204 + $0x170] sm:$0xff]
      %v2954 = vld [vmem:[%s204 + $0x178] sm:$0xff]
      %v2955 = vld [vmem:[%s204 + $0x180] sm:$0xff]
      %v2956 = vld [vmem:[%s204 + $0x188] sm:$0xff]
      %v2957 = vld [vmem:[%s204 + $0x190] sm:$0xff]
      %v2958 = vld [vmem:[%s204 + $0x198] sm:$0xff]
      %v2959 = vld [vmem:[%s204 + $0x1a0] sm:$0xff]
      %v2960 = vld [vmem:[%s204 + $0x1a8] sm:$0xff]
      %v2961 = vld [vmem:[%s204 + $0x1b0] sm:$0xff]
      %v2962 = vld [vmem:[%s204 + $0x1b8] sm:$0xff]
      %v2963 = vld [vmem:[%s204 + $0x1c0] sm:$0xff]
      %v2964 = vld [vmem:[%s204 + $0x1c8] sm:$0xff]
      %v2965 = vld [vmem:[%s204 + $0x1d0] sm:$0xff]
      %v2966 = vld [vmem:[%s204 + $0x1d8] sm:$0xff]
      %v2967 = vld [vmem:[%s204 + $0x1e0] sm:$0xff]
      %v2968 = vld [vmem:[%s204 + $0x1e8] sm:$0xff]
      %v2969 = vld [vmem:[%s204 + $0x1f0] sm:$0xff]
      %v2970 = vld [vmem:[%s204 + $0x1f8] sm:$0xff]
      %v2971 = vld [vmem:[%s204 + $0x200] sm:$0xff]
      %v2972 = vld [vmem:[%s204 + $0x208] sm:$0xff]
      %v2973 = vld [vmem:[%s204 + $0x210] sm:$0xff]
      %v2974 = vld [vmem:[%s204 + $0x218] sm:$0xff]
      %v2975 = vld [vmem:[%s204 + $0x220] sm:$0xff]
      %v2976 = vld [vmem:[%s204 + $0x228] sm:$0xff]
      %v2977 = vld [vmem:[%s204 + $0x230] sm:$0xff]
      %v2978 = vld [vmem:[%s204 + $0x238] sm:$0xff]
      %v2979 = vld [vmem:[%s204 + $0x240] sm:$0xff]
      %v2980 = vld [vmem:[%s204 + $0x248] sm:$0xff]
      %v2981 = vld [vmem:[%s204 + $0x250] sm:$0xff]
      %v2982 = vld [vmem:[%s204 + $0x258] sm:$0xff]
      %v2983 = vld [vmem:[%s204 + $0x260] sm:$0xff]
      %v2984 = vld [vmem:[%s204 + $0x268] sm:$0xff]
      %v2985 = vld [vmem:[%s204 + $0x270] sm:$0xff]
      %v2986 = vld [vmem:[%s204 + $0x278] sm:$0xff]
      %v2987 = vld [vmem:[%s204 + $0x280] sm:$0xff]
      %v2988 = vld [vmem:[%s204 + $0x288] sm:$0xff]
      %v2989 = vld [vmem:[%s204 + $0x290] sm:$0xff]
      %v2990 = vld [vmem:[%s204 + $0x298] sm:$0xff]
      %v2991 = vld [vmem:[%s204 + $0x2a0] sm:$0xff]
      %v2992 = vld [vmem:[%s204 + $0x2a8] sm:$0xff]
      %v2993 = vld [vmem:[%s204 + $0x2b0] sm:$0xff]
      %v2994 = vld [vmem:[%s204 + $0x2b8] sm:$0xff]
      %v2995 = vld [vmem:[%s204 + $0x2c0] sm:$0xff]
      %v2996 = vld [vmem:[%s204 + $0x2c8] sm:$0xff]
      %v2997 = vld [vmem:[%s204 + $0x2d0] sm:$0xff]
      %v2998 = vld [vmem:[%s204 + $0x2d8] sm:$0xff]
      %v2999 = vld [vmem:[%s204 + $0x2e0] sm:$0xff]
      %v3000 = vld [vmem:[%s204 + $0x2e8] sm:$0xff]
      %v3001 = vld [vmem:[%s204 + $0x2f0] sm:$0xff]
      %v3002 = vld [vmem:[%s204 + $0x2f8] sm:$0xff]
      %v3003 = vld [vmem:[%s204 + $0x300] sm:$0xff]
      %v3004 = vld [vmem:[%s204 + $0x308] sm:$0xff]
      %v3005 = vld [vmem:[%s204 + $0x310] sm:$0xff]
      %v3006 = vld [vmem:[%s204 + $0x318] sm:$0xff]
      %v3007 = vld [vmem:[%s204 + $0x320] sm:$0xff]
      %v3008 = vld [vmem:[%s204 + $0x328] sm:$0xff]
      %v3009 = vld [vmem:[%s204 + $0x330] sm:$0xff]
      %v3010 = vld [vmem:[%s204 + $0x338] sm:$0xff]
      %v3011 = vld [vmem:[%s204 + $0x340] sm:$0xff]
      %v3012 = vld [vmem:[%s204 + $0x348] sm:$0xff]
      %v3013 = vld [vmem:[%s204 + $0x350] sm:$0xff]
      %v3014 = vld [vmem:[%s204 + $0x358] sm:$0xff]
      %v3015 = vld [vmem:[%s204 + $0x360] sm:$0xff]
      %v3016 = vld [vmem:[%s204 + $0x368] sm:$0xff]
      %v3017 = vld [vmem:[%s204 + $0x370] sm:$0xff]
      %v3018 = vld [vmem:[%s204 + $0x378] sm:$0xff]
      %v3019 = vld [vmem:[%s204 + $0x380] sm:$0xff]
      %v3020 = vld [vmem:[%s204 + $0x388] sm:$0xff]
      %v3021 = vld [vmem:[%s204 + $0x390] sm:$0xff]
      %v3022 = vld [vmem:[%s204 + $0x398] sm:$0xff]
      %v3023 = vld [vmem:[%s204 + $0x3a0] sm:$0xff]
      %v3024 = vld [vmem:[%s204 + $0x3a8] sm:$0xff]
      %v3025 = vld [vmem:[%s204 + $0x3b0] sm:$0xff]
      %v3026 = vld [vmem:[%s204 + $0x3b8] sm:$0xff]
      %v3027 = vld [vmem:[%s204 + $0x3c0] sm:$0xff]
      %v3028 = vld [vmem:[%s204 + $0x3c8] sm:$0xff]
      %v3029 = vld [vmem:[%s204 + $0x3d0] sm:$0xff]
      %v3030 = vld [vmem:[%s204 + $0x3d8] sm:$0xff]
      %v3031 = vld [vmem:[%s204 + $0x3e0] sm:$0xff]
      %v3032 = vld [vmem:[%s204 + $0x3e8] sm:$0xff]
      %v3033 = vld [vmem:[%s204 + $0x3f0] sm:$0xff]
      %v3034 = vld [vmem:[%s204 + $0x3f8] sm:$0xff]
      %3036 = vset.pattern.permute.xlu0 1
      %3037 = vperm.xlu0 %3036, %v1883
      %v3038 = vpop.permute.xlu0 %3037
      %3041 = vset.pattern.permute.xlu0 1
      %3042 = vperm.xlu0 %3041, %v1884
      %v3043 = vpop.permute.xlu0 %3042
      %3046 = vset.pattern.permute.xlu0 1
      %3047 = vperm.xlu0 %3046, %v1885
      %v3048 = vpop.permute.xlu0 %3047
      %3051 = vset.pattern.permute.xlu0 1
      %3052 = vperm.xlu0 %3051, %v1886
      %v3053 = vpop.permute.xlu0 %3052
      %3056 = vset.pattern.permute.xlu0 1
      %3057 = vperm.xlu0 %3056, %v1887
      %v3058 = vpop.permute.xlu0 %3057
      %3061 = vset.pattern.permute.xlu0 1
      %3062 = vperm.xlu0 %3061, %v1888
      %v3063 = vpop.permute.xlu0 %3062
      %3066 = vset.pattern.permute.xlu0 1
      %3067 = vperm.xlu0 %3066, %v1889
      %v3068 = vpop.permute.xlu0 %3067
      %3071 = vset.pattern.permute.xlu0 1
      %3072 = vperm.xlu0 %3071, %v1890
      %v3073 = vpop.permute.xlu0 %3072
      %3076 = vset.pattern.permute.xlu0 1
      %3077 = vperm.xlu0 %3076, %v1891
      %v3078 = vpop.permute.xlu0 %3077
      %3081 = vset.pattern.permute.xlu0 1
      %3082 = vperm.xlu0 %3081, %v1892
      %v3083 = vpop.permute.xlu0 %3082
      %3086 = vset.pattern.permute.xlu0 1
      %3087 = vperm.xlu0 %3086, %v1893
      %v3088 = vpop.permute.xlu0 %3087
      %3091 = vset.pattern.permute.xlu0 1
      %3092 = vperm.xlu0 %3091, %v1894
      %v3093 = vpop.permute.xlu0 %3092
      %3096 = vset.pattern.permute.xlu0 1
      %3097 = vperm.xlu0 %3096, %v1895
      %v3098 = vpop.permute.xlu0 %3097
      %3101 = vset.pattern.permute.xlu0 1
      %3102 = vperm.xlu0 %3101, %v1896
      %v3103 = vpop.permute.xlu0 %3102
      %3106 = vset.pattern.permute.xlu0 1
      %3107 = vperm.xlu0 %3106, %v1897
      %v3108 = vpop.permute.xlu0 %3107
      %3111 = vset.pattern.permute.xlu0 1
      %3112 = vperm.xlu0 %3111, %v1898
      %v3113 = vpop.permute.xlu0 %3112
      %3116 = vset.pattern.permute.xlu0 1
      %3117 = vperm.xlu0 %3116, %v1899
      %v3118 = vpop.permute.xlu0 %3117
      %3121 = vset.pattern.permute.xlu0 1
      %3122 = vperm.xlu0 %3121, %v1900
      %v3123 = vpop.permute.xlu0 %3122
      %3126 = vset.pattern.permute.xlu0 1
      %3127 = vperm.xlu0 %3126, %v1901
      %v3128 = vpop.permute.xlu0 %3127
      %3131 = vset.pattern.permute.xlu0 1
      %3132 = vperm.xlu0 %3131, %v1902
      %v3133 = vpop.permute.xlu0 %3132
      %3136 = vset.pattern.permute.xlu0 1
      %3137 = vperm.xlu0 %3136, %v1903
      %v3138 = vpop.permute.xlu0 %3137
      %3141 = vset.pattern.permute.xlu0 1
      %3142 = vperm.xlu0 %3141, %v1904
      %v3143 = vpop.permute.xlu0 %3142
      %3146 = vset.pattern.permute.xlu0 1
      %3147 = vperm.xlu0 %3146, %v1905
      %v3148 = vpop.permute.xlu0 %3147
      %3151 = vset.pattern.permute.xlu0 1
      %3152 = vperm.xlu0 %3151, %v1906
      %v3153 = vpop.permute.xlu0 %3152
      %3156 = vset.pattern.permute.xlu0 1
      %3157 = vperm.xlu0 %3156, %v1907
      %v3158 = vpop.permute.xlu0 %3157
      %3161 = vset.pattern.permute.xlu0 1
      %3162 = vperm.xlu0 %3161, %v1908
      %v3163 = vpop.permute.xlu0 %3162
      %3166 = vset.pattern.permute.xlu0 1
      %3167 = vperm.xlu0 %3166, %v1909
      %v3168 = vpop.permute.xlu0 %3167
      %3171 = vset.pattern.permute.xlu0 1
      %3172 = vperm.xlu0 %3171, %v1910
      %v3173 = vpop.permute.xlu0 %3172
      %3176 = vset.pattern.permute.xlu0 1
      %3177 = vperm.xlu0 %3176, %v1911
      %v3178 = vpop.permute.xlu0 %3177
      %3181 = vset.pattern.permute.xlu0 1
      %3182 = vperm.xlu0 %3181, %v1912
      %v3183 = vpop.permute.xlu0 %3182
      %3186 = vset.pattern.permute.xlu0 1
      %3187 = vperm.xlu0 %3186, %v1913
      %v3188 = vpop.permute.xlu0 %3187
      %3191 = vset.pattern.permute.xlu0 1
      %3192 = vperm.xlu0 %3191, %v1914
      %v3193 = vpop.permute.xlu0 %3192
      %3196 = vset.pattern.permute.xlu0 1
      %3197 = vperm.xlu0 %3196, %v1915
      %v3198 = vpop.permute.xlu0 %3197
      %3201 = vset.pattern.permute.xlu0 1
      %3202 = vperm.xlu0 %3201, %v1916
      %v3203 = vpop.permute.xlu0 %3202
      %3206 = vset.pattern.permute.xlu0 1
      %3207 = vperm.xlu0 %3206, %v1917
      %v3208 = vpop.permute.xlu0 %3207
      %3211 = vset.pattern.permute.xlu0 1
      %3212 = vperm.xlu0 %3211, %v1918
      %v3213 = vpop.permute.xlu0 %3212
      %3216 = vset.pattern.permute.xlu0 1
      %3217 = vperm.xlu0 %3216, %v1919
      %v3218 = vpop.permute.xlu0 %3217
      %3221 = vset.pattern.permute.xlu0 1
      %3222 = vperm.xlu0 %3221, %v1920
      %v3223 = vpop.permute.xlu0 %3222
      %3226 = vset.pattern.permute.xlu0 1
      %3227 = vperm.xlu0 %3226, %v1921
      %v3228 = vpop.permute.xlu0 %3227
      %3231 = vset.pattern.permute.xlu0 1
      %3232 = vperm.xlu0 %3231, %v1922
      %v3233 = vpop.permute.xlu0 %3232
      %3236 = vset.pattern.permute.xlu0 1
      %3237 = vperm.xlu0 %3236, %v1923
      %v3238 = vpop.permute.xlu0 %3237
      %3241 = vset.pattern.permute.xlu0 1
      %3242 = vperm.xlu0 %3241, %v1924
      %v3243 = vpop.permute.xlu0 %3242
      %3246 = vset.pattern.permute.xlu0 1
      %3247 = vperm.xlu0 %3246, %v1925
      %v3248 = vpop.permute.xlu0 %3247
      %3251 = vset.pattern.permute.xlu0 1
      %3252 = vperm.xlu0 %3251, %v1926
      %v3253 = vpop.permute.xlu0 %3252
      %3256 = vset.pattern.permute.xlu0 1
      %3257 = vperm.xlu0 %3256, %v1927
      %v3258 = vpop.permute.xlu0 %3257
      %3261 = vset.pattern.permute.xlu0 1
      %3262 = vperm.xlu0 %3261, %v1928
      %v3263 = vpop.permute.xlu0 %3262
      %3266 = vset.pattern.permute.xlu0 1
      %3267 = vperm.xlu0 %3266, %v1929
      %v3268 = vpop.permute.xlu0 %3267
      %3271 = vset.pattern.permute.xlu0 1
      %3272 = vperm.xlu0 %3271, %v1930
      %v3273 = vpop.permute.xlu0 %3272
      %3276 = vset.pattern.permute.xlu0 1
      %3277 = vperm.xlu0 %3276, %v1931
      %v3278 = vpop.permute.xlu0 %3277
      %3281 = vset.pattern.permute.xlu0 1
      %3282 = vperm.xlu0 %3281, %v1932
      %v3283 = vpop.permute.xlu0 %3282
      %3286 = vset.pattern.permute.xlu0 1
      %3287 = vperm.xlu0 %3286, %v1933
      %v3288 = vpop.permute.xlu0 %3287
      %3291 = vset.pattern.permute.xlu0 1
      %3292 = vperm.xlu0 %3291, %v1934
      %v3293 = vpop.permute.xlu0 %3292
      %3296 = vset.pattern.permute.xlu0 1
      %3297 = vperm.xlu0 %3296, %v1935
      %v3298 = vpop.permute.xlu0 %3297
      %3301 = vset.pattern.permute.xlu0 1
      %3302 = vperm.xlu0 %3301, %v1936
      %v3303 = vpop.permute.xlu0 %3302
      %3306 = vset.pattern.permute.xlu0 1
      %3307 = vperm.xlu0 %3306, %v1937
      %v3308 = vpop.permute.xlu0 %3307
      %3311 = vset.pattern.permute.xlu0 1
      %3312 = vperm.xlu0 %3311, %v1938
      %v3313 = vpop.permute.xlu0 %3312
      %3316 = vset.pattern.permute.xlu0 1
      %3317 = vperm.xlu0 %3316, %v1939
      %v3318 = vpop.permute.xlu0 %3317
      %3321 = vset.pattern.permute.xlu0 1
      %3322 = vperm.xlu0 %3321, %v1940
      %v3323 = vpop.permute.xlu0 %3322
      %3326 = vset.pattern.permute.xlu0 1
      %3327 = vperm.xlu0 %3326, %v1941
      %v3328 = vpop.permute.xlu0 %3327
      %3331 = vset.pattern.permute.xlu0 1
      %3332 = vperm.xlu0 %3331, %v1942
      %v3333 = vpop.permute.xlu0 %3332
      %3336 = vset.pattern.permute.xlu0 1
      %3337 = vperm.xlu0 %3336, %v1943
      %v3338 = vpop.permute.xlu0 %3337
      %3341 = vset.pattern.permute.xlu0 1
      %3342 = vperm.xlu0 %3341, %v1944
      %v3343 = vpop.permute.xlu0 %3342
      %3346 = vset.pattern.permute.xlu0 1
      %3347 = vperm.xlu0 %3346, %v1945
      %v3348 = vpop.permute.xlu0 %3347
      %3351 = vset.pattern.permute.xlu0 1
      %3352 = vperm.xlu0 %3351, %v1946
      %v3353 = vpop.permute.xlu0 %3352
      %3356 = vset.pattern.permute.xlu0 1
      %3357 = vperm.xlu0 %3356, %v1947
      %v3358 = vpop.permute.xlu0 %3357
      %3361 = vset.pattern.permute.xlu0 1
      %3362 = vperm.xlu0 %3361, %v1948
      %v3363 = vpop.permute.xlu0 %3362
      %3366 = vset.pattern.permute.xlu0 1
      %3367 = vperm.xlu0 %3366, %v1949
      %v3368 = vpop.permute.xlu0 %3367
      %3371 = vset.pattern.permute.xlu0 1
      %3372 = vperm.xlu0 %3371, %v1950
      %v3373 = vpop.permute.xlu0 %3372
      %3376 = vset.pattern.permute.xlu0 1
      %3377 = vperm.xlu0 %3376, %v1951
      %v3378 = vpop.permute.xlu0 %3377
      %3381 = vset.pattern.permute.xlu0 1
      %3382 = vperm.xlu0 %3381, %v1952
      %v3383 = vpop.permute.xlu0 %3382
      %3386 = vset.pattern.permute.xlu0 1
      %3387 = vperm.xlu0 %3386, %v1953
      %v3388 = vpop.permute.xlu0 %3387
      %3391 = vset.pattern.permute.xlu0 1
      %3392 = vperm.xlu0 %3391, %v1954
      %v3393 = vpop.permute.xlu0 %3392
      %3396 = vset.pattern.permute.xlu0 1
      %3397 = vperm.xlu0 %3396, %v1955
      %v3398 = vpop.permute.xlu0 %3397
      %3401 = vset.pattern.permute.xlu0 1
      %3402 = vperm.xlu0 %3401, %v1956
      %v3403 = vpop.permute.xlu0 %3402
      %3406 = vset.pattern.permute.xlu0 1
      %3407 = vperm.xlu0 %3406, %v1957
      %v3408 = vpop.permute.xlu0 %3407
      %3411 = vset.pattern.permute.xlu0 1
      %3412 = vperm.xlu0 %3411, %v1958
      %v3413 = vpop.permute.xlu0 %3412
      %3416 = vset.pattern.permute.xlu0 1
      %3417 = vperm.xlu0 %3416, %v1959
      %v3418 = vpop.permute.xlu0 %3417
      %3421 = vset.pattern.permute.xlu0 1
      %3422 = vperm.xlu0 %3421, %v1960
      %v3423 = vpop.permute.xlu0 %3422
      %3426 = vset.pattern.permute.xlu0 1
      %3427 = vperm.xlu0 %3426, %v1961
      %v3428 = vpop.permute.xlu0 %3427
      %3431 = vset.pattern.permute.xlu0 1
      %3432 = vperm.xlu0 %3431, %v1962
      %v3433 = vpop.permute.xlu0 %3432
      %3436 = vset.pattern.permute.xlu0 1
      %3437 = vperm.xlu0 %3436, %v1963
      %v3438 = vpop.permute.xlu0 %3437
      %3441 = vset.pattern.permute.xlu0 1
      %3442 = vperm.xlu0 %3441, %v1964
      %v3443 = vpop.permute.xlu0 %3442
      %3446 = vset.pattern.permute.xlu0 1
      %3447 = vperm.xlu0 %3446, %v1965
      %v3448 = vpop.permute.xlu0 %3447
      %3451 = vset.pattern.permute.xlu0 1
      %3452 = vperm.xlu0 %3451, %v1966
      %v3453 = vpop.permute.xlu0 %3452
      %3456 = vset.pattern.permute.xlu0 1
      %3457 = vperm.xlu0 %3456, %v1967
      %v3458 = vpop.permute.xlu0 %3457
      %3461 = vset.pattern.permute.xlu0 1
      %3462 = vperm.xlu0 %3461, %v1968
      %v3463 = vpop.permute.xlu0 %3462
      %3466 = vset.pattern.permute.xlu0 1
      %3467 = vperm.xlu0 %3466, %v1969
      %v3468 = vpop.permute.xlu0 %3467
      %3471 = vset.pattern.permute.xlu0 1
      %3472 = vperm.xlu0 %3471, %v1970
      %v3473 = vpop.permute.xlu0 %3472
      %3476 = vset.pattern.permute.xlu0 1
      %3477 = vperm.xlu0 %3476, %v1971
      %v3478 = vpop.permute.xlu0 %3477
      %3481 = vset.pattern.permute.xlu0 1
      %3482 = vperm.xlu0 %3481, %v1972
      %v3483 = vpop.permute.xlu0 %3482
      %3486 = vset.pattern.permute.xlu0 1
      %3487 = vperm.xlu0 %3486, %v1973
      %v3488 = vpop.permute.xlu0 %3487
      %3491 = vset.pattern.permute.xlu0 1
      %3492 = vperm.xlu0 %3491, %v1974
      %v3493 = vpop.permute.xlu0 %3492
      %3496 = vset.pattern.permute.xlu0 1
      %3497 = vperm.xlu0 %3496, %v1975
      %v3498 = vpop.permute.xlu0 %3497
      %3501 = vset.pattern.permute.xlu0 1
      %3502 = vperm.xlu0 %3501, %v1976
      %v3503 = vpop.permute.xlu0 %3502
      %3506 = vset.pattern.permute.xlu0 1
      %3507 = vperm.xlu0 %3506, %v1977
      %v3508 = vpop.permute.xlu0 %3507
      %3511 = vset.pattern.permute.xlu0 1
      %3512 = vperm.xlu0 %3511, %v1978
      %v3513 = vpop.permute.xlu0 %3512
      %3516 = vset.pattern.permute.xlu0 1
      %3517 = vperm.xlu0 %3516, %v1979
      %v3518 = vpop.permute.xlu0 %3517
      %3521 = vset.pattern.permute.xlu0 1
      %3522 = vperm.xlu0 %3521, %v1980
      %v3523 = vpop.permute.xlu0 %3522
      %3526 = vset.pattern.permute.xlu0 1
      %3527 = vperm.xlu0 %3526, %v1981
      %v3528 = vpop.permute.xlu0 %3527
      %3531 = vset.pattern.permute.xlu0 1
      %3532 = vperm.xlu0 %3531, %v1982
      %v3533 = vpop.permute.xlu0 %3532
      %3536 = vset.pattern.permute.xlu0 1
      %3537 = vperm.xlu0 %3536, %v1983
      %v3538 = vpop.permute.xlu0 %3537
      %3541 = vset.pattern.permute.xlu0 1
      %3542 = vperm.xlu0 %3541, %v1984
      %v3543 = vpop.permute.xlu0 %3542
      %3546 = vset.pattern.permute.xlu0 1
      %3547 = vperm.xlu0 %3546, %v1985
      %v3548 = vpop.permute.xlu0 %3547
      %3551 = vset.pattern.permute.xlu0 1
      %3552 = vperm.xlu0 %3551, %v1986
      %v3553 = vpop.permute.xlu0 %3552
      %3556 = vset.pattern.permute.xlu0 1
      %3557 = vperm.xlu0 %3556, %v1987
      %v3558 = vpop.permute.xlu0 %3557
      %3561 = vset.pattern.permute.xlu0 1
      %3562 = vperm.xlu0 %3561, %v1988
      %v3563 = vpop.permute.xlu0 %3562
      %3566 = vset.pattern.permute.xlu0 1
      %3567 = vperm.xlu0 %3566, %v1989
      %v3568 = vpop.permute.xlu0 %3567
      %3571 = vset.pattern.permute.xlu0 1
      %3572 = vperm.xlu0 %3571, %v1990
      %v3573 = vpop.permute.xlu0 %3572
      %3576 = vset.pattern.permute.xlu0 1
      %3577 = vperm.xlu0 %3576, %v1991
      %v3578 = vpop.permute.xlu0 %3577
      %3581 = vset.pattern.permute.xlu0 1
      %3582 = vperm.xlu0 %3581, %v1992
      %v3583 = vpop.permute.xlu0 %3582
      %3586 = vset.pattern.permute.xlu0 1
      %3587 = vperm.xlu0 %3586, %v1993
      %v3588 = vpop.permute.xlu0 %3587
      %3591 = vset.pattern.permute.xlu0 1
      %3592 = vperm.xlu0 %3591, %v1994
      %v3593 = vpop.permute.xlu0 %3592
      %3596 = vset.pattern.permute.xlu0 1
      %3597 = vperm.xlu0 %3596, %v1995
      %v3598 = vpop.permute.xlu0 %3597
      %3601 = vset.pattern.permute.xlu0 1
      %3602 = vperm.xlu0 %3601, %v1996
      %v3603 = vpop.permute.xlu0 %3602
      %3606 = vset.pattern.permute.xlu0 1
      %3607 = vperm.xlu0 %3606, %v1997
      %v3608 = vpop.permute.xlu0 %3607
      %3611 = vset.pattern.permute.xlu0 1
      %3612 = vperm.xlu0 %3611, %v1998
      %v3613 = vpop.permute.xlu0 %3612
      %3616 = vset.pattern.permute.xlu0 1
      %3617 = vperm.xlu0 %3616, %v1999
      %v3618 = vpop.permute.xlu0 %3617
      %3621 = vset.pattern.permute.xlu0 1
      %3622 = vperm.xlu0 %3621, %v2000
      %v3623 = vpop.permute.xlu0 %3622
      %3626 = vset.pattern.permute.xlu0 1
      %3627 = vperm.xlu0 %3626, %v2001
      %v3628 = vpop.permute.xlu0 %3627
      %3631 = vset.pattern.permute.xlu0 1
      %3632 = vperm.xlu0 %3631, %v2002
      %v3633 = vpop.permute.xlu0 %3632
      %3636 = vset.pattern.permute.xlu0 1
      %3637 = vperm.xlu0 %3636, %v2003
      %v3638 = vpop.permute.xlu0 %3637
      %3641 = vset.pattern.permute.xlu0 1
      %3642 = vperm.xlu0 %3641, %v2004
      %v3643 = vpop.permute.xlu0 %3642
      %3646 = vset.pattern.permute.xlu0 1
      %3647 = vperm.xlu0 %3646, %v2005
      %v3648 = vpop.permute.xlu0 %3647
      %3651 = vset.pattern.permute.xlu0 1
      %3652 = vperm.xlu0 %3651, %v2006
      %v3653 = vpop.permute.xlu0 %3652
      %3656 = vset.pattern.permute.xlu0 1
      %3657 = vperm.xlu0 %3656, %v2007
      %v3658 = vpop.permute.xlu0 %3657
      %3661 = vset.pattern.permute.xlu0 1
      %3662 = vperm.xlu0 %3661, %v2008
      %v3663 = vpop.permute.xlu0 %3662
      %3666 = vset.pattern.permute.xlu0 1
      %3667 = vperm.xlu0 %3666, %v2009
      %v3668 = vpop.permute.xlu0 %3667
      %3671 = vset.pattern.permute.xlu0 1
      %3672 = vperm.xlu0 %3671, %v2010
      %v3673 = vpop.permute.xlu0 %3672
      %v3675 = vadd.f32 %v3038, %v2907
      %v3676 = vadd.f32 %v3043, %v2908
      %v3677 = vadd.f32 %v3048, %v2909
      %v3678 = vadd.f32 %v3053, %v2910
      %v3679 = vadd.f32 %v3058, %v2911
      %v3680 = vadd.f32 %v3063, %v2912
      %v3681 = vadd.f32 %v3068, %v2913
      %v3682 = vadd.f32 %v3073, %v2914
      %v3683 = vadd.f32 %v3078, %v2915
      %v3684 = vadd.f32 %v3083, %v2916
      %v3685 = vadd.f32 %v3088, %v2917
      %v3686 = vadd.f32 %v3093, %v2918
      %v3687 = vadd.f32 %v3098, %v2919
      %v3688 = vadd.f32 %v3103, %v2920
      %v3689 = vadd.f32 %v3108, %v2921
      %v3690 = vadd.f32 %v3113, %v2922
      %v3691 = vadd.f32 %v3118, %v2923
      %v3692 = vadd.f32 %v3123, %v2924
      %v3693 = vadd.f32 %v3128, %v2925
      %v3694 = vadd.f32 %v3133, %v2926
      %v3695 = vadd.f32 %v3138, %v2927
      %v3696 = vadd.f32 %v3143, %v2928
      %v3697 = vadd.f32 %v3148, %v2929
      %v3698 = vadd.f32 %v3153, %v2930
      %v3699 = vadd.f32 %v3158, %v2931
      %v3700 = vadd.f32 %v3163, %v2932
      %v3701 = vadd.f32 %v3168, %v2933
      %v3702 = vadd.f32 %v3173, %v2934
      %v3703 = vadd.f32 %v3178, %v2935
      %v3704 = vadd.f32 %v3183, %v2936
      %v3705 = vadd.f32 %v3188, %v2937
      %v3706 = vadd.f32 %v3193, %v2938
      %v3707 = vadd.f32 %v3198, %v2939
      %v3708 = vadd.f32 %v3203, %v2940
      %v3709 = vadd.f32 %v3208, %v2941
      %v3710 = vadd.f32 %v3213, %v2942
      %v3711 = vadd.f32 %v3218, %v2943
      %v3712 = vadd.f32 %v3223, %v2944
      %v3713 = vadd.f32 %v3228, %v2945
      %v3714 = vadd.f32 %v3233, %v2946
      %v3715 = vadd.f32 %v3238, %v2947
      %v3716 = vadd.f32 %v3243, %v2948
      %v3717 = vadd.f32 %v3248, %v2949
      %v3718 = vadd.f32 %v3253, %v2950
      %v3719 = vadd.f32 %v3258, %v2951
      %v3720 = vadd.f32 %v3263, %v2952
      %v3721 = vadd.f32 %v3268, %v2953
      %v3722 = vadd.f32 %v3273, %v2954
      %v3723 = vadd.f32 %v3278, %v2955
      %v3724 = vadd.f32 %v3283, %v2956
      %v3725 = vadd.f32 %v3288, %v2957
      %v3726 = vadd.f32 %v3293, %v2958
      %v3727 = vadd.f32 %v3298, %v2959
      %v3728 = vadd.f32 %v3303, %v2960
      %v3729 = vadd.f32 %v3308, %v2961
      %v3730 = vadd.f32 %v3313, %v2962
      %v3731 = vadd.f32 %v3318, %v2963
      %v3732 = vadd.f32 %v3323, %v2964
      %v3733 = vadd.f32 %v3328, %v2965
      %v3734 = vadd.f32 %v3333, %v2966
      %v3735 = vadd.f32 %v3338, %v2967
      %v3736 = vadd.f32 %v3343, %v2968
      %v3737 = vadd.f32 %v3348, %v2969
      %v3738 = vadd.f32 %v3353, %v2970
      %v3739 = vadd.f32 %v3358, %v2971
      %v3740 = vadd.f32 %v3363, %v2972
      %v3741 = vadd.f32 %v3368, %v2973
      %v3742 = vadd.f32 %v3373, %v2974
      %v3743 = vadd.f32 %v3378, %v2975
      %v3744 = vadd.f32 %v3383, %v2976
      %v3745 = vadd.f32 %v3388, %v2977
      %v3746 = vadd.f32 %v3393, %v2978
      %v3747 = vadd.f32 %v3398, %v2979
      %v3748 = vadd.f32 %v3403, %v2980
      %v3749 = vadd.f32 %v3408, %v2981
      %v3750 = vadd.f32 %v3413, %v2982
      %v3751 = vadd.f32 %v3418, %v2983
      %v3752 = vadd.f32 %v3423, %v2984
      %v3753 = vadd.f32 %v3428, %v2985
      %v3754 = vadd.f32 %v3433, %v2986
      %v3755 = vadd.f32 %v3438, %v2987
      %v3756 = vadd.f32 %v3443, %v2988
      %v3757 = vadd.f32 %v3448, %v2989
      %v3758 = vadd.f32 %v3453, %v2990
      %v3759 = vadd.f32 %v3458, %v2991
      %v3760 = vadd.f32 %v3463, %v2992
      %v3761 = vadd.f32 %v3468, %v2993
      %v3762 = vadd.f32 %v3473, %v2994
      %v3763 = vadd.f32 %v3478, %v2995
      %v3764 = vadd.f32 %v3483, %v2996
      %v3765 = vadd.f32 %v3488, %v2997
      %v3766 = vadd.f32 %v3493, %v2998
      %v3767 = vadd.f32 %v3498, %v2999
      %v3768 = vadd.f32 %v3503, %v3000
      %v3769 = vadd.f32 %v3508, %v3001
      %v3770 = vadd.f32 %v3513, %v3002
      %v3771 = vadd.f32 %v3518, %v3003
      %v3772 = vadd.f32 %v3523, %v3004
      %v3773 = vadd.f32 %v3528, %v3005
      %v3774 = vadd.f32 %v3533, %v3006
      %v3775 = vadd.f32 %v3538, %v3007
      %v3776 = vadd.f32 %v3543, %v3008
      %v3777 = vadd.f32 %v3548, %v3009
      %v3778 = vadd.f32 %v3553, %v3010
      %v3779 = vadd.f32 %v3558, %v3011
      %v3780 = vadd.f32 %v3563, %v3012
      %v3781 = vadd.f32 %v3568, %v3013
      %v3782 = vadd.f32 %v3573, %v3014
      %v3783 = vadd.f32 %v3578, %v3015
      %v3784 = vadd.f32 %v3583, %v3016
      %v3785 = vadd.f32 %v3588, %v3017
      %v3786 = vadd.f32 %v3593, %v3018
      %v3787 = vadd.f32 %v3598, %v3019
      %v3788 = vadd.f32 %v3603, %v3020
      %v3789 = vadd.f32 %v3608, %v3021
      %v3790 = vadd.f32 %v3613, %v3022
      %v3791 = vadd.f32 %v3618, %v3023
      %v3792 = vadd.f32 %v3623, %v3024
      %v3793 = vadd.f32 %v3628, %v3025
      %v3794 = vadd.f32 %v3633, %v3026
      %v3795 = vadd.f32 %v3638, %v3027
      %v3796 = vadd.f32 %v3643, %v3028
      %v3797 = vadd.f32 %v3648, %v3029
      %v3798 = vadd.f32 %v3653, %v3030
      %v3799 = vadd.f32 %v3658, %v3031
      %v3800 = vadd.f32 %v3663, %v3032
      %v3801 = vadd.f32 %v3668, %v3033
      %v3802 = vadd.f32 %v3673, %v3034
      %v3803 = vadd.f32 %v2779, %v3675
      %v3804 = vadd.f32 %v2780, %v3676
      %v3805 = vadd.f32 %v2781, %v3677
      %v3806 = vadd.f32 %v2782, %v3678
      %v3807 = vadd.f32 %v2783, %v3679
      %v3808 = vadd.f32 %v2784, %v3680
      %v3809 = vadd.f32 %v2785, %v3681
      %v3810 = vadd.f32 %v2786, %v3682
      %v3811 = vadd.f32 %v2787, %v3683
      %v3812 = vadd.f32 %v2788, %v3684
      %v3813 = vadd.f32 %v2789, %v3685
      %v3814 = vadd.f32 %v2790, %v3686
      %v3815 = vadd.f32 %v2791, %v3687
      %v3816 = vadd.f32 %v2792, %v3688
      %v3817 = vadd.f32 %v2793, %v3689
      %v3818 = vadd.f32 %v2794, %v3690
      %v3819 = vadd.f32 %v2795, %v3691
      %v3820 = vadd.f32 %v2796, %v3692
      %v3821 = vadd.f32 %v2797, %v3693
      %v3822 = vadd.f32 %v2798, %v3694
      %v3823 = vadd.f32 %v2799, %v3695
      %v3824 = vadd.f32 %v2800, %v3696
      %v3825 = vadd.f32 %v2801, %v3697
      %v3826 = vadd.f32 %v2802, %v3698
      %v3827 = vadd.f32 %v2803, %v3699
      %v3828 = vadd.f32 %v2804, %v3700
      %v3829 = vadd.f32 %v2805, %v3701
      %v3830 = vadd.f32 %v2806, %v3702
      %v3831 = vadd.f32 %v2807, %v3703
      %v3832 = vadd.f32 %v2808, %v3704
      %v3833 = vadd.f32 %v2809, %v3705
      %v3834 = vadd.f32 %v2810, %v3706
      %v3835 = vadd.f32 %v2811, %v3707
      %v3836 = vadd.f32 %v2812, %v3708
      %v3837 = vadd.f32 %v2813, %v3709
      %v3838 = vadd.f32 %v2814, %v3710
      %v3839 = vadd.f32 %v2815, %v3711
      %v3840 = vadd.f32 %v2816, %v3712
      %v3841 = vadd.f32 %v2817, %v3713
      %v3842 = vadd.f32 %v2818, %v3714
      %v3843 = vadd.f32 %v2819, %v3715
      %v3844 = vadd.f32 %v2820, %v3716
      %v3845 = vadd.f32 %v2821, %v3717
      %v3846 = vadd.f32 %v2822, %v3718
      %v3847 = vadd.f32 %v2823, %v3719
      %v3848 = vadd.f32 %v2824, %v3720
      %v3849 = vadd.f32 %v2825, %v3721
      %v3850 = vadd.f32 %v2826, %v3722
      %v3851 = vadd.f32 %v2827, %v3723
      %v3852 = vadd.f32 %v2828, %v3724
      %v3853 = vadd.f32 %v2829, %v3725
      %v3854 = vadd.f32 %v2830, %v3726
      %v3855 = vadd.f32 %v2831, %v3727
      %v3856 = vadd.f32 %v2832, %v3728
      %v3857 = vadd.f32 %v2833, %v3729
      %v3858 = vadd.f32 %v2834, %v3730
      %v3859 = vadd.f32 %v2835, %v3731
      %v3860 = vadd.f32 %v2836, %v3732
      %v3861 = vadd.f32 %v2837, %v3733
      %v3862 = vadd.f32 %v2838, %v3734
      %v3863 = vadd.f32 %v2839, %v3735
      %v3864 = vadd.f32 %v2840, %v3736
      %v3865 = vadd.f32 %v2841, %v3737
      %v3866 = vadd.f32 %v2842, %v3738
      %v3867 = vadd.f32 %v2843, %v3739
      %v3868 = vadd.f32 %v2844, %v3740
      %v3869 = vadd.f32 %v2845, %v3741
      %v3870 = vadd.f32 %v2846, %v3742
      %v3871 = vadd.f32 %v2847, %v3743
      %v3872 = vadd.f32 %v2848, %v3744
      %v3873 = vadd.f32 %v2849, %v3745
      %v3874 = vadd.f32 %v2850, %v3746
      %v3875 = vadd.f32 %v2851, %v3747
      %v3876 = vadd.f32 %v2852, %v3748
      %v3877 = vadd.f32 %v2853, %v3749
      %v3878 = vadd.f32 %v2854, %v3750
      %v3879 = vadd.f32 %v2855, %v3751
      %v3880 = vadd.f32 %v2856, %v3752
      %v3881 = vadd.f32 %v2857, %v3753
      %v3882 = vadd.f32 %v2858, %v3754
      %v3883 = vadd.f32 %v2859, %v3755
      %v3884 = vadd.f32 %v2860, %v3756
      %v3885 = vadd.f32 %v2861, %v3757
      %v3886 = vadd.f32 %v2862, %v3758
      %v3887 = vadd.f32 %v2863, %v3759
      %v3888 = vadd.f32 %v2864, %v3760
      %v3889 = vadd.f32 %v2865, %v3761
      %v3890 = vadd.f32 %v2866, %v3762
      %v3891 = vadd.f32 %v2867, %v3763
      %v3892 = vadd.f32 %v2868, %v3764
      %v3893 = vadd.f32 %v2869, %v3765
      %v3894 = vadd.f32 %v2870, %v3766
      %v3895 = vadd.f32 %v2871, %v3767
      %v3896 = vadd.f32 %v2872, %v3768
      %v3897 = vadd.f32 %v2873, %v3769
      %v3898 = vadd.f32 %v2874, %v3770
      %v3899 = vadd.f32 %v2875, %v3771
      %v3900 = vadd.f32 %v2876, %v3772
      %v3901 = vadd.f32 %v2877, %v3773
      %v3902 = vadd.f32 %v2878, %v3774
      %v3903 = vadd.f32 %v2879, %v3775
      %v3904 = vadd.f32 %v2880, %v3776
      %v3905 = vadd.f32 %v2881, %v3777
      %v3906 = vadd.f32 %v2882, %v3778
      %v3907 = vadd.f32 %v2883, %v3779
      %v3908 = vadd.f32 %v2884, %v3780
      %v3909 = vadd.f32 %v2885, %v3781
      %v3910 = vadd.f32 %v2886, %v3782
      %v3911 = vadd.f32 %v2887, %v3783
      %v3912 = vadd.f32 %v2888, %v3784
      %v3913 = vadd.f32 %v2889, %v3785
      %v3914 = vadd.f32 %v2890, %v3786
      %v3915 = vadd.f32 %v2891, %v3787
      %v3916 = vadd.f32 %v2892, %v3788
      %v3917 = vadd.f32 %v2893, %v3789
      %v3918 = vadd.f32 %v2894, %v3790
      %v3919 = vadd.f32 %v2895, %v3791
      %v3920 = vadd.f32 %v2896, %v3792
      %v3921 = vadd.f32 %v2897, %v3793
      %v3922 = vadd.f32 %v2898, %v3794
      %v3923 = vadd.f32 %v2899, %v3795
      %v3924 = vadd.f32 %v2900, %v3796
      %v3925 = vadd.f32 %v2901, %v3797
      %v3926 = vadd.f32 %v2902, %v3798
      %v3927 = vadd.f32 %v2903, %v3799
      %v3928 = vadd.f32 %v2904, %v3800
      %v3929 = vadd.f32 %v2905, %v3801
      %v3930 = vadd.f32 %v2906, %v3802
      %v3931 = vmax.f32 %v3803, 0.0
      %v3932 = vmax.f32 %v3804, 0.0
      %v3933 = vmax.f32 %v3805, 0.0
      %v3934 = vmax.f32 %v3806, 0.0
      %v3935 = vmax.f32 %v3807, 0.0
      %v3936 = vmax.f32 %v3808, 0.0
      %v3937 = vmax.f32 %v3809, 0.0
      %v3938 = vmax.f32 %v3810, 0.0
      %v3939 = vmax.f32 %v3811, 0.0
      %v3940 = vmax.f32 %v3812, 0.0
      %v3941 = vmax.f32 %v3813, 0.0
      %v3942 = vmax.f32 %v3814, 0.0
      %v3943 = vmax.f32 %v3815, 0.0
      %v3944 = vmax.f32 %v3816, 0.0
      %v3945 = vmax.f32 %v3817, 0.0
      %v3946 = vmax.f32 %v3818, 0.0
      %v3947 = vmax.f32 %v3819, 0.0
      %v3948 = vmax.f32 %v3820, 0.0
      %v3949 = vmax.f32 %v3821, 0.0
      %v3950 = vmax.f32 %v3822, 0.0
      %v3951 = vmax.f32 %v3823, 0.0
      %v3952 = vmax.f32 %v3824, 0.0
      %v3953 = vmax.f32 %v3825, 0.0
      %v3954 = vmax.f32 %v3826, 0.0
      %v3955 = vmax.f32 %v3827, 0.0
      %v3956 = vmax.f32 %v3828, 0.0
      %v3957 = vmax.f32 %v3829, 0.0
      %v3958 = vmax.f32 %v3830, 0.0
      %v3959 = vmax.f32 %v3831, 0.0
      %v3960 = vmax.f32 %v3832, 0.0
      %v3961 = vmax.f32 %v3833, 0.0
      %v3962 = vmax.f32 %v3834, 0.0
      %v3963 = vmax.f32 %v3835, 0.0
      %v3964 = vmax.f32 %v3836, 0.0
      %v3965 = vmax.f32 %v3837, 0.0
      %v3966 = vmax.f32 %v3838, 0.0
      %v3967 = vmax.f32 %v3839, 0.0
      %v3968 = vmax.f32 %v3840, 0.0
      %v3969 = vmax.f32 %v3841, 0.0
      %v3970 = vmax.f32 %v3842, 0.0
      %v3971 = vmax.f32 %v3843, 0.0
      %v3972 = vmax.f32 %v3844, 0.0
      %v3973 = vmax.f32 %v3845, 0.0
      %v3974 = vmax.f32 %v3846, 0.0
      %v3975 = vmax.f32 %v3847, 0.0
      %v3976 = vmax.f32 %v3848, 0.0
      %v3977 = vmax.f32 %v3849, 0.0
      %v3978 = vmax.f32 %v3850, 0.0
      %v3979 = vmax.f32 %v3851, 0.0
      %v3980 = vmax.f32 %v3852, 0.0
      %v3981 = vmax.f32 %v3853, 0.0
      %v3982 = vmax.f32 %v3854, 0.0
      %v3983 = vmax.f32 %v3855, 0.0
      %v3984 = vmax.f32 %v3856, 0.0
      %v3985 = vmax.f32 %v3857, 0.0
      %v3986 = vmax.f32 %v3858, 0.0
      %v3987 = vmax.f32 %v3859, 0.0
      %v3988 = vmax.f32 %v3860, 0.0
      %v3989 = vmax.f32 %v3861, 0.0
      %v3990 = vmax.f32 %v3862, 0.0
      %v3991 = vmax.f32 %v3863, 0.0
      %v3992 = vmax.f32 %v3864, 0.0
      %v3993 = vmax.f32 %v3865, 0.0
      %v3994 = vmax.f32 %v3866, 0.0
      %v3995 = vmax.f32 %v3867, 0.0
      %v3996 = vmax.f32 %v3868, 0.0
      %v3997 = vmax.f32 %v3869, 0.0
      %v3998 = vmax.f32 %v3870, 0.0
      %v3999 = vmax.f32 %v3871, 0.0
      %v4000 = vmax.f32 %v3872, 0.0
      %v4001 = vmax.f32 %v3873, 0.0
      %v4002 = vmax.f32 %v3874, 0.0
      %v4003 = vmax.f32 %v3875, 0.0
      %v4004 = vmax.f32 %v3876, 0.0
      %v4005 = vmax.f32 %v3877, 0.0
      %v4006 = vmax.f32 %v3878, 0.0
      %v4007 = vmax.f32 %v3879, 0.0
      %v4008 = vmax.f32 %v3880, 0.0
      %v4009 = vmax.f32 %v3881, 0.0
      %v4010 = vmax.f32 %v3882, 0.0
      %v4011 = vmax.f32 %v3883, 0.0
      %v4012 = vmax.f32 %v3884, 0.0
      %v4013 = vmax.f32 %v3885, 0.0
      %v4014 = vmax.f32 %v3886, 0.0
      %v4015 = vmax.f32 %v3887, 0.0
      %v4016 = vmax.f32 %v3888, 0.0
      %v4017 = vmax.f32 %v3889, 0.0
      %v4018 = vmax.f32 %v3890, 0.0
      %v4019 = vmax.f32 %v3891, 0.0
      %v4020 = vmax.f32 %v3892, 0.0
      %v4021 = vmax.f32 %v3893, 0.0
      %v4022 = vmax.f32 %v3894, 0.0
      %v4023 = vmax.f32 %v3895, 0.0
      %v4024 = vmax.f32 %v3896, 0.0
      %v4025 = vmax.f32 %v3897, 0.0
      %v4026 = vmax.f32 %v3898, 0.0
      %v4027 = vmax.f32 %v3899, 0.0
      %v4028 = vmax.f32 %v3900, 0.0
      %v4029 = vmax.f32 %v3901, 0.0
      %v4030 = vmax.f32 %v3902, 0.0
      %v4031 = vmax.f32 %v3903, 0.0
      %v4032 = vmax.f32 %v3904, 0.0
      %v4033 = vmax.f32 %v3905, 0.0
      %v4034 = vmax.f32 %v3906, 0.0
      %v4035 = vmax.f32 %v3907, 0.0
      %v4036 = vmax.f32 %v3908, 0.0
      %v4037 = vmax.f32 %v3909, 0.0
      %v4038 = vmax.f32 %v3910, 0.0
      %v4039 = vmax.f32 %v3911, 0.0
      %v4040 = vmax.f32 %v3912, 0.0
      %v4041 = vmax.f32 %v3913, 0.0
      %v4042 = vmax.f32 %v3914, 0.0
      %v4043 = vmax.f32 %v3915, 0.0
      %v4044 = vmax.f32 %v3916, 0.0
      %v4045 = vmax.f32 %v3917, 0.0
      %v4046 = vmax.f32 %v3918, 0.0
      %v4047 = vmax.f32 %v3919, 0.0
      %v4048 = vmax.f32 %v3920, 0.0
      %v4049 = vmax.f32 %v3921, 0.0
      %v4050 = vmax.f32 %v3922, 0.0
      %v4051 = vmax.f32 %v3923, 0.0
      %v4052 = vmax.f32 %v3924, 0.0
      %v4053 = vmax.f32 %v3925, 0.0
      %v4054 = vmax.f32 %v3926, 0.0
      %v4055 = vmax.f32 %v3927, 0.0
      %v4056 = vmax.f32 %v3928, 0.0
      %v4057 = vmax.f32 %v3929, 0.0
      %v4058 = vmax.f32 %v3930, 0.0
      %4059 = vst.msk [vmem:[%s216] sm:$0xff] %vm346, %v3931
      %4060 = vst.msk [vmem:[%s216 + $0x8] sm:$0xff] %vm346, %v3932
      %4061 = vst.msk [vmem:[%s216 + $0x10] sm:$0xff] %vm346, %v3933
      %4062 = vst.msk [vmem:[%s216 + $0x18] sm:$0xff] %vm346, %v3934
      %4063 = vst.msk [vmem:[%s216 + $0x20] sm:$0xff] %vm346, %v3935
      %4064 = vst.msk [vmem:[%s216 + $0x28] sm:$0xff] %vm346, %v3936
      %4065 = vst.msk [vmem:[%s216 + $0x30] sm:$0xff] %vm346, %v3937
      %4066 = vst.msk [vmem:[%s216 + $0x38] sm:$0xff] %vm346, %v3938
      %4067 = vst.msk [vmem:[%s216 + $0x40] sm:$0xff] %vm346, %v3939
      %4068 = vst.msk [vmem:[%s216 + $0x48] sm:$0xff] %vm346, %v3940
      %4069 = vst.msk [vmem:[%s216 + $0x50] sm:$0xff] %vm346, %v3941
      %4070 = vst.msk [vmem:[%s216 + $0x58] sm:$0xff] %vm346, %v3942
      %4071 = vst.msk [vmem:[%s216 + $0x60] sm:$0xff] %vm346, %v3943
      %4072 = vst.msk [vmem:[%s216 + $0x68] sm:$0xff] %vm346, %v3944
      %4073 = vst.msk [vmem:[%s216 + $0x70] sm:$0xff] %vm346, %v3945
      %4074 = vst.msk [vmem:[%s216 + $0x78] sm:$0xff] %vm346, %v3946
      %4075 = vst.msk [vmem:[%s216 + $0x80] sm:$0xff] %vm346, %v3947
      %4076 = vst.msk [vmem:[%s216 + $0x88] sm:$0xff] %vm346, %v3948
      %4077 = vst.msk [vmem:[%s216 + $0x90] sm:$0xff] %vm346, %v3949
      %4078 = vst.msk [vmem:[%s216 + $0x98] sm:$0xff] %vm346, %v3950
      %4079 = vst.msk [vmem:[%s216 + $0xa0] sm:$0xff] %vm346, %v3951
      %4080 = vst.msk [vmem:[%s216 + $0xa8] sm:$0xff] %vm346, %v3952
      %4081 = vst.msk [vmem:[%s216 + $0xb0] sm:$0xff] %vm346, %v3953
      %4082 = vst.msk [vmem:[%s216 + $0xb8] sm:$0xff] %vm346, %v3954
      %4083 = vst.msk [vmem:[%s216 + $0xc0] sm:$0xff] %vm346, %v3955
      %4084 = vst.msk [vmem:[%s216 + $0xc8] sm:$0xff] %vm346, %v3956
      %4085 = vst.msk [vmem:[%s216 + $0xd0] sm:$0xff] %vm346, %v3957
      %4086 = vst.msk [vmem:[%s216 + $0xd8] sm:$0xff] %vm346, %v3958
      %4087 = vst.msk [vmem:[%s216 + $0xe0] sm:$0xff] %vm346, %v3959
      %4088 = vst.msk [vmem:[%s216 + $0xe8] sm:$0xff] %vm346, %v3960
      %4089 = vst.msk [vmem:[%s216 + $0xf0] sm:$0xff] %vm346, %v3961
      %4090 = vst.msk [vmem:[%s216 + $0xf8] sm:$0xff] %vm346, %v3962
      %4091 = vst.msk [vmem:[%s216 + $0x100] sm:$0xff] %vm346, %v3963
      %4092 = vst.msk [vmem:[%s216 + $0x108] sm:$0xff] %vm346, %v3964
      %4093 = vst.msk [vmem:[%s216 + $0x110] sm:$0xff] %vm346, %v3965
      %4094 = vst.msk [vmem:[%s216 + $0x118] sm:$0xff] %vm346, %v3966
      %4095 = vst.msk [vmem:[%s216 + $0x120] sm:$0xff] %vm346, %v3967
      %4096 = vst.msk [vmem:[%s216 + $0x128] sm:$0xff] %vm346, %v3968
      %4097 = vst.msk [vmem:[%s216 + $0x130] sm:$0xff] %vm346, %v3969
      %4098 = vst.msk [vmem:[%s216 + $0x138] sm:$0xff] %vm346, %v3970
      %4099 = vst.msk [vmem:[%s216 + $0x140] sm:$0xff] %vm346, %v3971
      %4100 = vst.msk [vmem:[%s216 + $0x148] sm:$0xff] %vm346, %v3972
      %4101 = vst.msk [vmem:[%s216 + $0x150] sm:$0xff] %vm346, %v3973
      %4102 = vst.msk [vmem:[%s216 + $0x158] sm:$0xff] %vm346, %v3974
      %4103 = vst.msk [vmem:[%s216 + $0x160] sm:$0xff] %vm346, %v3975
      %4104 = vst.msk [vmem:[%s216 + $0x168] sm:$0xff] %vm346, %v3976
      %4105 = vst.msk [vmem:[%s216 + $0x170] sm:$0xff] %vm346, %v3977
      %4106 = vst.msk [vmem:[%s216 + $0x178] sm:$0xff] %vm346, %v3978
      %4107 = vst.msk [vmem:[%s216 + $0x180] sm:$0xff] %vm346, %v3979
      %4108 = vst.msk [vmem:[%s216 + $0x188] sm:$0xff] %vm346, %v3980
      %4109 = vst.msk [vmem:[%s216 + $0x190] sm:$0xff] %vm346, %v3981
      %4110 = vst.msk [vmem:[%s216 + $0x198] sm:$0xff] %vm346, %v3982
      %4111 = vst.msk [vmem:[%s216 + $0x1a0] sm:$0xff] %vm346, %v3983
      %4112 = vst.msk [vmem:[%s216 + $0x1a8] sm:$0xff] %vm346, %v3984
      %4113 = vst.msk [vmem:[%s216 + $0x1b0] sm:$0xff] %vm346, %v3985
      %4114 = vst.msk [vmem:[%s216 + $0x1b8] sm:$0xff] %vm346, %v3986
      %4115 = vst.msk [vmem:[%s216 + $0x1c0] sm:$0xff] %vm346, %v3987
      %4116 = vst.msk [vmem:[%s216 + $0x1c8] sm:$0xff] %vm346, %v3988
      %4117 = vst.msk [vmem:[%s216 + $0x1d0] sm:$0xff] %vm346, %v3989
      %4118 = vst.msk [vmem:[%s216 + $0x1d8] sm:$0xff] %vm346, %v3990
      %4119 = vst.msk [vmem:[%s216 + $0x1e0] sm:$0xff] %vm346, %v3991
      %4120 = vst.msk [vmem:[%s216 + $0x1e8] sm:$0xff] %vm346, %v3992
      %4121 = vst.msk [vmem:[%s216 + $0x1f0] sm:$0xff] %vm346, %v3993
      %4122 = vst.msk [vmem:[%s216 + $0x1f8] sm:$0xff] %vm346, %v3994
      %4123 = vst.msk [vmem:[%s216 + $0x200] sm:$0xff] %vm346, %v3995
      %4124 = vst.msk [vmem:[%s216 + $0x208] sm:$0xff] %vm346, %v3996
      %4125 = vst.msk [vmem:[%s216 + $0x210] sm:$0xff] %vm346, %v3997
      %4126 = vst.msk [vmem:[%s216 + $0x218] sm:$0xff] %vm346, %v3998
      %4127 = vst.msk [vmem:[%s216 + $0x220] sm:$0xff] %vm346, %v3999
      %4128 = vst.msk [vmem:[%s216 + $0x228] sm:$0xff] %vm346, %v4000
      %4129 = vst.msk [vmem:[%s216 + $0x230] sm:$0xff] %vm346, %v4001
      %4130 = vst.msk [vmem:[%s216 + $0x238] sm:$0xff] %vm346, %v4002
      %4131 = vst.msk [vmem:[%s216 + $0x240] sm:$0xff] %vm346, %v4003
      %4132 = vst.msk [vmem:[%s216 + $0x248] sm:$0xff] %vm346, %v4004
      %4133 = vst.msk [vmem:[%s216 + $0x250] sm:$0xff] %vm346, %v4005
      %4134 = vst.msk [vmem:[%s216 + $0x258] sm:$0xff] %vm346, %v4006
      %4135 = vst.msk [vmem:[%s216 + $0x260] sm:$0xff] %vm346, %v4007
      %4136 = vst.msk [vmem:[%s216 + $0x268] sm:$0xff] %vm346, %v4008
      %4137 = vst.msk [vmem:[%s216 + $0x270] sm:$0xff] %vm346, %v4009
      %4138 = vst.msk [vmem:[%s216 + $0x278] sm:$0xff] %vm346, %v4010
      %4139 = vst.msk [vmem:[%s216 + $0x280] sm:$0xff] %vm346, %v4011
      %4140 = vst.msk [vmem:[%s216 + $0x288] sm:$0xff] %vm346, %v4012
      %4141 = vst.msk [vmem:[%s216 + $0x290] sm:$0xff] %vm346, %v4013
      %4142 = vst.msk [vmem:[%s216 + $0x298] sm:$0xff] %vm346, %v4014
      %4143 = vst.msk [vmem:[%s216 + $0x2a0] sm:$0xff] %vm346, %v4015
      %4144 = vst.msk [vmem:[%s216 + $0x2a8] sm:$0xff] %vm346, %v4016
      %4145 = vst.msk [vmem:[%s216 + $0x2b0] sm:$0xff] %vm346, %v4017
      %4146 = vst.msk [vmem:[%s216 + $0x2b8] sm:$0xff] %vm346, %v4018
      %4147 = vst.msk [vmem:[%s216 + $0x2c0] sm:$0xff] %vm346, %v4019
      %4148 = vst.msk [vmem:[%s216 + $0x2c8] sm:$0xff] %vm346, %v4020
      %4149 = vst.msk [vmem:[%s216 + $0x2d0] sm:$0xff] %vm346, %v4021
      %4150 = vst.msk [vmem:[%s216 + $0x2d8] sm:$0xff] %vm346, %v4022
      %4151 = vst.msk [vmem:[%s216 + $0x2e0] sm:$0xff] %vm346, %v4023
      %4152 = vst.msk [vmem:[%s216 + $0x2e8] sm:$0xff] %vm346, %v4024
      %4153 = vst.msk [vmem:[%s216 + $0x2f0] sm:$0xff] %vm346, %v4025
      %4154 = vst.msk [vmem:[%s216 + $0x2f8] sm:$0xff] %vm346, %v4026
      %4155 = vst.msk [vmem:[%s216 + $0x300] sm:$0xff] %vm346, %v4027
      %4156 = vst.msk [vmem:[%s216 + $0x308] sm:$0xff] %vm346, %v4028
      %4157 = vst.msk [vmem:[%s216 + $0x310] sm:$0xff] %vm346, %v4029
      %4158 = vst.msk [vmem:[%s216 + $0x318] sm:$0xff] %vm346, %v4030
      %4159 = vst.msk [vmem:[%s216 + $0x320] sm:$0xff] %vm346, %v4031
      %4160 = vst.msk [vmem:[%s216 + $0x328] sm:$0xff] %vm346, %v4032
      %4161 = vst.msk [vmem:[%s216 + $0x330] sm:$0xff] %vm346, %v4033
      %4162 = vst.msk [vmem:[%s216 + $0x338] sm:$0xff] %vm346, %v4034
      %4163 = vst.msk [vmem:[%s216 + $0x340] sm:$0xff] %vm346, %v4035
      %4164 = vst.msk [vmem:[%s216 + $0x348] sm:$0xff] %vm346, %v4036
      %4165 = vst.msk [vmem:[%s216 + $0x350] sm:$0xff] %vm346, %v4037
      %4166 = vst.msk [vmem:[%s216 + $0x358] sm:$0xff] %vm346, %v4038
      %4167 = vst.msk [vmem:[%s216 + $0x360] sm:$0xff] %vm346, %v4039
      %4168 = vst.msk [vmem:[%s216 + $0x368] sm:$0xff] %vm346, %v4040
      %4169 = vst.msk [vmem:[%s216 + $0x370] sm:$0xff] %vm346, %v4041
      %4170 = vst.msk [vmem:[%s216 + $0x378] sm:$0xff] %vm346, %v4042
      %4171 = vst.msk [vmem:[%s216 + $0x380] sm:$0xff] %vm346, %v4043
      %4172 = vst.msk [vmem:[%s216 + $0x388] sm:$0xff] %vm346, %v4044
      %4173 = vst.msk [vmem:[%s216 + $0x390] sm:$0xff] %vm346, %v4045
      %4174 = vst.msk [vmem:[%s216 + $0x398] sm:$0xff] %vm346, %v4046
      %4175 = vst.msk [vmem:[%s216 + $0x3a0] sm:$0xff] %vm346, %v4047
      %4176 = vst.msk [vmem:[%s216 + $0x3a8] sm:$0xff] %vm346, %v4048
      %4177 = vst.msk [vmem:[%s216 + $0x3b0] sm:$0xff] %vm346, %v4049
      %4178 = vst.msk [vmem:[%s216 + $0x3b8] sm:$0xff] %vm346, %v4050
      %4179 = vst.msk [vmem:[%s216 + $0x3c0] sm:$0xff] %vm346, %v4051
      %4180 = vst.msk [vmem:[%s216 + $0x3c8] sm:$0xff] %vm346, %v4052
      %4181 = vst.msk [vmem:[%s216 + $0x3d0] sm:$0xff] %vm346, %v4053
      %4182 = vst.msk [vmem:[%s216 + $0x3d8] sm:$0xff] %vm346, %v4054
      %4183 = vst.msk [vmem:[%s216 + $0x3e0] sm:$0xff] %vm346, %v4055
      %4184 = vst.msk [vmem:[%s216 + $0x3e8] sm:$0xff] %vm346, %v4056
      %4185 = vst.msk [vmem:[%s216 + $0x3f0] sm:$0xff] %vm346, %v4057
      %4186 = vst.msk [vmem:[%s216 + $0x3f8] sm:$0xff] %vm346, %v4058
      %s4187 = smul.u32 128, %s14
      %p4188 = scmp.lt.s32.totalorder %s4187, 255
      %s4189 = scalar_select %p4188, %s4187, 255
      %s4190 = smul.addr %s4189, 8
      %s4191 = scalar_lea.vmem %s3, %s4190
      // Predicated region
      $region33: #{tpu_custom_call.1} parent=31 // pred_check
        %p4192 = pneg %p110
      $region34: #{tpu_custom_call.1} parent=31 // pred_check_branch
        %4194 = sbr.rel (%p4192) target = $region36
      $region35: #{tpu_custom_call.1} parent=31 // pred_region
        %s4195 = smul.u32 128, %s14
      $region36: #{tpu_custom_call.1} parent=31 // pred_fallthru
        _
    $region32: #{tpu_custom_call.1} parent=5 // pred_fallthru
      _
    %p4196 = scmp.le.s32.totalorder 2, %s9
    // Predicated region
    $region37: #{tpu_custom_call.1} parent=5 // pred_check
      %p4197 = pneg %p4196
    $region38: #{tpu_custom_call.1} parent=5 // pred_check_branch
      %4199 = sbr.rel (%p4197) target = $region40
    $region39: #{tpu_custom_call.1} parent=5 // pred_region
      %s4200 = ssub.s32 %s9, 2
      // Predicated region
      $region41: #{tpu_custom_call.1} parent=39 // pred_check
        %p4201 = pneg %p116
      $region42: #{tpu_custom_call.1} parent=39 // pred_check_branch
        %4203 = sbr.rel (%p4201) target = $region44
      $region43: #{tpu_custom_call.1} parent=39 // pred_region
        %s4204 = smul.u32 128, %s15
        %p4205 = scmp.lt.s32.totalorder %s4204, 255
        %s4206 = scalar_select %p4205, %s4204, 255
        %s4207 = smul.addr %s4206, 8
        %s4208 = scalar_lea.vmem %s3, %s4207
      $region44: #{tpu_custom_call.1} parent=39 // pred_fallthru
        _
    $region40: #{tpu_custom_call.1} parent=5 // pred_fallthru
      _
  $region6: #{tpu_custom_call.1} parent=0 // loop_footer
    %s13 = sadd.s32 1, %s9
  $region7: #{tpu_custom_call.1} parent=0 // loop_footer_branch
    %8 = sbr.rel target = $region3
  $region8: #{tpu_custom_call.1} parent=0 // loop_exit
    _

</llo_original>
